<compile_context>
chip_gen: v7x
topology: tpu7x:2x2x1
jax: 0.10.0
libtpu: 0.0.40
codegen_flags: <defaults>
</compile_context>

<pallas_src>
import math

import jax
import jax.numpy as jnp
from jax.experimental import pallas as pl
from jax.experimental.pallas import tpu as pltpu

EPS = 1e-12          # BertLayerNorm epsilon
NUM_BLOCKS = 4       # CoConnectionBlocks in MCAN
PAD = 128            # lane padding for the 35-wide / 2-wide head dims


def _layernorm(x, g, b):
    # BertLayerNorm: biased variance, eps inside sqrt.
    u = jnp.mean(x, axis=-1, keepdims=True)
    s = jnp.mean((x - u) ** 2, axis=-1, keepdims=True)
    return g * ((x - u) / jnp.sqrt(s + EPS)) + b


_GELU_C = math.sqrt(2.0 / math.pi)


def _gelu(x):
    # tanh-approx gelu (lowers to EUP); ~1e-3 rel. deviation vs erf-based BertGELU.
    return 0.5 * x * (1.0 + jnp.tanh(_GELU_C * (x + 0.044715 * x * x * x)))


def _bdot(x_f32, w_bf16):
    # bf16 MXU matmul with f32 accumulation; weights live in HBM/VMEM as bf16,
    # activations cast to bf16 only at the MXU input.
    return jnp.dot(x_f32.astype(jnp.bfloat16), w_bf16,
                   preferred_element_type=jnp.float32)


# ------------------------------- fused kernel ------------------------------ #

def fused_mcan_kernel(
    img_ref, frq_ref, txt_ref,                       # extractor "middle" features
    sw_ref, sb_ref, fw_ref, fb_ref, tw_ref, tb_ref,  # s_fc / f_fc / t_fc
    wv1_ref, bv1_ref, wv2_ref, bv2_ref,              # CoAttention value1/value2 (stacked [4,...])
    g1_ref, gb1_ref, g2_ref, gb2_ref,                # CoAttentionLayerNorm 1/2
    wi1_ref, bi1_ref, wi2_ref, bi2_ref,              # shared Intermediate FFN
    n1g_ref, n1b_ref, n2g_ref, n2b_ref,              # norm_layer1 / norm_layer2
    wct_ref, wcb_ref, bco_ref,                       # co_embed (split halves)
    p1w_ref, p1b_ref, p2w_ref, p2b_ref,              # p_fc head (lane padded)
    out_ref,
    x1_scr, frq_scr, txt_scr,                        # VMEM-resident features
):
    i = pl.program_id(0)

    # ---- step 0: input projections (s_fc / f_fc / t_fc), kept in VMEM scratch ----
    @pl.when(i == 0)
    def _():
        x1_scr[...] = jnp.maximum(_bdot(img_ref[...], sw_ref[...]) + sb_ref[...], 0.0)
        frq_scr[...] = jnp.maximum(_bdot(frq_ref[...], fw_ref[...]) + fb_ref[...], 0.0)
        txt_scr[...] = jnp.maximum(_bdot(txt_ref[...], tw_ref[...]) + tb_ref[...], 0.0)

    x1 = x1_scr[...]
    # Blocks 0,1 pair with the frequency feature, blocks 2,3 with the text feature.
    # Scalar 0/1 blend on the VPU avoids a bool-vector broadcast/select.
    w_txt = (i >= 2).astype(jnp.float32)
    x2 = frq_scr[...] * (1.0 - w_txt) + txt_scr[...] * w_txt

    B = x1.shape[0]

    # CoAttention with key length 1: softmax == 1, so context == value projection.
    # (num_attention_heads only shaped the dead q/k/score path and is irrelevant.)
    v1 = _bdot(x1, wv1_ref[0]) + bv1_ref[0]
    v2 = _bdot(x2, wv2_ref[0]) + bv2_ref[0]

    # CoAttentionLayerNorm (cross-stream swap as in CoConnectionBlock.forward).
    att1 = _layernorm(v2 + x1, g1_ref[0], gb1_ref[0])
    att2 = _layernorm(v1 + x2, g2_ref[0], gb2_ref[0])

    # Shared Intermediate FFN: both streams stacked on sublanes so the two large
    # matmuls (H x INTER, INTER x H) are issued once.
    att = jnp.concatenate([att1, att2], axis=0)                        # [2B, H]
    h = _gelu(_bdot(att, wi1_ref[0]) + bi1_ref[0])
    inter = _bdot(h, wi2_ref[0]) + bi2_ref[0]
    l1 = _layernorm(inter[:B] + att1, n1g_ref[0], n1b_ref[0])
    l2 = _layernorm(inter[B:] + att2, n2g_ref[0], n2b_ref[0])

    # co_embed on concat(l1, l2): split the [2H,H] weight instead of a lane concat.
    new_x1 = _bdot(l1, wct_ref[0]) + _bdot(l2, wcb_ref[0]) + bco_ref[0]
    x1_scr[...] = new_x1

    # ---- last step: p_fc head (narrow dims zero-padded to 128 lanes -> exact) ----
    @pl.when(i == pl.num_programs(0) - 1)
    def _():
        hh = jnp.maximum(_bdot(new_x1, p1w_ref[...]) + p1b_ref[...], 0.0)
        out_ref[...] = (_bdot(hh, p2w_ref[...]) + p2b_ref[...]).astype(out_ref.dtype)


# --------------------------------- wrapper --------------------------------- #

def _full_spec(shape):
    n = len(shape)

    def idx(i):
        return (0,) * n

    return pl.BlockSpec(tuple(shape), idx)


def _stacked_spec(shape):
    n = len(shape)

    def idx(i):
        return (i,) + (0,) * n

    return pl.BlockSpec((1,) + tuple(shape), idx)


def mcan_forward(image_mid, freq_mid, text_hidden, params):
    """Post-extractor MCAN forward pass in one fused pallas_call."""
    B = image_mid.shape[0]
    text_flat = text_hidden.reshape(B, -1)

    (s_w, s_b, f_w, f_b, t_w, t_b, stk, p1_w, p1_b, p2_w, p2_b) = params

    H = s_w.shape[1]
    IMG_MID = image_mid.shape[1]
    FREQ_MID = freq_mid.shape[1]
    TXT = text_flat.shape[1]
    INTER = stk["wi1"].shape[-1]

    args = [
        image_mid, freq_mid, text_flat,
        s_w, s_b, f_w, f_b, t_w, t_b,
        stk["wv1"], stk["bv1"], stk["wv2"], stk["bv2"],
        stk["ln1g"], stk["ln1b"], stk["ln2g"], stk["ln2b"],
        stk["wi1"], stk["bi1"], stk["wi2"], stk["bi2"],
        stk["n1g"], stk["n1b"], stk["n2g"], stk["n2b"],
        stk["wcoT"], stk["wcoB"], stk["bco"],
        p1_w, p1_b, p2_w, p2_b,
    ]

    in_specs = [
        _full_spec((B, IMG_MID)), _full_spec((B, FREQ_MID)), _full_spec((B, TXT)),
        _full_spec((IMG_MID, H)), _full_spec((1, H)),
        _full_spec((FREQ_MID, H)), _full_spec((1, H)),
        _full_spec((TXT, H)), _full_spec((1, H)),
        _stacked_spec((H, H)), _stacked_spec((1, H)),
        _stacked_spec((H, H)), _stacked_spec((1, H)),
        _stacked_spec((1, H)), _stacked_spec((1, H)),
        _stacked_spec((1, H)), _stacked_spec((1, H)),
        _stacked_spec((H, INTER)), _stacked_spec((1, INTER)),
        _stacked_spec((INTER, H)), _stacked_spec((1, H)),
        _stacked_spec((1, H)), _stacked_spec((1, H)),
        _stacked_spec((1, H)), _stacked_spec((1, H)),
        _stacked_spec((H, H)), _stacked_spec((H, H)), _stacked_spec((1, H)),
        _full_spec((H, PAD)), _full_spec((1, PAD)),
        _full_spec((PAD, PAD)), _full_spec((1, PAD)),
    ]

    out = pl.pallas_call(
        fused_mcan_kernel,
        out_shape=jax.ShapeDtypeStruct((B, PAD), jnp.float32),
        grid_spec=pltpu.PrefetchScalarGridSpec(
            num_scalar_prefetch=0,
            grid=(NUM_BLOCKS,),
            in_specs=in_specs,
            out_specs=_full_spec((B, PAD)),
            scratch_shapes=[pltpu.VMEM((B, H), jnp.float32),   # running stream
                            pltpu.VMEM((B, H), jnp.float32),   # freq feature
                            pltpu.VMEM((B, H), jnp.float32)],  # text feature
        ),
        compiler_params=pltpu.CompilerParams(
            dimension_semantics=("arbitrary",)),
    )(*args)
    return out[:, :2]


# --------------------------- parameter construction ------------------------ #

def init_linear(key, din, dout, scale=0.02, w_dtype=jnp.bfloat16):
    """Weights stored [in, out] (x @ W + b == x @ W_pt.T + b), bf16 for DMA/MXU."""
    kw, kb = jax.random.split(key)
    w = (jax.random.normal(kw, (din, dout), jnp.float32) * scale).astype(w_dtype)
    b = jax.random.normal(kb, (1, dout), jnp.float32) * scale
    return w, b


def init_block(key, hidden, inter):
    # q/k projections of CoAttention are mathematically dead (seq_len == 1) and
    # therefore not instantiated.  LayerNorm params start at ones/zeros as in torch.
    ks = jax.random.split(key, 5)
    wv1, bv1 = init_linear(ks[0], hidden, hidden)
    wv2, bv2 = init_linear(ks[1], hidden, hidden)
    wi1, bi1 = init_linear(ks[2], hidden, inter)
    wi2, bi2 = init_linear(ks[3], inter, hidden)
    wco, bco = init_linear(ks[4], 2 * hidden, hidden)
    ones = jnp.ones((1, hidden), jnp.float32)
    zeros = jnp.zeros((1, hidden), jnp.float32)
    return dict(
        wv1=wv1, bv1=bv1, wv2=wv2, bv2=bv2,
        ln1g=ones, ln1b=zeros, ln2g=ones, ln2b=zeros,
        wi1=wi1, bi1=bi1, wi2=wi2, bi2=bi2,
        n1g=ones, n1b=zeros, n2g=ones, n2b=zeros,
        wcoT=wco[:hidden], wcoB=wco[hidden:], bco=bco,
    )


def stack_blocks(blocks):
    return {k: jnp.stack([blk[k] for blk in blocks], axis=0) for k in blocks[0]}


# ----------------------------------- main ----------------------------------- #

if __name__ == "__main__":
    B = 2
    HIDDEN = 128      # hidden_dim (256 in full model) -- kept small
    INTER = 256       # intermediate_size (512 in full model)
    IMG_MID = 256     # stand-in for VGG19 classifier[:3] output (4096 in full model)
    FREQ_MID = 64     # Frequency_extractor output dim (64 in the module)
    MAX_LEN, EMB = 8, 16   # args.max_len, args.bert_emb_dim stand-ins
    N_CLS_HID, N_CLS = 35, 2

    key = jax.random.PRNGKey(0)
    k_in, k_p = jax.random.split(key)
    ki1, ki2, ki3 = jax.random.split(k_in, 3)
    image_mid = jax.random.normal(ki1, (B, IMG_MID), jnp.float32)        # VGG19 feats
    freq_mid = jax.random.normal(ki2, (B, FREQ_MID), jnp.float32)        # freq feats
    text_hidden = jax.random.normal(ki3, (B, MAX_LEN, EMB), jnp.float32)  # BERT hidden

    pk = jax.random.split(k_p, 9)
    s_w, s_b = init_linear(pk[0], IMG_MID, HIDDEN)
    f_w, f_b = init_linear(pk[1], FREQ_MID, HIDDEN)
    t_w, t_b = init_linear(pk[2], MAX_LEN * EMB, HIDDEN)
    blocks = [init_block(pk[3 + i], HIDDEN, INTER) for i in range(NUM_BLOCKS)]
    stacked = stack_blocks(blocks)
    p1_w_raw, p1_b_raw = init_linear(pk[7], HIDDEN, N_CLS_HID)
    p2_w_raw, p2_b_raw = init_linear(pk[8], N_CLS_HID, N_CLS)

    # Zero-pad the narrow head dims to full 128-lane tiles (exact: pads are zero).
    p1_w = jnp.pad(p1_w_raw, ((0, 0), (0, PAD - N_CLS_HID)))
    p1_b = jnp.pad(p1_b_raw, ((0, 0), (0, PAD - N_CLS_HID)))
    p2_w = jnp.pad(p2_w_raw, ((0, PAD - N_CLS_HID), (0, PAD - N_CLS)))
    p2_b = jnp.pad(p2_b_raw, ((0, 0), (0, PAD - N_CLS)))

    params = (s_w, s_b, f_w, f_b, t_w, t_b, stacked, p1_w, p1_b, p2_w, p2_b)

    result = mcan_forward(image_mid, freq_mid, text_hidden, params)
    jax.block_until_ready(result)
    assert result.shape == (B, 2) and result.dtype == jnp.float32
    print("KERNEL_OK")
</pallas_src>

<mosaic_0001>
module attributes {stable_mosaic.version = 11 : i64} {
  func.func @fused_mcan_kernel(%arg0: i32, %arg1: memref<2x256xf32, #tpu.memory_space<vmem>>, %arg2: memref<2x64xf32, #tpu.memory_space<vmem>>, %arg3: memref<2x128xf32, #tpu.memory_space<vmem>>, %arg4: memref<256x128xbf16, #tpu.memory_space<vmem>>, %arg5: memref<1x128xf32, #tpu.memory_space<vmem>>, %arg6: memref<64x128xbf16, #tpu.memory_space<vmem>>, %arg7: memref<1x128xf32, #tpu.memory_space<vmem>>, %arg8: memref<128x128xbf16, #tpu.memory_space<vmem>>, %arg9: memref<1x128xf32, #tpu.memory_space<vmem>>, %arg10: memref<1x128x128xbf16, #tpu.memory_space<vmem>>, %arg11: memref<1x1x128xf32, #tpu.memory_space<vmem>>, %arg12: memref<1x128x128xbf16, #tpu.memory_space<vmem>>, %arg13: memref<1x1x128xf32, #tpu.memory_space<vmem>>, %arg14: memref<1x1x128xf32, #tpu.memory_space<vmem>>, %arg15: memref<1x1x128xf32, #tpu.memory_space<vmem>>, %arg16: memref<1x1x128xf32, #tpu.memory_space<vmem>>, %arg17: memref<1x1x128xf32, #tpu.memory_space<vmem>>, %arg18: memref<1x128x256xbf16, #tpu.memory_space<vmem>>, %arg19: memref<1x1x256xf32, #tpu.memory_space<vmem>>, %arg20: memref<1x256x128xbf16, #tpu.memory_space<vmem>>, %arg21: memref<1x1x128xf32, #tpu.memory_space<vmem>>, %arg22: memref<1x1x128xf32, #tpu.memory_space<vmem>>, %arg23: memref<1x1x128xf32, #tpu.memory_space<vmem>>, %arg24: memref<1x1x128xf32, #tpu.memory_space<vmem>>, %arg25: memref<1x1x128xf32, #tpu.memory_space<vmem>>, %arg26: memref<1x128x128xbf16, #tpu.memory_space<vmem>>, %arg27: memref<1x128x128xbf16, #tpu.memory_space<vmem>>, %arg28: memref<1x1x128xf32, #tpu.memory_space<vmem>>, %arg29: memref<128x128xbf16, #tpu.memory_space<vmem>>, %arg30: memref<1x128xf32, #tpu.memory_space<vmem>>, %arg31: memref<128x128xbf16, #tpu.memory_space<vmem>>, %arg32: memref<1x128xf32, #tpu.memory_space<vmem>>, %arg33: memref<2x128xf32, #tpu.memory_space<vmem>>, %arg34: memref<2x128xf32, #tpu.memory_space<vmem>>, %arg35: memref<2x128xf32, #tpu.memory_space<vmem>>, %arg36: memref<2x128xf32, #tpu.memory_space<vmem>>) attributes {dimension_semantics = [#tpu.dimension_semantics<arbitrary>], iteration_bounds = array<i64: 4>, scalar_prefetch = 0 : i64, scratch_operands = 3 : i64, tpu.core_type = #tpu.core_type<tc>, window_params = [{pipeline_mode = #tpu.pipeline_mode<synchronous>, transform_indices = @transform_0, window_bounds = array<i64: 2, 256>}, {pipeline_mode = #tpu.pipeline_mode<synchronous>, transform_indices = @transform_1, window_bounds = array<i64: 2, 64>}, {pipeline_mode = #tpu.pipeline_mode<synchronous>, transform_indices = @transform_2, window_bounds = array<i64: 2, 128>}, {pipeline_mode = #tpu.pipeline_mode<synchronous>, transform_indices = @transform_3, window_bounds = array<i64: 256, 128>}, {pipeline_mode = #tpu.pipeline_mode<synchronous>, transform_indices = @transform_4, window_bounds = array<i64: 1, 128>}, {pipeline_mode = #tpu.pipeline_mode<synchronous>, transform_indices = @transform_5, window_bounds = array<i64: 64, 128>}, {pipeline_mode = #tpu.pipeline_mode<synchronous>, transform_indices = @transform_6, window_bounds = array<i64: 1, 128>}, {pipeline_mode = #tpu.pipeline_mode<synchronous>, transform_indices = @transform_7, window_bounds = array<i64: 128, 128>}, {pipeline_mode = #tpu.pipeline_mode<synchronous>, transform_indices = @transform_8, window_bounds = array<i64: 1, 128>}, {transform_indices = @transform_9, window_bounds = array<i64: 1, 128, 128>}, {transform_indices = @transform_10, window_bounds = array<i64: 1, 1, 128>}, {transform_indices = @transform_11, window_bounds = array<i64: 1, 128, 128>}, {transform_indices = @transform_12, window_bounds = array<i64: 1, 1, 128>}, {transform_indices = @transform_13, window_bounds = array<i64: 1, 1, 128>}, {transform_indices = @transform_14, window_bounds = array<i64: 1, 1, 128>}, {transform_indices = @transform_15, window_bounds = array<i64: 1, 1, 128>}, {transform_indices = @transform_16, window_bounds = array<i64: 1, 1, 128>}, {transform_indices = @transform_17, window_bounds = array<i64: 1, 128, 256>}, {transform_indices = @transform_18, window_bounds = array<i64: 1, 1, 256>}, {transform_indices = @transform_19, window_bounds = array<i64: 1, 256, 128>}, {transform_indices = @transform_20, window_bounds = array<i64: 1, 1, 128>}, {transform_indices = @transform_21, window_bounds = array<i64: 1, 1, 128>}, {transform_indices = @transform_22, window_bounds = array<i64: 1, 1, 128>}, {transform_indices = @transform_23, window_bounds = array<i64: 1, 1, 128>}, {transform_indices = @transform_24, window_bounds = array<i64: 1, 1, 128>}, {transform_indices = @transform_25, window_bounds = array<i64: 1, 128, 128>}, {transform_indices = @transform_26, window_bounds = array<i64: 1, 128, 128>}, {transform_indices = @transform_27, window_bounds = array<i64: 1, 1, 128>}, {pipeline_mode = #tpu.pipeline_mode<synchronous>, transform_indices = @transform_28, window_bounds = array<i64: 128, 128>}, {pipeline_mode = #tpu.pipeline_mode<synchronous>, transform_indices = @transform_29, window_bounds = array<i64: 1, 128>}, {pipeline_mode = #tpu.pipeline_mode<synchronous>, transform_indices = @transform_30, window_bounds = array<i64: 128, 128>}, {pipeline_mode = #tpu.pipeline_mode<synchronous>, transform_indices = @transform_31, window_bounds = array<i64: 1, 128>}, {pipeline_mode = #tpu.pipeline_mode<synchronous>, transform_indices = @transform_32, window_bounds = array<i64: 2, 128>}]} {
    %c0_i32 = arith.constant 0 : i32
    %0 = arith.cmpi eq, %arg0, %c0_i32 : i32
    %1 = arith.extui %0 : i1 to i32
    %c0_i32_0 = arith.constant 0 : i32
    %2 = arith.cmpi ne, %1, %c0_i32_0 : i32
    scf.if %2 {
      %c0_96 = arith.constant 0 : index
      %c0_97 = arith.constant 0 : index
      %188 = vector.load %arg1[%c0_96, %c0_97] : memref<2x256xf32, #tpu.memory_space<vmem>>, vector<2x256xf32>
      %c0_98 = arith.constant 0 : index
      %c0_99 = arith.constant 0 : index
      %189 = vector.load %arg4[%c0_98, %c0_99] : memref<256x128xbf16, #tpu.memory_space<vmem>>, vector<256x128xbf16>
      %190 = arith.truncf %188 : vector<2x256xf32> to vector<2x256xbf16>
      %cst_100 = arith.constant dense<0.000000e+00> : vector<2x128xf32>
      %191 = tpu.matmul %190, %189, %cst_100 {dimension_numbers = #tpu.dot_dimension_numbers<[1], [0], [0], [1], [0, 0, 1, 1], [], []>} : vector<2x256xbf16>, vector<256x128xbf16>, vector<2x128xf32> -> vector<2x128xf32>
      %c0_101 = arith.constant 0 : index
      %c0_102 = arith.constant 0 : index
      %192 = vector.load %arg5[%c0_101, %c0_102] : memref<1x128xf32, #tpu.memory_space<vmem>>, vector<1x128xf32>
      %193 = vector.broadcast %192 : vector<1x128xf32> to vector<2x128xf32>
      %194 = arith.addf %191, %193 : vector<2x128xf32>
      %cst_103 = arith.constant 0.000000e+00 : f32
      %195 = vector.broadcast %cst_103 : f32 to vector<2x128xf32>
      %196 = arith.maximumf %194, %195 : vector<2x128xf32>
      %c0_104 = arith.constant 0 : index
      %c0_105 = arith.constant 0 : index
      %197 = vector.load %arg34[%c0_104, %c0_105] : memref<2x128xf32, #tpu.memory_space<vmem>>, vector<2x128xf32>
      tpu.vector_store %arg34[%c0_104, %c0_105], %196 {strides = array<i32>} : memref<2x128xf32, #tpu.memory_space<vmem>>, vector<2x128xf32>,
      %c0_106 = arith.constant 0 : index
      %c0_107 = arith.constant 0 : index
      %198 = vector.load %arg2[%c0_106, %c0_107] : memref<2x64xf32, #tpu.memory_space<vmem>>, vector<2x64xf32>
      %c0_108 = arith.constant 0 : index
      %c0_109 = arith.constant 0 : index
      %199 = vector.load %arg6[%c0_108, %c0_109] : memref<64x128xbf16, #tpu.memory_space<vmem>>, vector<64x128xbf16>
      %200 = arith.truncf %198 : vector<2x64xf32> to vector<2x64xbf16>
      %cst_110 = arith.constant dense<0.000000e+00> : vector<2x128xf32>
      %201 = tpu.matmul %200, %199, %cst_110 {dimension_numbers = #tpu.dot_dimension_numbers<[1], [0], [0], [1], [0, 0, 1, 1], [], []>} : vector<2x64xbf16>, vector<64x128xbf16>, vector<2x128xf32> -> vector<2x128xf32>
      %c0_111 = arith.constant 0 : index
      %c0_112 = arith.constant 0 : index
      %202 = vector.load %arg7[%c0_111, %c0_112] : memref<1x128xf32, #tpu.memory_space<vmem>>, vector<1x128xf32>
      %203 = vector.broadcast %202 : vector<1x128xf32> to vector<2x128xf32>
      %204 = arith.addf %201, %203 : vector<2x128xf32>
      %cst_113 = arith.constant 0.000000e+00 : f32
      %205 = vector.broadcast %cst_113 : f32 to vector<2x128xf32>
      %206 = arith.maximumf %204, %205 : vector<2x128xf32>
      %c0_114 = arith.constant 0 : index
      %c0_115 = arith.constant 0 : index
      %207 = vector.load %arg35[%c0_114, %c0_115] : memref<2x128xf32, #tpu.memory_space<vmem>>, vector<2x128xf32>
      tpu.vector_store %arg35[%c0_114, %c0_115], %206 {strides = array<i32>} : memref<2x128xf32, #tpu.memory_space<vmem>>, vector<2x128xf32>,
      %c0_116 = arith.constant 0 : index
      %c0_117 = arith.constant 0 : index
      %208 = vector.load %arg3[%c0_116, %c0_117] : memref<2x128xf32, #tpu.memory_space<vmem>>, vector<2x128xf32>
      %c0_118 = arith.constant 0 : index
      %c0_119 = arith.constant 0 : index
      %209 = vector.load %arg8[%c0_118, %c0_119] : memref<128x128xbf16, #tpu.memory_space<vmem>>, vector<128x128xbf16>
      %210 = arith.truncf %208 : vector<2x128xf32> to vector<2x128xbf16>
      %cst_120 = arith.constant dense<0.000000e+00> : vector<2x128xf32>
      %211 = tpu.matmul %210, %209, %cst_120 {dimension_numbers = #tpu.dot_dimension_numbers<[1], [0], [0], [1], [0, 0, 1, 1], [], []>} : vector<2x128xbf16>, vector<128x128xbf16>, vector<2x128xf32> -> vector<2x128xf32>
      %c0_121 = arith.constant 0 : index
      %c0_122 = arith.constant 0 : index
      %212 = vector.load %arg9[%c0_121, %c0_122] : memref<1x128xf32, #tpu.memory_space<vmem>>, vector<1x128xf32>
      %213 = vector.broadcast %212 : vector<1x128xf32> to vector<2x128xf32>
      %214 = arith.addf %211, %213 : vector<2x128xf32>
      %cst_123 = arith.constant 0.000000e+00 : f32
      %215 = vector.broadcast %cst_123 : f32 to vector<2x128xf32>
      %216 = arith.maximumf %214, %215 : vector<2x128xf32>
      %c0_124 = arith.constant 0 : index
      %c0_125 = arith.constant 0 : index
      %217 = vector.load %arg36[%c0_124, %c0_125] : memref<2x128xf32, #tpu.memory_space<vmem>>, vector<2x128xf32>
      tpu.vector_store %arg36[%c0_124, %c0_125], %216 {strides = array<i32>} : memref<2x128xf32, #tpu.memory_space<vmem>>, vector<2x128xf32>,
    } else {
    }
    %c0 = arith.constant 0 : index
    %c0_1 = arith.constant 0 : index
    %3 = vector.load %arg34[%c0, %c0_1] : memref<2x128xf32, #tpu.memory_space<vmem>>, vector<2x128xf32>
    %c2_i32 = arith.constant 2 : i32
    %4 = arith.cmpi sge, %arg0, %c2_i32 : i32
    %5 = arith.extui %4 : i1 to i32
    %6 = arith.sitofp %5 : i32 to f32
    %c0_2 = arith.constant 0 : index
    %c0_3 = arith.constant 0 : index
    %7 = vector.load %arg35[%c0_2, %c0_3] : memref<2x128xf32, #tpu.memory_space<vmem>>, vector<2x128xf32>
    %cst = arith.constant 1.000000e+00 : f32
    %8 = arith.subf %cst, %6 : f32
    %9 = vector.broadcast %8 : f32 to vector<2x128xf32>
    %10 = arith.mulf %7, %9 : vector<2x128xf32>
    %c0_4 = arith.constant 0 : index
    %c0_5 = arith.constant 0 : index
    %11 = vector.load %arg36[%c0_4, %c0_5] : memref<2x128xf32, #tpu.memory_space<vmem>>, vector<2x128xf32>
    %12 = vector.broadcast %6 : f32 to vector<2x128xf32>
    %13 = arith.mulf %11, %12 : vector<2x128xf32>
    %14 = arith.addf %10, %13 : vector<2x128xf32>
    %c0_6 = arith.constant 0 : index
    %c0_7 = arith.constant 0 : index
    %c0_8 = arith.constant 0 : index
    %15 = vector.load %arg10[%c0_6, %c0_7, %c0_8] : memref<1x128x128xbf16, #tpu.memory_space<vmem>>, vector<1x128x128xbf16>
    %16 = vector.shape_cast %15 : vector<1x128x128xbf16> to vector<128x128xbf16>
    %17 = arith.truncf %3 : vector<2x128xf32> to vector<2x128xbf16>
    %cst_9 = arith.constant dense<0.000000e+00> : vector<2x128xf32>
    %18 = tpu.matmul %17, %16, %cst_9 {dimension_numbers = #tpu.dot_dimension_numbers<[1], [0], [0], [1], [0, 0, 1, 1], [], []>} : vector<2x128xbf16>, vector<128x128xbf16>, vector<2x128xf32> -> vector<2x128xf32>
    %c0_10 = arith.constant 0 : index
    %c0_11 = arith.constant 0 : index
    %c0_12 = arith.constant 0 : index
    %19 = vector.load %arg11[%c0_10, %c0_11, %c0_12] : memref<1x1x128xf32, #tpu.memory_space<vmem>>, vector<1x1x128xf32>
    %20 = vector.shape_cast %19 : vector<1x1x128xf32> to vector<1x128xf32>
    %21 = vector.broadcast %20 : vector<1x128xf32> to vector<2x128xf32>
    %22 = arith.addf %18, %21 : vector<2x128xf32>
    %c0_13 = arith.constant 0 : index
    %c0_14 = arith.constant 0 : index
    %c0_15 = arith.constant 0 : index
    %23 = vector.load %arg12[%c0_13, %c0_14, %c0_15] : memref<1x128x128xbf16, #tpu.memory_space<vmem>>, vector<1x128x128xbf16>
    %24 = vector.shape_cast %23 : vector<1x128x128xbf16> to vector<128x128xbf16>
    %25 = arith.truncf %14 : vector<2x128xf32> to vector<2x128xbf16>
    %cst_16 = arith.constant dense<0.000000e+00> : vector<2x128xf32>
    %26 = tpu.matmul %25, %24, %cst_16 {dimension_numbers = #tpu.dot_dimension_numbers<[1], [0], [0], [1], [0, 0, 1, 1], [], []>} : vector<2x128xbf16>, vector<128x128xbf16>, vector<2x128xf32> -> vector<2x128xf32>
    %c0_17 = arith.constant 0 : index
    %c0_18 = arith.constant 0 : index
    %c0_19 = arith.constant 0 : index
    %27 = vector.load %arg13[%c0_17, %c0_18, %c0_19] : memref<1x1x128xf32, #tpu.memory_space<vmem>>, vector<1x1x128xf32>
    %28 = vector.shape_cast %27 : vector<1x1x128xf32> to vector<1x128xf32>
    %29 = vector.broadcast %28 : vector<1x128xf32> to vector<2x128xf32>
    %30 = arith.addf %26, %29 : vector<2x128xf32>
    %31 = arith.addf %30, %3 : vector<2x128xf32>
    %c0_20 = arith.constant 0 : index
    %c0_21 = arith.constant 0 : index
    %c0_22 = arith.constant 0 : index
    %32 = vector.load %arg14[%c0_20, %c0_21, %c0_22] : memref<1x1x128xf32, #tpu.memory_space<vmem>>, vector<1x1x128xf32>
    %33 = vector.shape_cast %32 : vector<1x1x128xf32> to vector<1x128xf32>
    %c0_23 = arith.constant 0 : index
    %c0_24 = arith.constant 0 : index
    %c0_25 = arith.constant 0 : index
    %34 = vector.load %arg15[%c0_23, %c0_24, %c0_25] : memref<1x1x128xf32, #tpu.memory_space<vmem>>, vector<1x1x128xf32>
    %35 = vector.shape_cast %34 : vector<1x1x128xf32> to vector<1x128xf32>
    %cst_26 = arith.constant dense<0.000000e+00> : vector<2xf32>
    %36 = vector.multi_reduction <add>, %31, %cst_26 [1] : vector<2x128xf32> to vector<2xf32>
    %37 = vector.shape_cast %36 : vector<2xf32> to vector<2x1xf32>
    %cst_27 = arith.constant 1.280000e+02 : f32
    %38 = vector.broadcast %cst_27 : f32 to vector<2x1xf32>
    %39 = arith.divf %37, %38 : vector<2x1xf32>
    %40 = vector.broadcast %39 : vector<2x1xf32> to vector<2x128xf32>
    %41 = arith.subf %31, %40 : vector<2x128xf32>
    %42 = arith.mulf %41, %41 : vector<2x128xf32>
    %cst_28 = arith.constant dense<0.000000e+00> : vector<2xf32>
    %43 = vector.multi_reduction <add>, %42, %cst_28 [1] : vector<2x128xf32> to vector<2xf32>
    %44 = vector.shape_cast %43 : vector<2xf32> to vector<2x1xf32>
    %cst_29 = arith.constant 1.280000e+02 : f32
    %45 = vector.broadcast %cst_29 : f32 to vector<2x1xf32>
    %46 = arith.divf %44, %45 : vector<2x1xf32>
    %47 = vector.broadcast %39 : vector<2x1xf32> to vector<2x128xf32>
    %48 = arith.subf %31, %47 : vector<2x128xf32>
    %cst_30 = arith.constant 9.99999996E-13 : f32
    %49 = vector.broadcast %cst_30 : f32 to vector<2x1xf32>
    %50 = arith.addf %46, %49 : vector<2x1xf32>
    %51 = math.sqrt %50 : vector<2x1xf32>
    %52 = vector.broadcast %51 : vector<2x1xf32> to vector<2x128xf32>
    %53 = arith.divf %48, %52 : vector<2x128xf32>
    %54 = vector.broadcast %33 : vector<1x128xf32> to vector<2x128xf32>
    %55 = arith.mulf %54, %53 : vector<2x128xf32>
    %56 = vector.broadcast %35 : vector<1x128xf32> to vector<2x128xf32>
    %57 = arith.addf %55, %56 : vector<2x128xf32>
    %58 = arith.addf %22, %14 : vector<2x128xf32>
    %c0_31 = arith.constant 0 : index
    %c0_32 = arith.constant 0 : index
    %c0_33 = arith.constant 0 : index
    %59 = vector.load %arg16[%c0_31, %c0_32, %c0_33] : memref<1x1x128xf32, #tpu.memory_space<vmem>>, vector<1x1x128xf32>
    %60 = vector.shape_cast %59 : vector<1x1x128xf32> to vector<1x128xf32>
    %c0_34 = arith.constant 0 : index
    %c0_35 = arith.constant 0 : index
    %c0_36 = arith.constant 0 : index
    %61 = vector.load %arg17[%c0_34, %c0_35, %c0_36] : memref<1x1x128xf32, #tpu.memory_space<vmem>>, vector<1x1x128xf32>
    %62 = vector.shape_cast %61 : vector<1x1x128xf32> to vector<1x128xf32>
    %cst_37 = arith.constant dense<0.000000e+00> : vector<2xf32>
    %63 = vector.multi_reduction <add>, %58, %cst_37 [1] : vector<2x128xf32> to vector<2xf32>
    %64 = vector.shape_cast %63 : vector<2xf32> to vector<2x1xf32>
    %cst_38 = arith.constant 1.280000e+02 : f32
    %65 = vector.broadcast %cst_38 : f32 to vector<2x1xf32>
    %66 = arith.divf %64, %65 : vector<2x1xf32>
    %67 = vector.broadcast %66 : vector<2x1xf32> to vector<2x128xf32>
    %68 = arith.subf %58, %67 : vector<2x128xf32>
    %69 = arith.mulf %68, %68 : vector<2x128xf32>
    %cst_39 = arith.constant dense<0.000000e+00> : vector<2xf32>
    %70 = vector.multi_reduction <add>, %69, %cst_39 [1] : vector<2x128xf32> to vector<2xf32>
    %71 = vector.shape_cast %70 : vector<2xf32> to vector<2x1xf32>
    %cst_40 = arith.constant 1.280000e+02 : f32
    %72 = vector.broadcast %cst_40 : f32 to vector<2x1xf32>
    %73 = arith.divf %71, %72 : vector<2x1xf32>
    %74 = vector.broadcast %66 : vector<2x1xf32> to vector<2x128xf32>
    %75 = arith.subf %58, %74 : vector<2x128xf32>
    %cst_41 = arith.constant 9.99999996E-13 : f32
    %76 = vector.broadcast %cst_41 : f32 to vector<2x1xf32>
    %77 = arith.addf %73, %76 : vector<2x1xf32>
    %78 = math.sqrt %77 : vector<2x1xf32>
    %79 = vector.broadcast %78 : vector<2x1xf32> to vector<2x128xf32>
    %80 = arith.divf %75, %79 : vector<2x128xf32>
    %81 = vector.broadcast %60 : vector<1x128xf32> to vector<2x128xf32>
    %82 = arith.mulf %81, %80 : vector<2x128xf32>
    %83 = vector.broadcast %62 : vector<1x128xf32> to vector<2x128xf32>
    %84 = arith.addf %82, %83 : vector<2x128xf32>
    %85 = tpu.concatenate %57, %84 in 0 : vector<2x128xf32>, vector<2x128xf32> -> vector<4x128xf32>
    %c0_42 = arith.constant 0 : index
    %c0_43 = arith.constant 0 : index
    %c0_44 = arith.constant 0 : index
    %86 = vector.load %arg18[%c0_42, %c0_43, %c0_44] : memref<1x128x256xbf16, #tpu.memory_space<vmem>>, vector<1x128x256xbf16>
    %87 = vector.shape_cast %86 : vector<1x128x256xbf16> to vector<128x256xbf16>
    %88 = arith.truncf %85 : vector<4x128xf32> to vector<4x128xbf16>
    %cst_45 = arith.constant dense<0.000000e+00> : vector<4x256xf32>
    %89 = tpu.matmul %88, %87, %cst_45 {dimension_numbers = #tpu.dot_dimension_numbers<[1], [0], [0], [1], [0, 0, 1, 1], [], []>} : vector<4x128xbf16>, vector<128x256xbf16>, vector<4x256xf32> -> vector<4x256xf32>
    %c0_46 = arith.constant 0 : index
    %c0_47 = arith.constant 0 : index
    %c0_48 = arith.constant 0 : index
    %90 = vector.load %arg19[%c0_46, %c0_47, %c0_48] : memref<1x1x256xf32, #tpu.memory_space<vmem>>, vector<1x1x256xf32>
    %91 = vector.shape_cast %90 : vector<1x1x256xf32> to vector<1x256xf32>
    %92 = vector.broadcast %91 : vector<1x256xf32> to vector<4x256xf32>
    %93 = arith.addf %89, %92 : vector<4x256xf32>
    %cst_49 = arith.constant 5.000000e-01 : f32
    %94 = vector.broadcast %cst_49 : f32 to vector<4x256xf32>
    %95 = arith.mulf %94, %93 : vector<4x256xf32>
    %cst_50 = arith.constant 4.471500e-02 : f32
    %96 = vector.broadcast %cst_50 : f32 to vector<4x256xf32>
    %97 = arith.mulf %96, %93 : vector<4x256xf32>
    %98 = arith.mulf %97, %93 : vector<4x256xf32>
    %99 = arith.mulf %98, %93 : vector<4x256xf32>
    %100 = arith.addf %93, %99 : vector<4x256xf32>
    %cst_51 = arith.constant 0.797884583 : f32
    %101 = vector.broadcast %cst_51 : f32 to vector<4x256xf32>
    %102 = arith.mulf %101, %100 : vector<4x256xf32>
    %103 = math.tanh %102 : vector<4x256xf32>
    %cst_52 = arith.constant 1.000000e+00 : f32
    %104 = vector.broadcast %cst_52 : f32 to vector<4x256xf32>
    %105 = arith.addf %104, %103 : vector<4x256xf32>
    %106 = arith.mulf %95, %105 : vector<4x256xf32>
    %c0_53 = arith.constant 0 : index
    %c0_54 = arith.constant 0 : index
    %c0_55 = arith.constant 0 : index
    %107 = vector.load %arg20[%c0_53, %c0_54, %c0_55] : memref<1x256x128xbf16, #tpu.memory_space<vmem>>, vector<1x256x128xbf16>
    %108 = vector.shape_cast %107 : vector<1x256x128xbf16> to vector<256x128xbf16>
    %109 = arith.truncf %106 : vector<4x256xf32> to vector<4x256xbf16>
    %cst_56 = arith.constant dense<0.000000e+00> : vector<4x128xf32>
    %110 = tpu.matmul %109, %108, %cst_56 {dimension_numbers = #tpu.dot_dimension_numbers<[1], [0], [0], [1], [0, 0, 1, 1], [], []>} : vector<4x256xbf16>, vector<256x128xbf16>, vector<4x128xf32> -> vector<4x128xf32>
    %c0_57 = arith.constant 0 : index
    %c0_58 = arith.constant 0 : index
    %c0_59 = arith.constant 0 : index
    %111 = vector.load %arg21[%c0_57, %c0_58, %c0_59] : memref<1x1x128xf32, #tpu.memory_space<vmem>>, vector<1x1x128xf32>
    %112 = vector.shape_cast %111 : vector<1x1x128xf32> to vector<1x128xf32>
    %113 = vector.broadcast %112 : vector<1x128xf32> to vector<4x128xf32>
    %114 = arith.addf %110, %113 : vector<4x128xf32>
    %115 = vector.extract_strided_slice %114 {offsets = [0, 0], sizes = [2, 128], strides = [1, 1]} : vector<4x128xf32> to vector<2x128xf32>
    %116 = arith.addf %115, %57 : vector<2x128xf32>
    %c0_60 = arith.constant 0 : index
    %c0_61 = arith.constant 0 : index
    %c0_62 = arith.constant 0 : index
    %117 = vector.load %arg22[%c0_60, %c0_61, %c0_62] : memref<1x1x128xf32, #tpu.memory_space<vmem>>, vector<1x1x128xf32>
    %118 = vector.shape_cast %117 : vector<1x1x128xf32> to vector<1x128xf32>
    %c0_63 = arith.constant 0 : index
    %c0_64 = arith.constant 0 : index
    %c0_65 = arith.constant 0 : index
    %119 = vector.load %arg23[%c0_63, %c0_64, %c0_65] : memref<1x1x128xf32, #tpu.memory_space<vmem>>, vector<1x1x128xf32>
    %120 = vector.shape_cast %119 : vector<1x1x128xf32> to vector<1x128xf32>
    %cst_66 = arith.constant dense<0.000000e+00> : vector<2xf32>
    %121 = vector.multi_reduction <add>, %116, %cst_66 [1] : vector<2x128xf32> to vector<2xf32>
    %122 = vector.shape_cast %121 : vector<2xf32> to vector<2x1xf32>
    %cst_67 = arith.constant 1.280000e+02 : f32
    %123 = vector.broadcast %cst_67 : f32 to vector<2x1xf32>
    %124 = arith.divf %122, %123 : vector<2x1xf32>
    %125 = vector.broadcast %124 : vector<2x1xf32> to vector<2x128xf32>
    %126 = arith.subf %116, %125 : vector<2x128xf32>
    %127 = arith.mulf %126, %126 : vector<2x128xf32>
    %cst_68 = arith.constant dense<0.000000e+00> : vector<2xf32>
    %128 = vector.multi_reduction <add>, %127, %cst_68 [1] : vector<2x128xf32> to vector<2xf32>
    %129 = vector.shape_cast %128 : vector<2xf32> to vector<2x1xf32>
    %cst_69 = arith.constant 1.280000e+02 : f32
    %130 = vector.broadcast %cst_69 : f32 to vector<2x1xf32>
    %131 = arith.divf %129, %130 : vector<2x1xf32>
    %132 = vector.broadcast %124 : vector<2x1xf32> to vector<2x128xf32>
    %133 = arith.subf %116, %132 : vector<2x128xf32>
    %cst_70 = arith.constant 9.99999996E-13 : f32
    %134 = vector.broadcast %cst_70 : f32 to vector<2x1xf32>
    %135 = arith.addf %131, %134 : vector<2x1xf32>
    %136 = math.sqrt %135 : vector<2x1xf32>
    %137 = vector.broadcast %136 : vector<2x1xf32> to vector<2x128xf32>
    %138 = arith.divf %133, %137 : vector<2x128xf32>
    %139 = vector.broadcast %118 : vector<1x128xf32> to vector<2x128xf32>
    %140 = arith.mulf %139, %138 : vector<2x128xf32>
    %141 = vector.broadcast %120 : vector<1x128xf32> to vector<2x128xf32>
    %142 = arith.addf %140, %141 : vector<2x128xf32>
    %143 = vector.extract_strided_slice %114 {offsets = [2, 0], sizes = [2, 128], strides = [1, 1]} : vector<4x128xf32> to vector<2x128xf32>
    %144 = arith.addf %143, %84 : vector<2x128xf32>
    %c0_71 = arith.constant 0 : index
    %c0_72 = arith.constant 0 : index
    %c0_73 = arith.constant 0 : index
    %145 = vector.load %arg24[%c0_71, %c0_72, %c0_73] : memref<1x1x128xf32, #tpu.memory_space<vmem>>, vector<1x1x128xf32>
    %146 = vector.shape_cast %145 : vector<1x1x128xf32> to vector<1x128xf32>
    %c0_74 = arith.constant 0 : index
    %c0_75 = arith.constant 0 : index
    %c0_76 = arith.constant 0 : index
    %147 = vector.load %arg25[%c0_74, %c0_75, %c0_76] : memref<1x1x128xf32, #tpu.memory_space<vmem>>, vector<1x1x128xf32>
    %148 = vector.shape_cast %147 : vector<1x1x128xf32> to vector<1x128xf32>
    %cst_77 = arith.constant dense<0.000000e+00> : vector<2xf32>
    %149 = vector.multi_reduction <add>, %144, %cst_77 [1] : vector<2x128xf32> to vector<2xf32>
    %150 = vector.shape_cast %149 : vector<2xf32> to vector<2x1xf32>
    %cst_78 = arith.constant 1.280000e+02 : f32
    %151 = vector.broadcast %cst_78 : f32 to vector<2x1xf32>
    %152 = arith.divf %150, %151 : vector<2x1xf32>
    %153 = vector.broadcast %152 : vector<2x1xf32> to vector<2x128xf32>
    %154 = arith.subf %144, %153 : vector<2x128xf32>
    %155 = arith.mulf %154, %154 : vector<2x128xf32>
    %cst_79 = arith.constant dense<0.000000e+00> : vector<2xf32>
    %156 = vector.multi_reduction <add>, %155, %cst_79 [1] : vector<2x128xf32> to vector<2xf32>
    %157 = vector.shape_cast %156 : vector<2xf32> to vector<2x1xf32>
    %cst_80 = arith.constant 1.280000e+02 : f32
    %158 = vector.broadcast %cst_80 : f32 to vector<2x1xf32>
    %159 = arith.divf %157, %158 : vector<2x1xf32>
    %160 = vector.broadcast %152 : vector<2x1xf32> to vector<2x128xf32>
    %161 = arith.subf %144, %160 : vector<2x128xf32>
    %cst_81 = arith.constant 9.99999996E-13 : f32
    %162 = vector.broadcast %cst_81 : f32 to vector<2x1xf32>
    %163 = arith.addf %159, %162 : vector<2x1xf32>
    %164 = math.sqrt %163 : vector<2x1xf32>
    %165 = vector.broadcast %164 : vector<2x1xf32> to vector<2x128xf32>
    %166 = arith.divf %161, %165 : vector<2x128xf32>
    %167 = vector.broadcast %146 : vector<1x128xf32> to vector<2x128xf32>
    %168 = arith.mulf %167, %166 : vector<2x128xf32>
    %169 = vector.broadcast %148 : vector<1x128xf32> to vector<2x128xf32>
    %170 = arith.addf %168, %169 : vector<2x128xf32>
    %c0_82 = arith.constant 0 : index
    %c0_83 = arith.constant 0 : index
    %c0_84 = arith.constant 0 : index
    %171 = vector.load %arg26[%c0_82, %c0_83, %c0_84] : memref<1x128x128xbf16, #tpu.memory_space<vmem>>, vector<1x128x128xbf16>
    %172 = vector.shape_cast %171 : vector<1x128x128xbf16> to vector<128x128xbf16>
    %173 = arith.truncf %142 : vector<2x128xf32> to vector<2x128xbf16>
    %cst_85 = arith.constant dense<0.000000e+00> : vector<2x128xf32>
    %174 = tpu.matmul %173, %172, %cst_85 {dimension_numbers = #tpu.dot_dimension_numbers<[1], [0], [0], [1], [0, 0, 1, 1], [], []>} : vector<2x128xbf16>, vector<128x128xbf16>, vector<2x128xf32> -> vector<2x128xf32>
    %c0_86 = arith.constant 0 : index
    %c0_87 = arith.constant 0 : index
    %c0_88 = arith.constant 0 : index
    %175 = vector.load %arg27[%c0_86, %c0_87, %c0_88] : memref<1x128x128xbf16, #tpu.memory_space<vmem>>, vector<1x128x128xbf16>
    %176 = vector.shape_cast %175 : vector<1x128x128xbf16> to vector<128x128xbf16>
    %177 = arith.truncf %170 : vector<2x128xf32> to vector<2x128xbf16>
    %cst_89 = arith.constant dense<0.000000e+00> : vector<2x128xf32>
    %178 = tpu.matmul %177, %176, %cst_89 {dimension_numbers = #tpu.dot_dimension_numbers<[1], [0], [0], [1], [0, 0, 1, 1], [], []>} : vector<2x128xbf16>, vector<128x128xbf16>, vector<2x128xf32> -> vector<2x128xf32>
    %179 = arith.addf %174, %178 : vector<2x128xf32>
    %c0_90 = arith.constant 0 : index
    %c0_91 = arith.constant 0 : index
    %c0_92 = arith.constant 0 : index
    %180 = vector.load %arg28[%c0_90, %c0_91, %c0_92] : memref<1x1x128xf32, #tpu.memory_space<vmem>>, vector<1x1x128xf32>
    %181 = vector.shape_cast %180 : vector<1x1x128xf32> to vector<1x128xf32>
    %182 = vector.broadcast %181 : vector<1x128xf32> to vector<2x128xf32>
    %183 = arith.addf %179, %182 : vector<2x128xf32>
    %c0_93 = arith.constant 0 : index
    %c0_94 = arith.constant 0 : index
    %184 = vector.load %arg34[%c0_93, %c0_94] : memref<2x128xf32, #tpu.memory_space<vmem>>, vector<2x128xf32>
    tpu.vector_store %arg34[%c0_93, %c0_94], %183 {strides = array<i32>} : memref<2x128xf32, #tpu.memory_space<vmem>>, vector<2x128xf32>,
    %c3_i32 = arith.constant 3 : i32
    %185 = arith.cmpi eq, %arg0, %c3_i32 : i32
    %186 = arith.extui %185 : i1 to i32
    %c0_i32_95 = arith.constant 0 : i32
    %187 = arith.cmpi ne, %186, %c0_i32_95 : i32
    scf.if %187 {
      %c0_96 = arith.constant 0 : index
      %c0_97 = arith.constant 0 : index
      %188 = vector.load %arg29[%c0_96, %c0_97] : memref<128x128xbf16, #tpu.memory_space<vmem>>, vector<128x128xbf16>
      %189 = arith.truncf %183 : vector<2x128xf32> to vector<2x128xbf16>
      %cst_98 = arith.constant dense<0.000000e+00> : vector<2x128xf32>
      %190 = tpu.matmul %189, %188, %cst_98 {dimension_numbers = #tpu.dot_dimension_numbers<[1], [0], [0], [1], [0, 0, 1, 1], [], []>} : vector<2x128xbf16>, vector<128x128xbf16>, vector<2x128xf32> -> vector<2x128xf32>
      %c0_99 = arith.constant 0 : index
      %c0_100 = arith.constant 0 : index
      %191 = vector.load %arg30[%c0_99, %c0_100] : memref<1x128xf32, #tpu.memory_space<vmem>>, vector<1x128xf32>
      %192 = vector.broadcast %191 : vector<1x128xf32> to vector<2x128xf32>
      %193 = arith.addf %190, %192 : vector<2x128xf32>
      %cst_101 = arith.constant 0.000000e+00 : f32
      %194 = vector.broadcast %cst_101 : f32 to vector<2x128xf32>
      %195 = arith.maximumf %193, %194 : vector<2x128xf32>
      %c0_102 = arith.constant 0 : index
      %c0_103 = arith.constant 0 : index
      %196 = vector.load %arg31[%c0_102, %c0_103] : memref<128x128xbf16, #tpu.memory_space<vmem>>, vector<128x128xbf16>
      %197 = arith.truncf %195 : vector<2x128xf32> to vector<2x128xbf16>
      %cst_104 = arith.constant dense<0.000000e+00> : vector<2x128xf32>
      %198 = tpu.matmul %197, %196, %cst_104 {dimension_numbers = #tpu.dot_dimension_numbers<[1], [0], [0], [1], [0, 0, 1, 1], [], []>} : vector<2x128xbf16>, vector<128x128xbf16>, vector<2x128xf32> -> vector<2x128xf32>
      %c0_105 = arith.constant 0 : index
      %c0_106 = arith.constant 0 : index
      %199 = vector.load %arg32[%c0_105, %c0_106] : memref<1x128xf32, #tpu.memory_space<vmem>>, vector<1x128xf32>
      %200 = vector.broadcast %199 : vector<1x128xf32> to vector<2x128xf32>
      %201 = arith.addf %198, %200 : vector<2x128xf32>
      %c0_107 = arith.constant 0 : index
      %c0_108 = arith.constant 0 : index
      %202 = vector.load %arg33[%c0_107, %c0_108] : memref<2x128xf32, #tpu.memory_space<vmem>>, vector<2x128xf32>
      tpu.vector_store %arg33[%c0_107, %c0_108], %201 {strides = array<i32>} : memref<2x128xf32, #tpu.memory_space<vmem>>, vector<2x128xf32>,
    } else {
    }
    return
  }
  func.func @transform_0(%arg0: i32) -> (i32, i32) {
    %c0_i32 = arith.constant 0 : i32
    %c0_i32_0 = arith.constant 0 : i32
    %c0_i32_1 = arith.constant 0 : i32
    return %c0_i32, %c0_i32_0 : i32, i32
  }
  func.func @transform_1(%arg0: i32) -> (i32, i32) {
    %c0_i32 = arith.constant 0 : i32
    %c0_i32_0 = arith.constant 0 : i32
    %c0_i32_1 = arith.constant 0 : i32
    return %c0_i32, %c0_i32_0 : i32, i32
  }
  func.func @transform_2(%arg0: i32) -> (i32, i32) {
    %c0_i32 = arith.constant 0 : i32
    %c0_i32_0 = arith.constant 0 : i32
    %c0_i32_1 = arith.constant 0 : i32
    return %c0_i32, %c0_i32_0 : i32, i32
  }
  func.func @transform_3(%arg0: i32) -> (i32, i32) {
    %c0_i32 = arith.constant 0 : i32
    %c0_i32_0 = arith.constant 0 : i32
    %c0_i32_1 = arith.constant 0 : i32
    return %c0_i32, %c0_i32_0 : i32, i32
  }
  func.func @transform_4(%arg0: i32) -> (i32, i32) {
    %c0_i32 = arith.constant 0 : i32
    %c0_i32_0 = arith.constant 0 : i32
    %c0_i32_1 = arith.constant 0 : i32
    return %c0_i32, %c0_i32_0 : i32, i32
  }
  func.func @transform_5(%arg0: i32) -> (i32, i32) {
    %c0_i32 = arith.constant 0 : i32
    %c0_i32_0 = arith.constant 0 : i32
    %c0_i32_1 = arith.constant 0 : i32
    return %c0_i32, %c0_i32_0 : i32, i32
  }
  func.func @transform_6(%arg0: i32) -> (i32, i32) {
    %c0_i32 = arith.constant 0 : i32
    %c0_i32_0 = arith.constant 0 : i32
    %c0_i32_1 = arith.constant 0 : i32
    return %c0_i32, %c0_i32_0 : i32, i32
  }
  func.func @transform_7(%arg0: i32) -> (i32, i32) {
    %c0_i32 = arith.constant 0 : i32
    %c0_i32_0 = arith.constant 0 : i32
    %c0_i32_1 = arith.constant 0 : i32
    return %c0_i32, %c0_i32_0 : i32, i32
  }
  func.func @transform_8(%arg0: i32) -> (i32, i32) {
    %c0_i32 = arith.constant 0 : i32
    %c0_i32_0 = arith.constant 0 : i32
    %c0_i32_1 = arith.constant 0 : i32
    return %c0_i32, %c0_i32_0 : i32, i32
  }
  func.func @transform_9(%arg0: i32) -> (i32, i32, i32) {
    %c0_i32 = arith.constant 0 : i32
    %c0_i32_0 = arith.constant 0 : i32
    %c0_i32_1 = arith.constant 0 : i32
    return %arg0, %c0_i32, %c0_i32_0 : i32, i32, i32
  }
  func.func @transform_10(%arg0: i32) -> (i32, i32, i32) {
    %c0_i32 = arith.constant 0 : i32
    %c0_i32_0 = arith.constant 0 : i32
    %c0_i32_1 = arith.constant 0 : i32
    return %arg0, %c0_i32, %c0_i32_0 : i32, i32, i32
  }
  func.func @transform_11(%arg0: i32) -> (i32, i32, i32) {
    %c0_i32 = arith.constant 0 : i32
    %c0_i32_0 = arith.constant 0 : i32
    %c0_i32_1 = arith.constant 0 : i32
    return %arg0, %c0_i32, %c0_i32_0 : i32, i32, i32
  }
  func.func @transform_12(%arg0: i32) -> (i32, i32, i32) {
    %c0_i32 = arith.constant 0 : i32
    %c0_i32_0 = arith.constant 0 : i32
    %c0_i32_1 = arith.constant 0 : i32
    return %arg0, %c0_i32, %c0_i32_0 : i32, i32, i32
  }
  func.func @transform_13(%arg0: i32) -> (i32, i32, i32) {
    %c0_i32 = arith.constant 0 : i32
    %c0_i32_0 = arith.constant 0 : i32
    %c0_i32_1 = arith.constant 0 : i32
    return %arg0, %c0_i32, %c0_i32_0 : i32, i32, i32
  }
  func.func @transform_14(%arg0: i32) -> (i32, i32, i32) {
    %c0_i32 = arith.constant 0 : i32
    %c0_i32_0 = arith.constant 0 : i32
    %c0_i32_1 = arith.constant 0 : i32
    return %arg0, %c0_i32, %c0_i32_0 : i32, i32, i32
  }
  func.func @transform_15(%arg0: i32) -> (i32, i32, i32) {
    %c0_i32 = arith.constant 0 : i32
    %c0_i32_0 = arith.constant 0 : i32
    %c0_i32_1 = arith.constant 0 : i32
    return %arg0, %c0_i32, %c0_i32_0 : i32, i32, i32
  }
  func.func @transform_16(%arg0: i32) -> (i32, i32, i32) {
    %c0_i32 = arith.constant 0 : i32
    %c0_i32_0 = arith.constant 0 : i32
    %c0_i32_1 = arith.constant 0 : i32
    return %arg0, %c0_i32, %c0_i32_0 : i32, i32, i32
  }
  func.func @transform_17(%arg0: i32) -> (i32, i32, i32) {
    %c0_i32 = arith.constant 0 : i32
    %c0_i32_0 = arith.constant 0 : i32
    %c0_i32_1 = arith.constant 0 : i32
    return %arg0, %c0_i32, %c0_i32_0 : i32, i32, i32
  }
  func.func @transform_18(%arg0: i32) -> (i32, i32, i32) {
    %c0_i32 = arith.constant 0 : i32
    %c0_i32_0 = arith.constant 0 : i32
    %c0_i32_1 = arith.constant 0 : i32
    return %arg0, %c0_i32, %c0_i32_0 : i32, i32, i32
  }
  func.func @transform_19(%arg0: i32) -> (i32, i32, i32) {
    %c0_i32 = arith.constant 0 : i32
    %c0_i32_0 = arith.constant 0 : i32
    %c0_i32_1 = arith.constant 0 : i32
    return %arg0, %c0_i32, %c0_i32_0 : i32, i32, i32
  }
  func.func @transform_20(%arg0: i32) -> (i32, i32, i32) {
    %c0_i32 = arith.constant 0 : i32
    %c0_i32_0 = arith.constant 0 : i32
    %c0_i32_1 = arith.constant 0 : i32
    return %arg0, %c0_i32, %c0_i32_0 : i32, i32, i32
  }
  func.func @transform_21(%arg0: i32) -> (i32, i32, i32) {
    %c0_i32 = arith.constant 0 : i32
    %c0_i32_0 = arith.constant 0 : i32
    %c0_i32_1 = arith.constant 0 : i32
    return %arg0, %c0_i32, %c0_i32_0 : i32, i32, i32
  }
  func.func @transform_22(%arg0: i32) -> (i32, i32, i32) {
    %c0_i32 = arith.constant 0 : i32
    %c0_i32_0 = arith.constant 0 : i32
    %c0_i32_1 = arith.constant 0 : i32
    return %arg0, %c0_i32, %c0_i32_0 : i32, i32, i32
  }
  func.func @transform_23(%arg0: i32) -> (i32, i32, i32) {
    %c0_i32 = arith.constant 0 : i32
    %c0_i32_0 = arith.constant 0 : i32
    %c0_i32_1 = arith.constant 0 : i32
    return %arg0, %c0_i32, %c0_i32_0 : i32, i32, i32
  }
  func.func @transform_24(%arg0: i32) -> (i32, i32, i32) {
    %c0_i32 = arith.constant 0 : i32
    %c0_i32_0 = arith.constant 0 : i32
    %c0_i32_1 = arith.constant 0 : i32
    return %arg0, %c0_i32, %c0_i32_0 : i32, i32, i32
  }
  func.func @transform_25(%arg0: i32) -> (i32, i32, i32) {
    %c0_i32 = arith.constant 0 : i32
    %c0_i32_0 = arith.constant 0 : i32
    %c0_i32_1 = arith.constant 0 : i32
    return %arg0, %c0_i32, %c0_i32_0 : i32, i32, i32
  }
  func.func @transform_26(%arg0: i32) -> (i32, i32, i32) {
    %c0_i32 = arith.constant 0 : i32
    %c0_i32_0 = arith.constant 0 : i32
    %c0_i32_1 = arith.constant 0 : i32
    return %arg0, %c0_i32, %c0_i32_0 : i32, i32, i32
  }
  func.func @transform_27(%arg0: i32) -> (i32, i32, i32) {
    %c0_i32 = arith.constant 0 : i32
    %c0_i32_0 = arith.constant 0 : i32
    %c0_i32_1 = arith.constant 0 : i32
    return %arg0, %c0_i32, %c0_i32_0 : i32, i32, i32
  }
  func.func @transform_28(%arg0: i32) -> (i32, i32) {
    %c0_i32 = arith.constant 0 : i32
    %c0_i32_0 = arith.constant 0 : i32
    %c0_i32_1 = arith.constant 0 : i32
    return %c0_i32, %c0_i32_0 : i32, i32
  }
  func.func @transform_29(%arg0: i32) -> (i32, i32) {
    %c0_i32 = arith.constant 0 : i32
    %c0_i32_0 = arith.constant 0 : i32
    %c0_i32_1 = arith.constant 0 : i32
    return %c0_i32, %c0_i32_0 : i32, i32
  }
  func.func @transform_30(%arg0: i32) -> (i32, i32) {
    %c0_i32 = arith.constant 0 : i32
    %c0_i32_0 = arith.constant 0 : i32
    %c0_i32_1 = arith.constant 0 : i32
    return %c0_i32, %c0_i32_0 : i32, i32
  }
  func.func @transform_31(%arg0: i32) -> (i32, i32) {
    %c0_i32 = arith.constant 0 : i32
    %c0_i32_0 = arith.constant 0 : i32
    %c0_i32_1 = arith.constant 0 : i32
    return %c0_i32, %c0_i32_0 : i32, i32
  }
  func.func @transform_32(%arg0: i32) -> (i32, i32) {
    %c0_i32 = arith.constant 0 : i32
    %c0_i32_0 = arith.constant 0 : i32
    %c0_i32_1 = arith.constant 0 : i32
    return %c0_i32, %c0_i32_0 : i32, i32
  }
}

</mosaic_0001>

<llo_original>
// kernel: tpu_custom_call.1
$region0: #{tpu_custom_call.1}
  #allocation0 [shape = 'u32[]', space=smem, size = 0x4, offset = 0x4, fixed_abs, tag = 'smem constant byte address 0x4 - core index']
  #allocation1 [shape = 'u32[144,128]{1,0:T(1,128)}', space=vmem, size = 0x12000, scoped, tag = 'internal scratch']
  #allocation2 [shape = 'f32[2,128]{1,0:T(2,128)}', space=vmem, size = 0x400, scoped, tag = 'scratch operand']
  #allocation3 [shape = 'f32[2,128]{1,0:T(2,128)}', space=vmem, size = 0x400, scoped, tag = 'scratch operand']
  #allocation4 [shape = 'f32[2,128]{1,0:T(2,128)}', space=vmem, size = 0x400, scoped, tag = 'scratch operand']
  %s0 = inlined_call_operand.smem [shape: u32[33], index: -1, kind: input, shape index: {}]
  %s1 = sld [smem:[%s0]]
  %s2 = scalar_lea.smem %s0, 1
  %s3 = sld [smem:[%s2]]
  %s4 = scalar_lea.smem %s0, 2
  %s5 = sld [smem:[%s4]]
  %s6 = scalar_lea.smem %s0, 3
  %s7 = sld [smem:[%s6]]
  %s8 = scalar_lea.smem %s0, 4
  %s9 = sld [smem:[%s8]]
  %s10 = scalar_lea.smem %s0, 5
  %s11 = sld [smem:[%s10]]
  %s12 = scalar_lea.smem %s0, 6
  %s13 = sld [smem:[%s12]]
  %s14 = scalar_lea.smem %s0, 7
  %s15 = sld [smem:[%s14]]
  %s16 = scalar_lea.smem %s0, 8
  %s17 = sld [smem:[%s16]]
  %s18 = scalar_lea.smem %s0, 9
  %s19 = sld [smem:[%s18]]
  %s20 = scalar_lea.smem %s0, 10
  %s21 = sld [smem:[%s20]]
  %s22 = scalar_lea.smem %s0, 11
  %s23 = sld [smem:[%s22]]
  %s24 = scalar_lea.smem %s0, 12
  %s25 = sld [smem:[%s24]]
  %s26 = scalar_lea.smem %s0, 13
  %s27 = sld [smem:[%s26]]
  %s28 = scalar_lea.smem %s0, 14
  %s29 = sld [smem:[%s28]]
  %s30 = scalar_lea.smem %s0, 15
  %s31 = sld [smem:[%s30]]
  %s32 = scalar_lea.smem %s0, 16
  %s33 = sld [smem:[%s32]]
  %s34 = scalar_lea.smem %s0, 17
  %s35 = sld [smem:[%s34]]
  %s36 = scalar_lea.smem %s0, 18
  %s37 = sld [smem:[%s36]]
  %s38 = scalar_lea.smem %s0, 19
  %s39 = sld [smem:[%s38]]
  %s40 = scalar_lea.smem %s0, 20
  %s41 = sld [smem:[%s40]]
  %s42 = scalar_lea.smem %s0, 21
  %s43 = sld [smem:[%s42]]
  %s44 = scalar_lea.smem %s0, 22
  %s45 = sld [smem:[%s44]]
  %s46 = scalar_lea.smem %s0, 23
  %s47 = sld [smem:[%s46]]
  %s48 = scalar_lea.smem %s0, 24
  %s49 = sld [smem:[%s48]]
  %s50 = scalar_lea.smem %s0, 25
  %s51 = sld [smem:[%s50]]
  %s52 = scalar_lea.smem %s0, 26
  %s53 = sld [smem:[%s52]]
  %s54 = scalar_lea.smem %s0, 27
  %s55 = sld [smem:[%s54]]
  %s56 = scalar_lea.smem %s0, 28
  %s57 = sld [smem:[%s56]]
  %s58 = scalar_lea.smem %s0, 29
  %s59 = sld [smem:[%s58]]
  %s60 = scalar_lea.smem %s0, 30
  %s61 = sld [smem:[%s60]]
  %s62 = scalar_lea.smem %s0, 31
  %s63 = sld [smem:[%s62]]
  %s64 = scalar_lea.smem %s0, 32
  %s65 = sld [smem:[%s64]]
  %s66 = sld [smem:[#allocation0]]
  $region245: #{tpu_custom_call.1} parent=0
    _
  %s68 = ssub.s32 1, %s66
  %s69 = scalar_select 0, %s68, %s66
  $region1: #{tpu_custom_call.1} parent=0
    #allocation5 [shape = 'u8[2048]{0}', space=vmem, size = 0x800, scoped, tag = 'input window, operand 0, single buffered']
    #allocation6 [shape = 's32[2]{0}', space=sflag, size = 0x8, scoped, tag = 'scoped memory for tpu_custom_call.1']
    #allocation7 [shape = 's32[2]{0}', space=sflag, size = 0x8, scoped, tag = 'scoped memory for tpu_custom_call.1']
    #allocation8 [shape = 'u8[1024]{0}', space=vmem, size = 0x400, scoped, tag = 'input window, operand 1, single buffered']
    #allocation9 [shape = 's32[1]{0}', space=sflag, size = 0x4, scoped, tag = 'scoped memory for tpu_custom_call.1']
    #allocation10 [shape = 'u8[1024]{0}', space=vmem, size = 0x400, scoped, tag = 'input window, operand 2, single buffered']
    #allocation11 [shape = 'u8[65536]{0}', space=vmem, size = 0x10000, scoped, tag = 'input window, operand 3, single buffered']
    #allocation12 [shape = 's32[1]{0}', space=sflag, size = 0x4, scoped, tag = 'scoped memory for tpu_custom_call.1']
    #allocation13 [shape = 'u8[16384]{0}', space=vmem, size = 0x4000, scoped, tag = 'input window, operand 5, single buffered']
    #allocation14 [shape = 'u8[512]{0}', space=vmem, size = 0x400, scoped, tag = 'input window, operand 6, single buffered']
    #allocation15 [shape = 's32[1]{0}', space=sflag, size = 0x4, scoped, tag = 'scoped memory for tpu_custom_call.1']
    #allocation16 [shape = 'u8[32768]{0}', space=vmem, size = 0x8000, scoped, tag = 'input window, operand 7, single buffered']
    #allocation17 [shape = 'u8[512]{0}', space=vmem, size = 0x400, scoped, tag = 'input window, operand 8, single buffered']
    #allocation18 [shape = 's32[1]{0}', space=sflag, size = 0x4, scoped, tag = 'scoped memory for tpu_custom_call.1']
    #allocation19 [shape = 'u8[65536]{0}', space=vmem, size = 0x10000, scoped, tag = 'input window, operand 9']
    #allocation20 [shape = 'u8[65536]{0}', space=vmem, size = 0x10000, scoped, tag = 'input window, operand 11']
    #allocation21 [shape = 'u8[131072]{0}', space=vmem, size = 0x20000, scoped, tag = 'input window, operand 17']
    #allocation22 [shape = 'u8[131072]{0}', space=vmem, size = 0x20000, scoped, tag = 'input window, operand 19']
    #allocation23 [shape = 'u8[1024]{0}', space=vmem, size = 0x400, scoped, tag = 'input window, operand 22']
    #allocation24 [shape = 'u8[1024]{0}', space=vmem, size = 0x400, scoped, tag = 'input window, operand 23']
    #allocation25 [shape = 'u8[1024]{0}', space=vmem, size = 0x400, scoped, tag = 'input window, operand 24']
    #allocation26 [shape = 'u8[65536]{0}', space=vmem, size = 0x10000, scoped, tag = 'input window, operand 25']
    #allocation27 [shape = 'u8[65536]{0}', space=vmem, size = 0x10000, scoped, tag = 'input window, operand 26']
    #allocation28 [shape = 'u8[1024]{0}', space=vmem, size = 0x400, scoped, tag = 'input window, operand 27']
    #allocation29 [shape = 'u8[32768]{0}', space=vmem, size = 0x8000, scoped, tag = 'input window, operand 30, single buffered']
    #allocation30 [shape = 'u8[1024]{0}', space=vmem, size = 0x400, scoped, tag = 'output window, operand 0, single buffered']
    %70 = vsyncpa [#allocation6], 0
    %71 = vsyncpa [#allocation9], 0
    %72 = vsyncpa [#allocation12], 0
    %73 = vsyncpa [#allocation15], 0
    %74 = vsyncpa [#allocation18], 0
    %75 = vsyncpa [#allocation7], 0
    loop: start=0, step=1, limit=6
    $region2: #{tpu_custom_call.1} parent=1 // loop_pre_header
      _
    $region3: #{tpu_custom_call.1} parent=1 // loop_header
      %s77 = sphi 0, %s81
      %p78 = scmp.ge.s32.totalorder %s77, 6
      %s85 = sphi 0, %s85
      %s87 = sphi 0, %s85
      %s88 = sphi 0, %s87
      %s102 = sphi 0, %s88
      %s106 = sphi 0, %s106
      %s108 = sphi 0, %s106
      %s109 = sphi 0, %s108
      %s123 = sphi 0, %s109
      %s127 = sphi 0, %s127
      %s129 = sphi 0, %s127
      %s130 = sphi 0, %s129
      %s144 = sphi 0, %s130
      %s148 = sphi 0, %s148
      %s150 = sphi 0, %s148
      %s151 = sphi 0, %s150
      %s165 = sphi 0, %s151
      %s169 = sphi 0, %s169
      %s171 = sphi 0, %s169
      %s172 = sphi 0, %s171
      %s186 = sphi 0, %s172
      %s190 = sphi 0, %s190
      %s192 = sphi 0, %s190
      %s193 = sphi 0, %s192
      %s207 = sphi 0, %s193
      %s211 = sphi 0, %s211
      %s213 = sphi 0, %s211
      %s214 = sphi 0, %s213
      %s228 = sphi 0, %s214
      %s232 = sphi 0, %s232
      %s234 = sphi 0, %s232
      %s235 = sphi 0, %s234
      %s249 = sphi 0, %s235
      %s253 = sphi 0, %s253
      %s255 = sphi 0, %s253
      %s256 = sphi 0, %s255
      %s270 = sphi 0, %s256
      %s276 = sphi 0, %s278
      %s279 = sphi 0, %s276
      %s280 = sphi 0, %s279
      %s296 = sphi 0, %s280
      %s302 = sphi 0, %s304
      %s305 = sphi 0, %s302
      %s306 = sphi 0, %s305
      %s322 = sphi 0, %s306
      %s328 = sphi 0, %s330
      %s331 = sphi 0, %s328
      %s332 = sphi 0, %s331
      %s348 = sphi 0, %s332
      %s354 = sphi 0, %s356
      %s357 = sphi 0, %s354
      %s358 = sphi 0, %s357
      %s374 = sphi 0, %s358
      %s380 = sphi 0, %s382
      %s383 = sphi 0, %s380
      %s384 = sphi 0, %s383
      %s400 = sphi 0, %s384
      %s406 = sphi 0, %s408
      %s409 = sphi 0, %s406
      %s410 = sphi 0, %s409
      %s426 = sphi 0, %s410
      %s432 = sphi 0, %s434
      %s435 = sphi 0, %s432
      %s436 = sphi 0, %s435
      %s452 = sphi 0, %s436
      %s458 = sphi 0, %s460
      %s461 = sphi 0, %s458
      %s462 = sphi 0, %s461
      %s478 = sphi 0, %s462
      %s484 = sphi 0, %s486
      %s487 = sphi 0, %s484
      %s488 = sphi 0, %s487
      %s504 = sphi 0, %s488
      %s510 = sphi 0, %s512
      %s513 = sphi 0, %s510
      %s514 = sphi 0, %s513
      %s530 = sphi 0, %s514
      %s536 = sphi 0, %s538
      %s539 = sphi 0, %s536
      %s540 = sphi 0, %s539
      %s556 = sphi 0, %s540
      %s562 = sphi 0, %s564
      %s565 = sphi 0, %s562
      %s566 = sphi 0, %s565
      %s582 = sphi 0, %s566
      %s588 = sphi 0, %s590
      %s591 = sphi 0, %s588
      %s592 = sphi 0, %s591
      %s608 = sphi 0, %s592
      %s614 = sphi 0, %s616
      %s617 = sphi 0, %s614
      %s618 = sphi 0, %s617
      %s634 = sphi 0, %s618
      %s640 = sphi 0, %s642
      %s643 = sphi 0, %s640
      %s644 = sphi 0, %s643
      %s660 = sphi 0, %s644
      %s666 = sphi 0, %s668
      %s669 = sphi 0, %s666
      %s670 = sphi 0, %s669
      %s686 = sphi 0, %s670
      %s692 = sphi 0, %s694
      %s695 = sphi 0, %s692
      %s696 = sphi 0, %s695
      %s712 = sphi 0, %s696
      %s718 = sphi 0, %s720
      %s721 = sphi 0, %s718
      %s722 = sphi 0, %s721
      %s738 = sphi 0, %s722
      %s744 = sphi 0, %s746
      %s747 = sphi 0, %s744
      %s748 = sphi 0, %s747
      %s764 = sphi 0, %s748
      %s768 = sphi 0, %s768
      %s770 = sphi 0, %s768
      %s771 = sphi 0, %s770
      %s785 = sphi 0, %s771
      %s789 = sphi 0, %s789
      %s791 = sphi 0, %s789
      %s792 = sphi 0, %s791
      %s806 = sphi 0, %s792
      %s810 = sphi 0, %s810
      %s812 = sphi 0, %s810
      %s813 = sphi 0, %s812
      %s827 = sphi 0, %s813
      %s831 = sphi 0, %s831
      %s833 = sphi 0, %s831
      %s834 = sphi 0, %s833
      %s848 = sphi 0, %s834
      %s852 = sphi 0, %s852
      %s854 = sphi 0, %s852
      %s855 = sphi 0, %s854
      %s869 = sphi 0, %s855
    $region4: #{tpu_custom_call.1} parent=1 // loop_header_branch
      %80 = sbr.rel (%p78) target = $region8
    $region5: #{tpu_custom_call.1} parent=1 // loop_body
      %s82 = ssub.s32 %s77, 1
      %s83 = ssub.s32 %s77, 2
      %s84 = sadd.s32 %s77, 1
      %s86 = sadd.s32 %s85, 1
      %p89 = scmp.eq.s32.totalorder %s77, 3
      %p90 = scmp.ne.s32.totalorder %s85, %s87
      %p91 = scmp.eq.s32.totalorder %s77, 0
      %p92 = por %p90, %p91
      %p93 = scmp.ne.s32.totalorder %s85, %s87
      %p94 = scmp.eq.s32.totalorder %s82, 3
      %p95 = por %p93, %p94
      %p96 = scmp.ne.s32.totalorder %s87, %s88
      %p97 = scmp.eq.s32.totalorder %s82, 0
      %p98 = por %p96, %p97
      %p99 = scmp.ne.s32.totalorder %s87, %s88
      %p100 = scmp.eq.s32.totalorder %s83, 3
      %p101 = por %p99, %p100
      %p103 = scmp.ne.s32.totalorder %s88, %s102
      %p104 = scmp.eq.s32.totalorder %s83, 0
      %p105 = por %p103, %p104
      %s107 = sadd.s32 %s106, 1
      %p110 = scmp.eq.s32.totalorder %s77, 3
      %p111 = scmp.ne.s32.totalorder %s106, %s108
      %p112 = scmp.eq.s32.totalorder %s77, 0
      %p113 = por %p111, %p112
      %p114 = scmp.ne.s32.totalorder %s106, %s108
      %p115 = scmp.eq.s32.totalorder %s82, 3
      %p116 = por %p114, %p115
      %p117 = scmp.ne.s32.totalorder %s108, %s109
      %p118 = scmp.eq.s32.totalorder %s82, 0
      %p119 = por %p117, %p118
      %p120 = scmp.ne.s32.totalorder %s108, %s109
      %p121 = scmp.eq.s32.totalorder %s83, 3
      %p122 = por %p120, %p121
      %p124 = scmp.ne.s32.totalorder %s109, %s123
      %p125 = scmp.eq.s32.totalorder %s83, 0
      %p126 = por %p124, %p125
      %s128 = sadd.s32 %s127, 1
      %p131 = scmp.eq.s32.totalorder %s77, 3
      %p132 = scmp.ne.s32.totalorder %s127, %s129
      %p133 = scmp.eq.s32.totalorder %s77, 0
      %p134 = por %p132, %p133
      %p135 = scmp.ne.s32.totalorder %s127, %s129
      %p136 = scmp.eq.s32.totalorder %s82, 3
      %p137 = por %p135, %p136
      %p138 = scmp.ne.s32.totalorder %s129, %s130
      %p139 = scmp.eq.s32.totalorder %s82, 0
      %p140 = por %p138, %p139
      %p141 = scmp.ne.s32.totalorder %s129, %s130
      %p142 = scmp.eq.s32.totalorder %s83, 3
      %p143 = por %p141, %p142
      %p145 = scmp.ne.s32.totalorder %s130, %s144
      %p146 = scmp.eq.s32.totalorder %s83, 0
      %p147 = por %p145, %p146
      %s149 = sadd.s32 %s148, 1
      %p152 = scmp.eq.s32.totalorder %s77, 3
      %p153 = scmp.ne.s32.totalorder %s148, %s150
      %p154 = scmp.eq.s32.totalorder %s77, 0
      %p155 = por %p153, %p154
      %p156 = scmp.ne.s32.totalorder %s148, %s150
      %p157 = scmp.eq.s32.totalorder %s82, 3
      %p158 = por %p156, %p157
      %p159 = scmp.ne.s32.totalorder %s150, %s151
      %p160 = scmp.eq.s32.totalorder %s82, 0
      %p161 = por %p159, %p160
      %p162 = scmp.ne.s32.totalorder %s150, %s151
      %p163 = scmp.eq.s32.totalorder %s83, 3
      %p164 = por %p162, %p163
      %p166 = scmp.ne.s32.totalorder %s151, %s165
      %p167 = scmp.eq.s32.totalorder %s83, 0
      %p168 = por %p166, %p167
      %s170 = sadd.s32 %s169, 1
      %p173 = scmp.eq.s32.totalorder %s77, 3
      %p174 = scmp.ne.s32.totalorder %s169, %s171
      %p175 = scmp.eq.s32.totalorder %s77, 0
      %p176 = por %p174, %p175
      %p177 = scmp.ne.s32.totalorder %s169, %s171
      %p178 = scmp.eq.s32.totalorder %s82, 3
      %p179 = por %p177, %p178
      %p180 = scmp.ne.s32.totalorder %s171, %s172
      %p181 = scmp.eq.s32.totalorder %s82, 0
      %p182 = por %p180, %p181
      %p183 = scmp.ne.s32.totalorder %s171, %s172
      %p184 = scmp.eq.s32.totalorder %s83, 3
      %p185 = por %p183, %p184
      %p187 = scmp.ne.s32.totalorder %s172, %s186
      %p188 = scmp.eq.s32.totalorder %s83, 0
      %p189 = por %p187, %p188
      %s191 = sadd.s32 %s190, 1
      %p194 = scmp.eq.s32.totalorder %s77, 3
      %p195 = scmp.ne.s32.totalorder %s190, %s192
      %p196 = scmp.eq.s32.totalorder %s77, 0
      %p197 = por %p195, %p196
      %p198 = scmp.ne.s32.totalorder %s190, %s192
      %p199 = scmp.eq.s32.totalorder %s82, 3
      %p200 = por %p198, %p199
      %p201 = scmp.ne.s32.totalorder %s192, %s193
      %p202 = scmp.eq.s32.totalorder %s82, 0
      %p203 = por %p201, %p202
      %p204 = scmp.ne.s32.totalorder %s192, %s193
      %p205 = scmp.eq.s32.totalorder %s83, 3
      %p206 = por %p204, %p205
      %p208 = scmp.ne.s32.totalorder %s193, %s207
      %p209 = scmp.eq.s32.totalorder %s83, 0
      %p210 = por %p208, %p209
      %s212 = sadd.s32 %s211, 1
      %p215 = scmp.eq.s32.totalorder %s77, 3
      %p216 = scmp.ne.s32.totalorder %s211, %s213
      %p217 = scmp.eq.s32.totalorder %s77, 0
      %p218 = por %p216, %p217
      %p219 = scmp.ne.s32.totalorder %s211, %s213
      %p220 = scmp.eq.s32.totalorder %s82, 3
      %p221 = por %p219, %p220
      %p222 = scmp.ne.s32.totalorder %s213, %s214
      %p223 = scmp.eq.s32.totalorder %s82, 0
      %p224 = por %p222, %p223
      %p225 = scmp.ne.s32.totalorder %s213, %s214
      %p226 = scmp.eq.s32.totalorder %s83, 3
      %p227 = por %p225, %p226
      %p229 = scmp.ne.s32.totalorder %s214, %s228
      %p230 = scmp.eq.s32.totalorder %s83, 0
      %p231 = por %p229, %p230
      %s233 = sadd.s32 %s232, 1
      %p236 = scmp.eq.s32.totalorder %s77, 3
      %p237 = scmp.ne.s32.totalorder %s232, %s234
      %p238 = scmp.eq.s32.totalorder %s77, 0
      %p239 = por %p237, %p238
      %p240 = scmp.ne.s32.totalorder %s232, %s234
      %p241 = scmp.eq.s32.totalorder %s82, 3
      %p242 = por %p240, %p241
      %p243 = scmp.ne.s32.totalorder %s234, %s235
      %p244 = scmp.eq.s32.totalorder %s82, 0
      %p245 = por %p243, %p244
      %p246 = scmp.ne.s32.totalorder %s234, %s235
      %p247 = scmp.eq.s32.totalorder %s83, 3
      %p248 = por %p246, %p247
      %p250 = scmp.ne.s32.totalorder %s235, %s249
      %p251 = scmp.eq.s32.totalorder %s83, 0
      %p252 = por %p250, %p251
      %s254 = sadd.s32 %s253, 1
      %p257 = scmp.eq.s32.totalorder %s77, 3
      %p258 = scmp.ne.s32.totalorder %s253, %s255
      %p259 = scmp.eq.s32.totalorder %s77, 0
      %p260 = por %p258, %p259
      %p261 = scmp.ne.s32.totalorder %s253, %s255
      %p262 = scmp.eq.s32.totalorder %s82, 3
      %p263 = por %p261, %p262
      %p264 = scmp.ne.s32.totalorder %s255, %s256
      %p265 = scmp.eq.s32.totalorder %s82, 0
      %p266 = por %p264, %p265
      %p267 = scmp.ne.s32.totalorder %s255, %s256
      %p268 = scmp.eq.s32.totalorder %s83, 3
      %p269 = por %p267, %p268
      %p271 = scmp.ne.s32.totalorder %s256, %s270
      %p272 = scmp.eq.s32.totalorder %s83, 0
      %p273 = por %p271, %p272
      %s274 = ssub.s32 %s77, %s84
      %p275 = scmp.eq.s32.totalorder %s274, 0
      %s277 = sadd.s32 %s276, 1
      %s278 = scalar_select %p275, %s276, %s277
      %p281 = pneg %p275
      %p282 = scmp.eq.s32.totalorder %s77, 3
      %p283 = por %p281, %p282
      %p284 = scmp.ne.s32.totalorder %s276, %s279
      %p285 = scmp.eq.s32.totalorder %s77, 0
      %p286 = por %p284, %p285
      %p287 = scmp.ne.s32.totalorder %s276, %s279
      %p288 = scmp.eq.s32.totalorder %s82, 3
      %p289 = por %p287, %p288
      %p290 = scmp.ne.s32.totalorder %s279, %s280
      %p291 = scmp.eq.s32.totalorder %s82, 0
      %p292 = por %p290, %p291
      %p293 = scmp.ne.s32.totalorder %s279, %s280
      %p294 = scmp.eq.s32.totalorder %s83, 3
      %p295 = por %p293, %p294
      %p297 = scmp.ne.s32.totalorder %s280, %s296
      %p298 = scmp.eq.s32.totalorder %s83, 0
      %p299 = por %p297, %p298
      %s300 = ssub.s32 %s77, %s84
      %p301 = scmp.eq.s32.totalorder %s300, 0
      %s303 = sadd.s32 %s302, 1
      %s304 = scalar_select %p301, %s302, %s303
      %p307 = pneg %p301
      %p308 = scmp.eq.s32.totalorder %s77, 3
      %p309 = por %p307, %p308
      %p310 = scmp.ne.s32.totalorder %s302, %s305
      %p311 = scmp.eq.s32.totalorder %s77, 0
      %p312 = por %p310, %p311
      %p313 = scmp.ne.s32.totalorder %s302, %s305
      %p314 = scmp.eq.s32.totalorder %s82, 3
      %p315 = por %p313, %p314
      %p316 = scmp.ne.s32.totalorder %s305, %s306
      %p317 = scmp.eq.s32.totalorder %s82, 0
      %p318 = por %p316, %p317
      %p319 = scmp.ne.s32.totalorder %s305, %s306
      %p320 = scmp.eq.s32.totalorder %s83, 3
      %p321 = por %p319, %p320
      %p323 = scmp.ne.s32.totalorder %s306, %s322
      %p324 = scmp.eq.s32.totalorder %s83, 0
      %p325 = por %p323, %p324
      %s326 = ssub.s32 %s77, %s84
      %p327 = scmp.eq.s32.totalorder %s326, 0
      %s329 = sadd.s32 %s328, 1
      %s330 = scalar_select %p327, %s328, %s329
      %p333 = pneg %p327
      %p334 = scmp.eq.s32.totalorder %s77, 3
      %p335 = por %p333, %p334
      %p336 = scmp.ne.s32.totalorder %s328, %s331
      %p337 = scmp.eq.s32.totalorder %s77, 0
      %p338 = por %p336, %p337
      %p339 = scmp.ne.s32.totalorder %s328, %s331
      %p340 = scmp.eq.s32.totalorder %s82, 3
      %p341 = por %p339, %p340
      %p342 = scmp.ne.s32.totalorder %s331, %s332
      %p343 = scmp.eq.s32.totalorder %s82, 0
      %p344 = por %p342, %p343
      %p345 = scmp.ne.s32.totalorder %s331, %s332
      %p346 = scmp.eq.s32.totalorder %s83, 3
      %p347 = por %p345, %p346
      %p349 = scmp.ne.s32.totalorder %s332, %s348
      %p350 = scmp.eq.s32.totalorder %s83, 0
      %p351 = por %p349, %p350
      %s352 = ssub.s32 %s77, %s84
      %p353 = scmp.eq.s32.totalorder %s352, 0
      %s355 = sadd.s32 %s354, 1
      %s356 = scalar_select %p353, %s354, %s355
      %p359 = pneg %p353
      %p360 = scmp.eq.s32.totalorder %s77, 3
      %p361 = por %p359, %p360
      %p362 = scmp.ne.s32.totalorder %s354, %s357
      %p363 = scmp.eq.s32.totalorder %s77, 0
      %p364 = por %p362, %p363
      %p365 = scmp.ne.s32.totalorder %s354, %s357
      %p366 = scmp.eq.s32.totalorder %s82, 3
      %p367 = por %p365, %p366
      %p368 = scmp.ne.s32.totalorder %s357, %s358
      %p369 = scmp.eq.s32.totalorder %s82, 0
      %p370 = por %p368, %p369
      %p371 = scmp.ne.s32.totalorder %s357, %s358
      %p372 = scmp.eq.s32.totalorder %s83, 3
      %p373 = por %p371, %p372
      %p375 = scmp.ne.s32.totalorder %s358, %s374
      %p376 = scmp.eq.s32.totalorder %s83, 0
      %p377 = por %p375, %p376
      %s378 = ssub.s32 %s77, %s84
      %p379 = scmp.eq.s32.totalorder %s378, 0
      %s381 = sadd.s32 %s380, 1
      %s382 = scalar_select %p379, %s380, %s381
      %p385 = pneg %p379
      %p386 = scmp.eq.s32.totalorder %s77, 3
      %p387 = por %p385, %p386
      %p388 = scmp.ne.s32.totalorder %s380, %s383
      %p389 = scmp.eq.s32.totalorder %s77, 0
      %p390 = por %p388, %p389
      %p391 = scmp.ne.s32.totalorder %s380, %s383
      %p392 = scmp.eq.s32.totalorder %s82, 3
      %p393 = por %p391, %p392
      %p394 = scmp.ne.s32.totalorder %s383, %s384
      %p395 = scmp.eq.s32.totalorder %s82, 0
      %p396 = por %p394, %p395
      %p397 = scmp.ne.s32.totalorder %s383, %s384
      %p398 = scmp.eq.s32.totalorder %s83, 3
      %p399 = por %p397, %p398
      %p401 = scmp.ne.s32.totalorder %s384, %s400
      %p402 = scmp.eq.s32.totalorder %s83, 0
      %p403 = por %p401, %p402
      %s404 = ssub.s32 %s77, %s84
      %p405 = scmp.eq.s32.totalorder %s404, 0
      %s407 = sadd.s32 %s406, 1
      %s408 = scalar_select %p405, %s406, %s407
      %p411 = pneg %p405
      %p412 = scmp.eq.s32.totalorder %s77, 3
      %p413 = por %p411, %p412
      %p414 = scmp.ne.s32.totalorder %s406, %s409
      %p415 = scmp.eq.s32.totalorder %s77, 0
      %p416 = por %p414, %p415
      %p417 = scmp.ne.s32.totalorder %s406, %s409
      %p418 = scmp.eq.s32.totalorder %s82, 3
      %p419 = por %p417, %p418
      %p420 = scmp.ne.s32.totalorder %s409, %s410
      %p421 = scmp.eq.s32.totalorder %s82, 0
      %p422 = por %p420, %p421
      %p423 = scmp.ne.s32.totalorder %s409, %s410
      %p424 = scmp.eq.s32.totalorder %s83, 3
      %p425 = por %p423, %p424
      %p427 = scmp.ne.s32.totalorder %s410, %s426
      %p428 = scmp.eq.s32.totalorder %s83, 0
      %p429 = por %p427, %p428
      %s430 = ssub.s32 %s77, %s84
      %p431 = scmp.eq.s32.totalorder %s430, 0
      %s433 = sadd.s32 %s432, 1
      %s434 = scalar_select %p431, %s432, %s433
      %p437 = pneg %p431
      %p438 = scmp.eq.s32.totalorder %s77, 3
      %p439 = por %p437, %p438
      %p440 = scmp.ne.s32.totalorder %s432, %s435
      %p441 = scmp.eq.s32.totalorder %s77, 0
      %p442 = por %p440, %p441
      %p443 = scmp.ne.s32.totalorder %s432, %s435
      %p444 = scmp.eq.s32.totalorder %s82, 3
      %p445 = por %p443, %p444
      %p446 = scmp.ne.s32.totalorder %s435, %s436
      %p447 = scmp.eq.s32.totalorder %s82, 0
      %p448 = por %p446, %p447
      %p449 = scmp.ne.s32.totalorder %s435, %s436
      %p450 = scmp.eq.s32.totalorder %s83, 3
      %p451 = por %p449, %p450
      %p453 = scmp.ne.s32.totalorder %s436, %s452
      %p454 = scmp.eq.s32.totalorder %s83, 0
      %p455 = por %p453, %p454
      %s456 = ssub.s32 %s77, %s84
      %p457 = scmp.eq.s32.totalorder %s456, 0
      %s459 = sadd.s32 %s458, 1
      %s460 = scalar_select %p457, %s458, %s459
      %p463 = pneg %p457
      %p464 = scmp.eq.s32.totalorder %s77, 3
      %p465 = por %p463, %p464
      %p466 = scmp.ne.s32.totalorder %s458, %s461
      %p467 = scmp.eq.s32.totalorder %s77, 0
      %p468 = por %p466, %p467
      %p469 = scmp.ne.s32.totalorder %s458, %s461
      %p470 = scmp.eq.s32.totalorder %s82, 3
      %p471 = por %p469, %p470
      %p472 = scmp.ne.s32.totalorder %s461, %s462
      %p473 = scmp.eq.s32.totalorder %s82, 0
      %p474 = por %p472, %p473
      %p475 = scmp.ne.s32.totalorder %s461, %s462
      %p476 = scmp.eq.s32.totalorder %s83, 3
      %p477 = por %p475, %p476
      %p479 = scmp.ne.s32.totalorder %s462, %s478
      %p480 = scmp.eq.s32.totalorder %s83, 0
      %p481 = por %p479, %p480
      %s482 = ssub.s32 %s77, %s84
      %p483 = scmp.eq.s32.totalorder %s482, 0
      %s485 = sadd.s32 %s484, 1
      %s486 = scalar_select %p483, %s484, %s485
      %p489 = pneg %p483
      %p490 = scmp.eq.s32.totalorder %s77, 3
      %p491 = por %p489, %p490
      %p492 = scmp.ne.s32.totalorder %s484, %s487
      %p493 = scmp.eq.s32.totalorder %s77, 0
      %p494 = por %p492, %p493
      %p495 = scmp.ne.s32.totalorder %s484, %s487
      %p496 = scmp.eq.s32.totalorder %s82, 3
      %p497 = por %p495, %p496
      %p498 = scmp.ne.s32.totalorder %s487, %s488
      %p499 = scmp.eq.s32.totalorder %s82, 0
      %p500 = por %p498, %p499
      %p501 = scmp.ne.s32.totalorder %s487, %s488
      %p502 = scmp.eq.s32.totalorder %s83, 3
      %p503 = por %p501, %p502
      %p505 = scmp.ne.s32.totalorder %s488, %s504
      %p506 = scmp.eq.s32.totalorder %s83, 0
      %p507 = por %p505, %p506
      %s508 = ssub.s32 %s77, %s84
      %p509 = scmp.eq.s32.totalorder %s508, 0
      %s511 = sadd.s32 %s510, 1
      %s512 = scalar_select %p509, %s510, %s511
      %p515 = pneg %p509
      %p516 = scmp.eq.s32.totalorder %s77, 3
      %p517 = por %p515, %p516
      %p518 = scmp.ne.s32.totalorder %s510, %s513
      %p519 = scmp.eq.s32.totalorder %s77, 0
      %p520 = por %p518, %p519
      %p521 = scmp.ne.s32.totalorder %s510, %s513
      %p522 = scmp.eq.s32.totalorder %s82, 3
      %p523 = por %p521, %p522
      %p524 = scmp.ne.s32.totalorder %s513, %s514
      %p525 = scmp.eq.s32.totalorder %s82, 0
      %p526 = por %p524, %p525
      %p527 = scmp.ne.s32.totalorder %s513, %s514
      %p528 = scmp.eq.s32.totalorder %s83, 3
      %p529 = por %p527, %p528
      %p531 = scmp.ne.s32.totalorder %s514, %s530
      %p532 = scmp.eq.s32.totalorder %s83, 0
      %p533 = por %p531, %p532
      %s534 = ssub.s32 %s77, %s84
      %p535 = scmp.eq.s32.totalorder %s534, 0
      %s537 = sadd.s32 %s536, 1
      %s538 = scalar_select %p535, %s536, %s537
      %p541 = pneg %p535
      %p542 = scmp.eq.s32.totalorder %s77, 3
      %p543 = por %p541, %p542
      %p544 = scmp.ne.s32.totalorder %s536, %s539
      %p545 = scmp.eq.s32.totalorder %s77, 0
      %p546 = por %p544, %p545
      %p547 = scmp.ne.s32.totalorder %s536, %s539
      %p548 = scmp.eq.s32.totalorder %s82, 3
      %p549 = por %p547, %p548
      %p550 = scmp.ne.s32.totalorder %s539, %s540
      %p551 = scmp.eq.s32.totalorder %s82, 0
      %p552 = por %p550, %p551
      %p553 = scmp.ne.s32.totalorder %s539, %s540
      %p554 = scmp.eq.s32.totalorder %s83, 3
      %p555 = por %p553, %p554
      %p557 = scmp.ne.s32.totalorder %s540, %s556
      %p558 = scmp.eq.s32.totalorder %s83, 0
      %p559 = por %p557, %p558
      %s560 = ssub.s32 %s77, %s84
      %p561 = scmp.eq.s32.totalorder %s560, 0
      %s563 = sadd.s32 %s562, 1
      %s564 = scalar_select %p561, %s562, %s563
      %p567 = pneg %p561
      %p568 = scmp.eq.s32.totalorder %s77, 3
      %p569 = por %p567, %p568
      %p570 = scmp.ne.s32.totalorder %s562, %s565
      %p571 = scmp.eq.s32.totalorder %s77, 0
      %p572 = por %p570, %p571
      %p573 = scmp.ne.s32.totalorder %s562, %s565
      %p574 = scmp.eq.s32.totalorder %s82, 3
      %p575 = por %p573, %p574
      %p576 = scmp.ne.s32.totalorder %s565, %s566
      %p577 = scmp.eq.s32.totalorder %s82, 0
      %p578 = por %p576, %p577
      %p579 = scmp.ne.s32.totalorder %s565, %s566
      %p580 = scmp.eq.s32.totalorder %s83, 3
      %p581 = por %p579, %p580
      %p583 = scmp.ne.s32.totalorder %s566, %s582
      %p584 = scmp.eq.s32.totalorder %s83, 0
      %p585 = por %p583, %p584
      %s586 = ssub.s32 %s77, %s84
      %p587 = scmp.eq.s32.totalorder %s586, 0
      %s589 = sadd.s32 %s588, 1
      %s590 = scalar_select %p587, %s588, %s589
      %p593 = pneg %p587
      %p594 = scmp.eq.s32.totalorder %s77, 3
      %p595 = por %p593, %p594
      %p596 = scmp.ne.s32.totalorder %s588, %s591
      %p597 = scmp.eq.s32.totalorder %s77, 0
      %p598 = por %p596, %p597
      %p599 = scmp.ne.s32.totalorder %s588, %s591
      %p600 = scmp.eq.s32.totalorder %s82, 3
      %p601 = por %p599, %p600
      %p602 = scmp.ne.s32.totalorder %s591, %s592
      %p603 = scmp.eq.s32.totalorder %s82, 0
      %p604 = por %p602, %p603
      %p605 = scmp.ne.s32.totalorder %s591, %s592
      %p606 = scmp.eq.s32.totalorder %s83, 3
      %p607 = por %p605, %p606
      %p609 = scmp.ne.s32.totalorder %s592, %s608
      %p610 = scmp.eq.s32.totalorder %s83, 0
      %p611 = por %p609, %p610
      %s612 = ssub.s32 %s77, %s84
      %p613 = scmp.eq.s32.totalorder %s612, 0
      %s615 = sadd.s32 %s614, 1
      %s616 = scalar_select %p613, %s614, %s615
      %p619 = pneg %p613
      %p620 = scmp.eq.s32.totalorder %s77, 3
      %p621 = por %p619, %p620
      %p622 = scmp.ne.s32.totalorder %s614, %s617
      %p623 = scmp.eq.s32.totalorder %s77, 0
      %p624 = por %p622, %p623
      %p625 = scmp.ne.s32.totalorder %s614, %s617
      %p626 = scmp.eq.s32.totalorder %s82, 3
      %p627 = por %p625, %p626
      %p628 = scmp.ne.s32.totalorder %s617, %s618
      %p629 = scmp.eq.s32.totalorder %s82, 0
      %p630 = por %p628, %p629
      %p631 = scmp.ne.s32.totalorder %s617, %s618
      %p632 = scmp.eq.s32.totalorder %s83, 3
      %p633 = por %p631, %p632
      %p635 = scmp.ne.s32.totalorder %s618, %s634
      %p636 = scmp.eq.s32.totalorder %s83, 0
      %p637 = por %p635, %p636
      %s638 = ssub.s32 %s77, %s84
      %p639 = scmp.eq.s32.totalorder %s638, 0
      %s641 = sadd.s32 %s640, 1
      %s642 = scalar_select %p639, %s640, %s641
      %p645 = pneg %p639
      %p646 = scmp.eq.s32.totalorder %s77, 3
      %p647 = por %p645, %p646
      %p648 = scmp.ne.s32.totalorder %s640, %s643
      %p649 = scmp.eq.s32.totalorder %s77, 0
      %p650 = por %p648, %p649
      %p651 = scmp.ne.s32.totalorder %s640, %s643
      %p652 = scmp.eq.s32.totalorder %s82, 3
      %p653 = por %p651, %p652
      %p654 = scmp.ne.s32.totalorder %s643, %s644
      %p655 = scmp.eq.s32.totalorder %s82, 0
      %p656 = por %p654, %p655
      %p657 = scmp.ne.s32.totalorder %s643, %s644
      %p658 = scmp.eq.s32.totalorder %s83, 3
      %p659 = por %p657, %p658
      %p661 = scmp.ne.s32.totalorder %s644, %s660
      %p662 = scmp.eq.s32.totalorder %s83, 0
      %p663 = por %p661, %p662
      %s664 = ssub.s32 %s77, %s84
      %p665 = scmp.eq.s32.totalorder %s664, 0
      %s667 = sadd.s32 %s666, 1
      %s668 = scalar_select %p665, %s666, %s667
      %p671 = pneg %p665
      %p672 = scmp.eq.s32.totalorder %s77, 3
      %p673 = por %p671, %p672
      %p674 = scmp.ne.s32.totalorder %s666, %s669
      %p675 = scmp.eq.s32.totalorder %s77, 0
      %p676 = por %p674, %p675
      %p677 = scmp.ne.s32.totalorder %s666, %s669
      %p678 = scmp.eq.s32.totalorder %s82, 3
      %p679 = por %p677, %p678
      %p680 = scmp.ne.s32.totalorder %s669, %s670
      %p681 = scmp.eq.s32.totalorder %s82, 0
      %p682 = por %p680, %p681
      %p683 = scmp.ne.s32.totalorder %s669, %s670
      %p684 = scmp.eq.s32.totalorder %s83, 3
      %p685 = por %p683, %p684
      %p687 = scmp.ne.s32.totalorder %s670, %s686
      %p688 = scmp.eq.s32.totalorder %s83, 0
      %p689 = por %p687, %p688
      %s690 = ssub.s32 %s77, %s84
      %p691 = scmp.eq.s32.totalorder %s690, 0
      %s693 = sadd.s32 %s692, 1
      %s694 = scalar_select %p691, %s692, %s693
      %p697 = pneg %p691
      %p698 = scmp.eq.s32.totalorder %s77, 3
      %p699 = por %p697, %p698
      %p700 = scmp.ne.s32.totalorder %s692, %s695
      %p701 = scmp.eq.s32.totalorder %s77, 0
      %p702 = por %p700, %p701
      %p703 = scmp.ne.s32.totalorder %s692, %s695
      %p704 = scmp.eq.s32.totalorder %s82, 3
      %p705 = por %p703, %p704
      %p706 = scmp.ne.s32.totalorder %s695, %s696
      %p707 = scmp.eq.s32.totalorder %s82, 0
      %p708 = por %p706, %p707
      %p709 = scmp.ne.s32.totalorder %s695, %s696
      %p710 = scmp.eq.s32.totalorder %s83, 3
      %p711 = por %p709, %p710
      %p713 = scmp.ne.s32.totalorder %s696, %s712
      %p714 = scmp.eq.s32.totalorder %s83, 0
      %p715 = por %p713, %p714
      %s716 = ssub.s32 %s77, %s84
      %p717 = scmp.eq.s32.totalorder %s716, 0
      %s719 = sadd.s32 %s718, 1
      %s720 = scalar_select %p717, %s718, %s719
      %p723 = pneg %p717
      %p724 = scmp.eq.s32.totalorder %s77, 3
      %p725 = por %p723, %p724
      %p726 = scmp.ne.s32.totalorder %s718, %s721
      %p727 = scmp.eq.s32.totalorder %s77, 0
      %p728 = por %p726, %p727
      %p729 = scmp.ne.s32.totalorder %s718, %s721
      %p730 = scmp.eq.s32.totalorder %s82, 3
      %p731 = por %p729, %p730
      %p732 = scmp.ne.s32.totalorder %s721, %s722
      %p733 = scmp.eq.s32.totalorder %s82, 0
      %p734 = por %p732, %p733
      %p735 = scmp.ne.s32.totalorder %s721, %s722
      %p736 = scmp.eq.s32.totalorder %s83, 3
      %p737 = por %p735, %p736
      %p739 = scmp.ne.s32.totalorder %s722, %s738
      %p740 = scmp.eq.s32.totalorder %s83, 0
      %p741 = por %p739, %p740
      %s742 = ssub.s32 %s77, %s84
      %p743 = scmp.eq.s32.totalorder %s742, 0
      %s745 = sadd.s32 %s744, 1
      %s746 = scalar_select %p743, %s744, %s745
      %p749 = pneg %p743
      %p750 = scmp.eq.s32.totalorder %s77, 3
      %p751 = por %p749, %p750
      %p752 = scmp.ne.s32.totalorder %s744, %s747
      %p753 = scmp.eq.s32.totalorder %s77, 0
      %p754 = por %p752, %p753
      %p755 = scmp.ne.s32.totalorder %s744, %s747
      %p756 = scmp.eq.s32.totalorder %s82, 3
      %p757 = por %p755, %p756
      %p758 = scmp.ne.s32.totalorder %s747, %s748
      %p759 = scmp.eq.s32.totalorder %s82, 0
      %p760 = por %p758, %p759
      %p761 = scmp.ne.s32.totalorder %s747, %s748
      %p762 = scmp.eq.s32.totalorder %s83, 3
      %p763 = por %p761, %p762
      %p765 = scmp.ne.s32.totalorder %s748, %s764
      %p766 = scmp.eq.s32.totalorder %s83, 0
      %p767 = por %p765, %p766
      %s769 = sadd.s32 %s768, 1
      %p772 = scmp.eq.s32.totalorder %s77, 3
      %p773 = scmp.ne.s32.totalorder %s768, %s770
      %p774 = scmp.eq.s32.totalorder %s77, 0
      %p775 = por %p773, %p774
      %p776 = scmp.ne.s32.totalorder %s768, %s770
      %p777 = scmp.eq.s32.totalorder %s82, 3
      %p778 = por %p776, %p777
      %p779 = scmp.ne.s32.totalorder %s770, %s771
      %p780 = scmp.eq.s32.totalorder %s82, 0
      %p781 = por %p779, %p780
      %p782 = scmp.ne.s32.totalorder %s770, %s771
      %p783 = scmp.eq.s32.totalorder %s83, 3
      %p784 = por %p782, %p783
      %p786 = scmp.ne.s32.totalorder %s771, %s785
      %p787 = scmp.eq.s32.totalorder %s83, 0
      %p788 = por %p786, %p787
      %s790 = sadd.s32 %s789, 1
      %p793 = scmp.eq.s32.totalorder %s77, 3
      %p794 = scmp.ne.s32.totalorder %s789, %s791
      %p795 = scmp.eq.s32.totalorder %s77, 0
      %p796 = por %p794, %p795
      %p797 = scmp.ne.s32.totalorder %s789, %s791
      %p798 = scmp.eq.s32.totalorder %s82, 3
      %p799 = por %p797, %p798
      %p800 = scmp.ne.s32.totalorder %s791, %s792
      %p801 = scmp.eq.s32.totalorder %s82, 0
      %p802 = por %p800, %p801
      %p803 = scmp.ne.s32.totalorder %s791, %s792
      %p804 = scmp.eq.s32.totalorder %s83, 3
      %p805 = por %p803, %p804
      %p807 = scmp.ne.s32.totalorder %s792, %s806
      %p808 = scmp.eq.s32.totalorder %s83, 0
      %p809 = por %p807, %p808
      %s811 = sadd.s32 %s810, 1
      %p814 = scmp.eq.s32.totalorder %s77, 3
      %p815 = scmp.ne.s32.totalorder %s810, %s812
      %p816 = scmp.eq.s32.totalorder %s77, 0
      %p817 = por %p815, %p816
      %p818 = scmp.ne.s32.totalorder %s810, %s812
      %p819 = scmp.eq.s32.totalorder %s82, 3
      %p820 = por %p818, %p819
      %p821 = scmp.ne.s32.totalorder %s812, %s813
      %p822 = scmp.eq.s32.totalorder %s82, 0
      %p823 = por %p821, %p822
      %p824 = scmp.ne.s32.totalorder %s812, %s813
      %p825 = scmp.eq.s32.totalorder %s83, 3
      %p826 = por %p824, %p825
      %p828 = scmp.ne.s32.totalorder %s813, %s827
      %p829 = scmp.eq.s32.totalorder %s83, 0
      %p830 = por %p828, %p829
      %s832 = sadd.s32 %s831, 1
      %p835 = scmp.eq.s32.totalorder %s77, 3
      %p836 = scmp.ne.s32.totalorder %s831, %s833
      %p837 = scmp.eq.s32.totalorder %s77, 0
      %p838 = por %p836, %p837
      %p839 = scmp.ne.s32.totalorder %s831, %s833
      %p840 = scmp.eq.s32.totalorder %s82, 3
      %p841 = por %p839, %p840
      %p842 = scmp.ne.s32.totalorder %s833, %s834
      %p843 = scmp.eq.s32.totalorder %s82, 0
      %p844 = por %p842, %p843
      %p845 = scmp.ne.s32.totalorder %s833, %s834
      %p846 = scmp.eq.s32.totalorder %s83, 3
      %p847 = por %p845, %p846
      %p849 = scmp.ne.s32.totalorder %s834, %s848
      %p850 = scmp.eq.s32.totalorder %s83, 0
      %p851 = por %p849, %p850
      %s853 = sadd.s32 %s852, 1
      %p856 = scmp.eq.s32.totalorder %s77, 3
      %p857 = scmp.ne.s32.totalorder %s852, %s854
      %p858 = scmp.eq.s32.totalorder %s77, 0
      %p859 = por %p857, %p858
      %p860 = scmp.ne.s32.totalorder %s852, %s854
      %p861 = scmp.eq.s32.totalorder %s82, 3
      %p862 = por %p860, %p861
      %p863 = scmp.ne.s32.totalorder %s854, %s855
      %p864 = scmp.eq.s32.totalorder %s82, 0
      %p865 = por %p863, %p864
      %p866 = scmp.ne.s32.totalorder %s854, %s855
      %p867 = scmp.eq.s32.totalorder %s83, 3
      %p868 = por %p866, %p867
      %p870 = scmp.ne.s32.totalorder %s855, %s869
      %p871 = scmp.eq.s32.totalorder %s83, 0
      %p872 = por %p870, %p871
      %p873 = scmp.le.s32.totalorder 1, %s77
      %p874 = scmp.lt.s32.totalorder %s77, 5
      %p875 = pnand %p873, %p874
      %p876 = pneg %p875
      // Predicated region
      $region9: #{tpu_custom_call.1} parent=5 // pred_check
        _
      $region10: #{tpu_custom_call.1} parent=5 // pred_check_branch
        %878 = sbr.rel (%p875) target = $region12
      $region11: #{tpu_custom_call.1} parent=5 // pred_region
        %s879 = ssub.s32 %s77, 1
        // Predicated region
        $region13: #{tpu_custom_call.1} parent=11 // pred_check
          %p880 = pneg %p98
        $region14: #{tpu_custom_call.1} parent=11 // pred_check_branch
          %882 = sbr.rel (%p880) target = $region16
        $region15: #{tpu_custom_call.1} parent=11 // pred_region
          %s884 = ssub.s32 64, 64
          %885 = vsyncadd [#allocation6], %s884
          %s887 = sshll.u32 [#allocation5], 4
          %s888 = int_to_ptr.vmem [resolvable:$true] %s887
          %890 = dma.hbm_to_vmem [thread:$0]  %s1, 64, %s888, [#allocation6]
        $region16: #{tpu_custom_call.1} parent=11 // pred_fallthru
          _
        // Predicated region
        $region17: #{tpu_custom_call.1} parent=11 // pred_check
          %p891 = pneg %p119
        $region18: #{tpu_custom_call.1} parent=11 // pred_check_branch
          %893 = sbr.rel (%p891) target = $region20
        $region19: #{tpu_custom_call.1} parent=11 // pred_region
          %s895 = ssub.s32 32, 32
          %896 = vsyncadd [#allocation9], %s895
          %s898 = sshll.u32 [#allocation8], 4
          %s899 = int_to_ptr.vmem [resolvable:$true] %s898
          %901 = dma.hbm_to_vmem [thread:$0]  %s3, 32, %s899, [#allocation9]
        $region20: #{tpu_custom_call.1} parent=11 // pred_fallthru
          _
        // Predicated region
        $region21: #{tpu_custom_call.1} parent=11 // pred_check
          %p902 = pneg %p140
        $region22: #{tpu_custom_call.1} parent=11 // pred_check_branch
          %904 = sbr.rel (%p902) target = $region24
        $region23: #{tpu_custom_call.1} parent=11 // pred_region
          %s906 = ssub.s32 32, 32
          %907 = vsyncadd [#allocation9], %s906
          %s909 = sshll.u32 [#allocation10], 4
          %s910 = int_to_ptr.vmem [resolvable:$true] %s909
          %912 = dma.hbm_to_vmem [thread:$0]  %s5, 32, %s910, [#allocation9]
        $region24: #{tpu_custom_call.1} parent=11 // pred_fallthru
          _
        // Predicated region
        $region25: #{tpu_custom_call.1} parent=11 // pred_check
          %p913 = pneg %p161
        $region26: #{tpu_custom_call.1} parent=11 // pred_check_branch
          %915 = sbr.rel (%p913) target = $region28
        $region27: #{tpu_custom_call.1} parent=11 // pred_region
          %s917 = ssub.s32 2048, 2048
          %918 = vsyncadd [#allocation12], %s917
          %s919 = sshll.u32 [#allocation11], 4
          %s920 = int_to_ptr.vmem [resolvable:$true] %s919
          %925 = dma.hbm_to_vmem [thread:$0]  %s7, 2048, %s920, [#allocation12], 64, 64, 4
        $region28: #{tpu_custom_call.1} parent=11 // pred_fallthru
          _
        // Predicated region
        $region29: #{tpu_custom_call.1} parent=11 // pred_check
          %p926 = pneg %p182
        $region30: #{tpu_custom_call.1} parent=11 // pred_check_branch
          %928 = sbr.rel (%p926) target = $region32
        $region31: #{tpu_custom_call.1} parent=11 // pred_region
          _
        $region32: #{tpu_custom_call.1} parent=11 // pred_fallthru
          _
        // Predicated region
        $region33: #{tpu_custom_call.1} parent=11 // pred_check
          %p929 = pneg %p203
        $region34: #{tpu_custom_call.1} parent=11 // pred_check_branch
          %931 = sbr.rel (%p929) target = $region36
        $region35: #{tpu_custom_call.1} parent=11 // pred_region
          %s933 = ssub.s32 512, 512
          %934 = vsyncadd [#allocation12], %s933
          %s935 = sshll.u32 [#allocation13], 4
          %s936 = int_to_ptr.vmem [resolvable:$true] %s935
          %941 = dma.hbm_to_vmem [thread:$0]  %s11, 512, %s936, [#allocation12], 64, 64, 4
        $region36: #{tpu_custom_call.1} parent=11 // pred_fallthru
          _
        // Predicated region
        $region37: #{tpu_custom_call.1} parent=11 // pred_check
          %p942 = pneg %p224
        $region38: #{tpu_custom_call.1} parent=11 // pred_check_branch
          %944 = sbr.rel (%p942) target = $region40
        $region39: #{tpu_custom_call.1} parent=11 // pred_region
          %s946 = ssub.s32 16, 16
          %947 = vsyncadd [#allocation15], %s946
          %s949 = sshll.u32 [#allocation14], 4
          %s950 = int_to_ptr.vmem [resolvable:$true] %s949
          %952 = dma.hbm_to_vmem [thread:$0]  %s13, 16, %s950, [#allocation15]
        $region40: #{tpu_custom_call.1} parent=11 // pred_fallthru
          _
        // Predicated region
        $region41: #{tpu_custom_call.1} parent=11 // pred_check
          %p953 = pneg %p245
        $region42: #{tpu_custom_call.1} parent=11 // pred_check_branch
          %955 = sbr.rel (%p953) target = $region44
        $region43: #{tpu_custom_call.1} parent=11 // pred_region
          %s957 = ssub.s32 1024, 1024
          %958 = vsyncadd [#allocation15], %s957
          %s959 = sshll.u32 [#allocation16], 4
          %s960 = int_to_ptr.vmem [resolvable:$true] %s959
          %965 = dma.hbm_to_vmem [thread:$0]  %s15, 1024, %s960, [#allocation15], 64, 64, 4
        $region44: #{tpu_custom_call.1} parent=11 // pred_fallthru
          _
        // Predicated region
        $region45: #{tpu_custom_call.1} parent=11 // pred_check
          %p966 = pneg %p266
        $region46: #{tpu_custom_call.1} parent=11 // pred_check_branch
          %968 = sbr.rel (%p966) target = $region48
        $region47: #{tpu_custom_call.1} parent=11 // pred_region
          %s970 = ssub.s32 16, 16
          %971 = vsyncadd [#allocation18], %s970
          %s973 = sshll.u32 [#allocation17], 4
          %s974 = int_to_ptr.vmem [resolvable:$true] %s973
          %976 = dma.hbm_to_vmem [thread:$0]  %s17, 16, %s974, [#allocation18]
        $region48: #{tpu_custom_call.1} parent=11 // pred_fallthru
          _
        // Predicated region
        $region49: #{tpu_custom_call.1} parent=11 // pred_check
          %p977 = pneg %p781
        $region50: #{tpu_custom_call.1} parent=11 // pred_check_branch
          %979 = sbr.rel (%p977) target = $region52
        $region51: #{tpu_custom_call.1} parent=11 // pred_region
          _
        $region52: #{tpu_custom_call.1} parent=11 // pred_fallthru
          _
        // Predicated region
        $region53: #{tpu_custom_call.1} parent=11 // pred_check
          %p980 = pneg %p802
        $region54: #{tpu_custom_call.1} parent=11 // pred_check_branch
          %982 = sbr.rel (%p980) target = $region56
        $region55: #{tpu_custom_call.1} parent=11 // pred_region
          _
        $region56: #{tpu_custom_call.1} parent=11 // pred_fallthru
          _
        // Predicated region
        $region57: #{tpu_custom_call.1} parent=11 // pred_check
          %p983 = pneg %p823
        $region58: #{tpu_custom_call.1} parent=11 // pred_check_branch
          %985 = sbr.rel (%p983) target = $region60
        $region59: #{tpu_custom_call.1} parent=11 // pred_region
          %s987 = ssub.s32 1024, 1024
          %988 = vsyncadd [#allocation9], %s987
          %s989 = sshll.u32 [#allocation29], 4
          %s990 = int_to_ptr.vmem [resolvable:$true] %s989
          %995 = dma.hbm_to_vmem [thread:$0]  %s61, 1024, %s990, [#allocation9], 64, 64, 4
        $region60: #{tpu_custom_call.1} parent=11 // pred_fallthru
          _
        // Predicated region
        $region61: #{tpu_custom_call.1} parent=11 // pred_check
          %p996 = pneg %p844
        $region62: #{tpu_custom_call.1} parent=11 // pred_check_branch
          %998 = sbr.rel (%p996) target = $region64
        $region63: #{tpu_custom_call.1} parent=11 // pred_region
          _
        $region64: #{tpu_custom_call.1} parent=11 // pred_fallthru
          _
      $region12: #{tpu_custom_call.1} parent=5 // pred_fallthru
        _
      %p999 = scmp.lt.s32.totalorder %s77, 4
      // Predicated region
      $region65: #{tpu_custom_call.1} parent=5 // pred_check
        %p1000 = pneg %p999
      $region66: #{tpu_custom_call.1} parent=5 // pred_check_branch
        %1002 = sbr.rel (%p1000) target = $region68
      $region67: #{tpu_custom_call.1} parent=5 // pred_region
        // Predicated region
        $region69: #{tpu_custom_call.1} parent=67 // pred_check
          %p1003 = pneg %p286
        $region70: #{tpu_custom_call.1} parent=67 // pred_check_branch
          %1005 = sbr.rel (%p1003) target = $region72
        $region71: #{tpu_custom_call.1} parent=67 // pred_region
          %s1006 = sand.u32 %s77, 1
          %s1007 = scalar_lea.sflag [#allocation6], %s1006
          %s1008 = sand.u32 %s276, 1
          %s1009 = smul.addr %s1008, 64
          %s1010 = scalar_lea.vmem [#allocation19], %s1009
          %s1012 = ssub.s32 1024, 1024
          %1013 = vsyncadd %s1007, %s1012
          %s1014 = smul.addr %s77, 16
          %s1015 = smul.addr %s1014, 64
          %s1016 = scalar_lea.hbm %s19, %s1015
          %s1017 = sshll.u32 %s1010, 4
          %s1018 = int_to_ptr.vmem [resolvable:$true] %s1017
          %1023 = dma.hbm_to_vmem [thread:$0]  %s1016, 1024, %s1018, %s1007, 64, 64, 4
        $region72: #{tpu_custom_call.1} parent=67 // pred_fallthru
          _
        // Predicated region
        $region73: #{tpu_custom_call.1} parent=67 // pred_check
          %p1024 = pneg %p312
        $region74: #{tpu_custom_call.1} parent=67 // pred_check_branch
          %1026 = sbr.rel (%p1024) target = $region76
        $region75: #{tpu_custom_call.1} parent=67 // pred_region
          %p1027 = scmp.lt.s32.totalorder %s77, 3
          %s1028 = scalar_select %p1027, %s77, 3
          %s1029 = scalar_lea.vmem %s21, %s1028
        $region76: #{tpu_custom_call.1} parent=67 // pred_fallthru
          _
        // Predicated region
        $region77: #{tpu_custom_call.1} parent=67 // pred_check
          %p1030 = pneg %p338
        $region78: #{tpu_custom_call.1} parent=67 // pred_check_branch
          %1032 = sbr.rel (%p1030) target = $region80
        $region79: #{tpu_custom_call.1} parent=67 // pred_region
          %s1033 = sand.u32 %s77, 1
          %s1034 = scalar_lea.sflag [#allocation6], %s1033
          %s1035 = sand.u32 %s328, 1
          %s1036 = smul.addr %s1035, 64
          %s1037 = scalar_lea.vmem [#allocation20], %s1036
          %s1039 = ssub.s32 1024, 1024
          %1040 = vsyncadd %s1034, %s1039
          %s1041 = smul.addr %s77, 16
          %s1042 = smul.addr %s1041, 64
          %s1043 = scalar_lea.hbm %s23, %s1042
          %s1044 = sshll.u32 %s1037, 4
          %s1045 = int_to_ptr.vmem [resolvable:$true] %s1044
          %1050 = dma.hbm_to_vmem [thread:$0]  %s1043, 1024, %s1045, %s1034, 64, 64, 4
        $region80: #{tpu_custom_call.1} parent=67 // pred_fallthru
          _
        // Predicated region
        $region81: #{tpu_custom_call.1} parent=67 // pred_check
          %p1051 = pneg %p364
        $region82: #{tpu_custom_call.1} parent=67 // pred_check_branch
          %1053 = sbr.rel (%p1051) target = $region84
        $region83: #{tpu_custom_call.1} parent=67 // pred_region
          %p1054 = scmp.lt.s32.totalorder %s77, 3
          %s1055 = scalar_select %p1054, %s77, 3
          %s1056 = scalar_lea.vmem %s25, %s1055
        $region84: #{tpu_custom_call.1} parent=67 // pred_fallthru
          _
        // Predicated region
        $region85: #{tpu_custom_call.1} parent=67 // pred_check
          %p1057 = pneg %p390
        $region86: #{tpu_custom_call.1} parent=67 // pred_check_branch
          %1059 = sbr.rel (%p1057) target = $region88
        $region87: #{tpu_custom_call.1} parent=67 // pred_region
          %p1060 = scmp.lt.s32.totalorder %s77, 3
          %s1061 = scalar_select %p1060, %s77, 3
          %s1062 = scalar_lea.vmem %s27, %s1061
        $region88: #{tpu_custom_call.1} parent=67 // pred_fallthru
          _
        // Predicated region
        $region89: #{tpu_custom_call.1} parent=67 // pred_check
          %p1063 = pneg %p416
        $region90: #{tpu_custom_call.1} parent=67 // pred_check_branch
          %1065 = sbr.rel (%p1063) target = $region92
        $region91: #{tpu_custom_call.1} parent=67 // pred_region
          %p1066 = scmp.lt.s32.totalorder %s77, 3
          %s1067 = scalar_select %p1066, %s77, 3
          %s1068 = scalar_lea.vmem %s29, %s1067
        $region92: #{tpu_custom_call.1} parent=67 // pred_fallthru
          _
        // Predicated region
        $region93: #{tpu_custom_call.1} parent=67 // pred_check
          %p1069 = pneg %p442
        $region94: #{tpu_custom_call.1} parent=67 // pred_check_branch
          %1071 = sbr.rel (%p1069) target = $region96
        $region95: #{tpu_custom_call.1} parent=67 // pred_region
          %p1072 = scmp.lt.s32.totalorder %s77, 3
          %s1073 = scalar_select %p1072, %s77, 3
          %s1074 = scalar_lea.vmem %s31, %s1073
        $region96: #{tpu_custom_call.1} parent=67 // pred_fallthru
          _
        // Predicated region
        $region97: #{tpu_custom_call.1} parent=67 // pred_check
          %p1075 = pneg %p468
        $region98: #{tpu_custom_call.1} parent=67 // pred_check_branch
          %1077 = sbr.rel (%p1075) target = $region100
        $region99: #{tpu_custom_call.1} parent=67 // pred_region
          %p1078 = scmp.lt.s32.totalorder %s77, 3
          %s1079 = scalar_select %p1078, %s77, 3
          %s1080 = scalar_lea.vmem %s33, %s1079
        $region100: #{tpu_custom_call.1} parent=67 // pred_fallthru
          _
        // Predicated region
        $region101: #{tpu_custom_call.1} parent=67 // pred_check
          %p1081 = pneg %p494
        $region102: #{tpu_custom_call.1} parent=67 // pred_check_branch
          %1083 = sbr.rel (%p1081) target = $region104
        $region103: #{tpu_custom_call.1} parent=67 // pred_region
          %s1084 = sand.u32 %s77, 1
          %s1085 = scalar_lea.sflag [#allocation6], %s1084
          %s1086 = sand.u32 %s484, 1
          %s1087 = smul.addr %s1086, 128
          %s1088 = scalar_lea.vmem [#allocation21], %s1087
          %s1090 = ssub.s32 2048, 2048
          %1091 = vsyncadd %s1085, %s1090
          %s1092 = smul.addr %s77, 32
          %s1093 = smul.addr %s1092, 64
          %s1094 = scalar_lea.hbm %s35, %s1093
          %s1095 = sshll.u32 %s1088, 4
          %s1096 = int_to_ptr.vmem [resolvable:$true] %s1095
          %1101 = dma.hbm_to_vmem [thread:$0]  %s1094, 2048, %s1096, %s1085, 128, 128, 8
        $region104: #{tpu_custom_call.1} parent=67 // pred_fallthru
          _
        // Predicated region
        $region105: #{tpu_custom_call.1} parent=67 // pred_check
          %p1102 = pneg %p520
        $region106: #{tpu_custom_call.1} parent=67 // pred_check_branch
          %1104 = sbr.rel (%p1102) target = $region108
        $region107: #{tpu_custom_call.1} parent=67 // pred_region
          %p1105 = scmp.lt.s32.totalorder %s77, 3
          %s1106 = scalar_select %p1105, %s77, 3
          %s1107 = smul.addr %s1106, 2
          %s1108 = scalar_lea.vmem %s37, %s1107
        $region108: #{tpu_custom_call.1} parent=67 // pred_fallthru
          _
        // Predicated region
        $region109: #{tpu_custom_call.1} parent=67 // pred_check
          %p1109 = pneg %p546
        $region110: #{tpu_custom_call.1} parent=67 // pred_check_branch
          %1111 = sbr.rel (%p1109) target = $region112
        $region111: #{tpu_custom_call.1} parent=67 // pred_region
          %s1112 = sand.u32 %s77, 1
          %s1113 = scalar_lea.sflag [#allocation6], %s1112
          %s1114 = sand.u32 %s536, 1
          %s1115 = smul.addr %s1114, 128
          %s1116 = scalar_lea.vmem [#allocation22], %s1115
          %s1118 = ssub.s32 2048, 2048
          %1119 = vsyncadd %s1113, %s1118
          %s1120 = smul.addr %s77, 32
          %s1121 = smul.addr %s1120, 64
          %s1122 = scalar_lea.hbm %s39, %s1121
          %s1123 = sshll.u32 %s1116, 4
          %s1124 = int_to_ptr.vmem [resolvable:$true] %s1123
          %1129 = dma.hbm_to_vmem [thread:$0]  %s1122, 2048, %s1124, %s1113, 64, 64, 4
        $region112: #{tpu_custom_call.1} parent=67 // pred_fallthru
          _
        // Predicated region
        $region113: #{tpu_custom_call.1} parent=67 // pred_check
          %p1130 = pneg %p572
        $region114: #{tpu_custom_call.1} parent=67 // pred_check_branch
          %1132 = sbr.rel (%p1130) target = $region116
        $region115: #{tpu_custom_call.1} parent=67 // pred_region
          %p1133 = scmp.lt.s32.totalorder %s77, 3
          %s1134 = scalar_select %p1133, %s77, 3
          %s1135 = scalar_lea.vmem %s41, %s1134
        $region116: #{tpu_custom_call.1} parent=67 // pred_fallthru
          _
        // Predicated region
        $region117: #{tpu_custom_call.1} parent=67 // pred_check
          %p1136 = pneg %p598
        $region118: #{tpu_custom_call.1} parent=67 // pred_check_branch
          %1138 = sbr.rel (%p1136) target = $region120
        $region119: #{tpu_custom_call.1} parent=67 // pred_region
          %p1139 = scmp.lt.s32.totalorder %s77, 3
          %s1140 = scalar_select %p1139, %s77, 3
          %s1141 = scalar_lea.vmem %s43, %s1140
        $region120: #{tpu_custom_call.1} parent=67 // pred_fallthru
          _
        // Predicated region
        $region121: #{tpu_custom_call.1} parent=67 // pred_check
          %p1142 = pneg %p624
        $region122: #{tpu_custom_call.1} parent=67 // pred_check_branch
          %1144 = sbr.rel (%p1142) target = $region124
        $region123: #{tpu_custom_call.1} parent=67 // pred_region
          %s1145 = sand.u32 %s77, 1
          %s1146 = scalar_lea.sflag [#allocation6], %s1145
          %s1147 = sand.u32 %s614, 1
          %s1148 = scalar_lea.vmem [#allocation23], %s1147
          %s1150 = ssub.s32 16, 16
          %1151 = vsyncadd %s1146, %s1150
          %s1152 = smul.addr %s77, 16
          %s1153 = scalar_lea.hbm %s45, %s1152
          %s1155 = sshll.u32 %s1148, 4
          %s1156 = int_to_ptr.vmem [resolvable:$true] %s1155
          %1158 = dma.hbm_to_vmem [thread:$0]  %s1153, 16, %s1156, %s1146
        $region124: #{tpu_custom_call.1} parent=67 // pred_fallthru
          _
        // Predicated region
        $region125: #{tpu_custom_call.1} parent=67 // pred_check
          %p1159 = pneg %p650
        $region126: #{tpu_custom_call.1} parent=67 // pred_check_branch
          %1161 = sbr.rel (%p1159) target = $region128
        $region127: #{tpu_custom_call.1} parent=67 // pred_region
          %s1162 = sand.u32 %s77, 1
          %s1163 = scalar_lea.sflag [#allocation6], %s1162
          %s1164 = sand.u32 %s640, 1
          %s1165 = scalar_lea.vmem [#allocation24], %s1164
          %s1167 = ssub.s32 16, 16
          %1168 = vsyncadd %s1163, %s1167
          %s1169 = smul.addr %s77, 16
          %s1170 = scalar_lea.hbm %s47, %s1169
          %s1172 = sshll.u32 %s1165, 4
          %s1173 = int_to_ptr.vmem [resolvable:$true] %s1172
          %1175 = dma.hbm_to_vmem [thread:$0]  %s1170, 16, %s1173, %s1163
        $region128: #{tpu_custom_call.1} parent=67 // pred_fallthru
          _
        // Predicated region
        $region129: #{tpu_custom_call.1} parent=67 // pred_check
          %p1176 = pneg %p676
        $region130: #{tpu_custom_call.1} parent=67 // pred_check_branch
          %1178 = sbr.rel (%p1176) target = $region132
        $region131: #{tpu_custom_call.1} parent=67 // pred_region
          %s1179 = sand.u32 %s77, 1
          %s1180 = scalar_lea.sflag [#allocation6], %s1179
          %s1181 = sand.u32 %s666, 1
          %s1182 = scalar_lea.vmem [#allocation25], %s1181
          %s1184 = ssub.s32 16, 16
          %1185 = vsyncadd %s1180, %s1184
          %s1186 = smul.addr %s77, 16
          %s1187 = scalar_lea.hbm %s49, %s1186
          %s1189 = sshll.u32 %s1182, 4
          %s1190 = int_to_ptr.vmem [resolvable:$true] %s1189
          %1192 = dma.hbm_to_vmem [thread:$0]  %s1187, 16, %s1190, %s1180
        $region132: #{tpu_custom_call.1} parent=67 // pred_fallthru
          _
        // Predicated region
        $region133: #{tpu_custom_call.1} parent=67 // pred_check
          %p1193 = pneg %p702
        $region134: #{tpu_custom_call.1} parent=67 // pred_check_branch
          %1195 = sbr.rel (%p1193) target = $region136
        $region135: #{tpu_custom_call.1} parent=67 // pred_region
          %s1196 = sand.u32 %s77, 1
          %s1197 = scalar_lea.sflag [#allocation6], %s1196
          %s1198 = sand.u32 %s692, 1
          %s1199 = smul.addr %s1198, 64
          %s1200 = scalar_lea.vmem [#allocation26], %s1199
          %s1202 = ssub.s32 1024, 1024
          %1203 = vsyncadd %s1197, %s1202
          %s1204 = smul.addr %s77, 16
          %s1205 = smul.addr %s1204, 64
          %s1206 = scalar_lea.hbm %s51, %s1205
          %s1207 = sshll.u32 %s1200, 4
          %s1208 = int_to_ptr.vmem [resolvable:$true] %s1207
          %1213 = dma.hbm_to_vmem [thread:$0]  %s1206, 1024, %s1208, %s1197, 64, 64, 4
        $region136: #{tpu_custom_call.1} parent=67 // pred_fallthru
          _
        // Predicated region
        $region137: #{tpu_custom_call.1} parent=67 // pred_check
          %p1214 = pneg %p728
        $region138: #{tpu_custom_call.1} parent=67 // pred_check_branch
          %1216 = sbr.rel (%p1214) target = $region140
        $region139: #{tpu_custom_call.1} parent=67 // pred_region
          %s1217 = sand.u32 %s77, 1
          %s1218 = scalar_lea.sflag [#allocation6], %s1217
          %s1219 = sand.u32 %s718, 1
          %s1220 = smul.addr %s1219, 64
          %s1221 = scalar_lea.vmem [#allocation27], %s1220
          %s1223 = ssub.s32 1024, 1024
          %1224 = vsyncadd %s1218, %s1223
          %s1225 = smul.addr %s77, 16
          %s1226 = smul.addr %s1225, 64
          %s1227 = scalar_lea.hbm %s53, %s1226
          %s1228 = sshll.u32 %s1221, 4
          %s1229 = int_to_ptr.vmem [resolvable:$true] %s1228
          %1234 = dma.hbm_to_vmem [thread:$0]  %s1227, 1024, %s1229, %s1218, 64, 64, 4
        $region140: #{tpu_custom_call.1} parent=67 // pred_fallthru
          _
        // Predicated region
        $region141: #{tpu_custom_call.1} parent=67 // pred_check
          %p1235 = pneg %p754
        $region142: #{tpu_custom_call.1} parent=67 // pred_check_branch
          %1237 = sbr.rel (%p1235) target = $region144
        $region143: #{tpu_custom_call.1} parent=67 // pred_region
          %s1238 = sand.u32 %s77, 1
          %s1239 = scalar_lea.sflag [#allocation6], %s1238
          %s1240 = sand.u32 %s744, 1
          %s1241 = scalar_lea.vmem [#allocation28], %s1240
          %s1243 = ssub.s32 16, 16
          %1244 = vsyncadd %s1239, %s1243
          %s1245 = smul.addr %s77, 16
          %s1246 = scalar_lea.hbm %s55, %s1245
          %s1248 = sshll.u32 %s1241, 4
          %s1249 = int_to_ptr.vmem [resolvable:$true] %s1248
          %1251 = dma.hbm_to_vmem [thread:$0]  %s1246, 16, %s1249, %s1239
        $region144: #{tpu_custom_call.1} parent=67 // pred_fallthru
          _
      $region68: #{tpu_custom_call.1} parent=5 // pred_fallthru
        _
      %p1252 = scmp.le.s32.totalorder 1, %s77
      %p1253 = scmp.lt.s32.totalorder %s77, 5
      %p1254 = pnand %p1252, %p1253
      %p1255 = pneg %p1254
      // Predicated region
      $region145: #{tpu_custom_call.1} parent=5 // pred_check
        _
      $region146: #{tpu_custom_call.1} parent=5 // pred_check_branch
        %1257 = sbr.rel (%p1254) target = $region148
      $region147: #{tpu_custom_call.1} parent=5 // pred_region
        %s1258 = ssub.s32 %s77, 1
        // Predicated region
        $region149: #{tpu_custom_call.1} parent=147 // pred_check
          %p1259 = pneg %p98
        $region150: #{tpu_custom_call.1} parent=147 // pred_check_branch
          %1261 = sbr.rel (%p1259) target = $region152
        $region151: #{tpu_custom_call.1} parent=147 // pred_region
          %1262 = dma.done [#allocation6], 64
        $region152: #{tpu_custom_call.1} parent=147 // pred_fallthru
          _
        // Predicated region
        $region153: #{tpu_custom_call.1} parent=147 // pred_check
          %p1263 = pneg %p119
        $region154: #{tpu_custom_call.1} parent=147 // pred_check_branch
          %1265 = sbr.rel (%p1263) target = $region156
        $region155: #{tpu_custom_call.1} parent=147 // pred_region
          %1266 = dma.done [#allocation9], 32
        $region156: #{tpu_custom_call.1} parent=147 // pred_fallthru
          _
        // Predicated region
        $region157: #{tpu_custom_call.1} parent=147 // pred_check
          %p1267 = pneg %p140
        $region158: #{tpu_custom_call.1} parent=147 // pred_check_branch
          %1269 = sbr.rel (%p1267) target = $region160
        $region159: #{tpu_custom_call.1} parent=147 // pred_region
          %1270 = dma.done [#allocation9], 32
        $region160: #{tpu_custom_call.1} parent=147 // pred_fallthru
          _
        // Predicated region
        $region161: #{tpu_custom_call.1} parent=147 // pred_check
          %p1271 = pneg %p161
        $region162: #{tpu_custom_call.1} parent=147 // pred_check_branch
          %1273 = sbr.rel (%p1271) target = $region164
        $region163: #{tpu_custom_call.1} parent=147 // pred_region
          %1274 = dma.done [#allocation12], 2048
        $region164: #{tpu_custom_call.1} parent=147 // pred_fallthru
          _
        // Predicated region
        $region165: #{tpu_custom_call.1} parent=147 // pred_check
          %p1275 = pneg %p203
        $region166: #{tpu_custom_call.1} parent=147 // pred_check_branch
          %1277 = sbr.rel (%p1275) target = $region168
        $region167: #{tpu_custom_call.1} parent=147 // pred_region
          %1278 = dma.done [#allocation12], 512
        $region168: #{tpu_custom_call.1} parent=147 // pred_fallthru
          _
        // Predicated region
        $region169: #{tpu_custom_call.1} parent=147 // pred_check
          %p1279 = pneg %p224
        $region170: #{tpu_custom_call.1} parent=147 // pred_check_branch
          %1281 = sbr.rel (%p1279) target = $region172
        $region171: #{tpu_custom_call.1} parent=147 // pred_region
          %1282 = dma.done [#allocation15], 16
        $region172: #{tpu_custom_call.1} parent=147 // pred_fallthru
          _
        // Predicated region
        $region173: #{tpu_custom_call.1} parent=147 // pred_check
          %p1283 = pneg %p245
        $region174: #{tpu_custom_call.1} parent=147 // pred_check_branch
          %1285 = sbr.rel (%p1283) target = $region176
        $region175: #{tpu_custom_call.1} parent=147 // pred_region
          %1286 = dma.done [#allocation15], 1024
        $region176: #{tpu_custom_call.1} parent=147 // pred_fallthru
          _
        // Predicated region
        $region177: #{tpu_custom_call.1} parent=147 // pred_check
          %p1287 = pneg %p266
        $region178: #{tpu_custom_call.1} parent=147 // pred_check_branch
          %1289 = sbr.rel (%p1287) target = $region180
        $region179: #{tpu_custom_call.1} parent=147 // pred_region
          %1290 = dma.done [#allocation18], 16
        $region180: #{tpu_custom_call.1} parent=147 // pred_fallthru
          _
        %s1291 = sand.u32 %s82, 1
        %s1292 = scalar_lea.sflag [#allocation6], %s1291
        %s1293 = sand.u32 %s279, 1
        %s1294 = smul.addr %s1293, 64
        %s1295 = scalar_lea.vmem [#allocation19], %s1294
        // Predicated region
        $region181: #{tpu_custom_call.1} parent=147 // pred_check
          %p1296 = pneg %p292
        $region182: #{tpu_custom_call.1} parent=147 // pred_check_branch
          %1298 = sbr.rel (%p1296) target = $region184
        $region183: #{tpu_custom_call.1} parent=147 // pred_region
          %1299 = dma.done %s1292, 1024
        $region184: #{tpu_custom_call.1} parent=147 // pred_fallthru
          _
        %s1300 = sand.u32 %s82, 1
        %s1301 = scalar_lea.sflag [#allocation6], %s1300
        %s1302 = sand.u32 %s331, 1
        %s1303 = smul.addr %s1302, 64
        %s1304 = scalar_lea.vmem [#allocation20], %s1303
        // Predicated region
        $region185: #{tpu_custom_call.1} parent=147 // pred_check
          %p1305 = pneg %p344
        $region186: #{tpu_custom_call.1} parent=147 // pred_check_branch
          %1307 = sbr.rel (%p1305) target = $region188
        $region187: #{tpu_custom_call.1} parent=147 // pred_region
          %1308 = dma.done %s1301, 1024
        $region188: #{tpu_custom_call.1} parent=147 // pred_fallthru
          _
        %s1309 = sand.u32 %s82, 1
        %s1310 = scalar_lea.sflag [#allocation6], %s1309
        %s1311 = sand.u32 %s487, 1
        %s1312 = smul.addr %s1311, 128
        %s1313 = scalar_lea.vmem [#allocation21], %s1312
        // Predicated region
        $region189: #{tpu_custom_call.1} parent=147 // pred_check
          %p1314 = pneg %p500
        $region190: #{tpu_custom_call.1} parent=147 // pred_check_branch
          %1316 = sbr.rel (%p1314) target = $region192
        $region191: #{tpu_custom_call.1} parent=147 // pred_region
          %1317 = dma.done %s1310, 2048
        $region192: #{tpu_custom_call.1} parent=147 // pred_fallthru
          _
        %s1318 = sand.u32 %s82, 1
        %s1319 = scalar_lea.sflag [#allocation6], %s1318
        %s1320 = sand.u32 %s539, 1
        %s1321 = smul.addr %s1320, 128
        %s1322 = scalar_lea.vmem [#allocation22], %s1321
        // Predicated region
        $region193: #{tpu_custom_call.1} parent=147 // pred_check
          %p1323 = pneg %p552
        $region194: #{tpu_custom_call.1} parent=147 // pred_check_branch
          %1325 = sbr.rel (%p1323) target = $region196
        $region195: #{tpu_custom_call.1} parent=147 // pred_region
          %1326 = dma.done %s1319, 2048
        $region196: #{tpu_custom_call.1} parent=147 // pred_fallthru
          _
        %s1327 = sand.u32 %s82, 1
        %s1328 = scalar_lea.sflag [#allocation6], %s1327
        %s1329 = sand.u32 %s617, 1
        %s1330 = scalar_lea.vmem [#allocation23], %s1329
        // Predicated region
        $region197: #{tpu_custom_call.1} parent=147 // pred_check
          %p1331 = pneg %p630
        $region198: #{tpu_custom_call.1} parent=147 // pred_check_branch
          %1333 = sbr.rel (%p1331) target = $region200
        $region199: #{tpu_custom_call.1} parent=147 // pred_region
          %1334 = dma.done %s1328, 16
        $region200: #{tpu_custom_call.1} parent=147 // pred_fallthru
          _
        %s1335 = sand.u32 %s82, 1
        %s1336 = scalar_lea.sflag [#allocation6], %s1335
        %s1337 = sand.u32 %s643, 1
        %s1338 = scalar_lea.vmem [#allocation24], %s1337
        // Predicated region
        $region201: #{tpu_custom_call.1} parent=147 // pred_check
          %p1339 = pneg %p656
        $region202: #{tpu_custom_call.1} parent=147 // pred_check_branch
          %1341 = sbr.rel (%p1339) target = $region204
        $region203: #{tpu_custom_call.1} parent=147 // pred_region
          %1342 = dma.done %s1336, 16
        $region204: #{tpu_custom_call.1} parent=147 // pred_fallthru
          _
        %s1343 = sand.u32 %s82, 1
        %s1344 = scalar_lea.sflag [#allocation6], %s1343
        %s1345 = sand.u32 %s669, 1
        %s1346 = scalar_lea.vmem [#allocation25], %s1345
        // Predicated region
        $region205: #{tpu_custom_call.1} parent=147 // pred_check
          %p1347 = pneg %p682
        $region206: #{tpu_custom_call.1} parent=147 // pred_check_branch
          %1349 = sbr.rel (%p1347) target = $region208
        $region207: #{tpu_custom_call.1} parent=147 // pred_region
          %1350 = dma.done %s1344, 16
        $region208: #{tpu_custom_call.1} parent=147 // pred_fallthru
          _
        %s1351 = sand.u32 %s82, 1
        %s1352 = scalar_lea.sflag [#allocation6], %s1351
        %s1353 = sand.u32 %s695, 1
        %s1354 = smul.addr %s1353, 64
        %s1355 = scalar_lea.vmem [#allocation26], %s1354
        // Predicated region
        $region209: #{tpu_custom_call.1} parent=147 // pred_check
          %p1356 = pneg %p708
        $region210: #{tpu_custom_call.1} parent=147 // pred_check_branch
          %1358 = sbr.rel (%p1356) target = $region212
        $region211: #{tpu_custom_call.1} parent=147 // pred_region
          %1359 = dma.done %s1352, 1024
        $region212: #{tpu_custom_call.1} parent=147 // pred_fallthru
          _
        %s1360 = sand.u32 %s82, 1
        %s1361 = scalar_lea.sflag [#allocation6], %s1360
        %s1362 = sand.u32 %s721, 1
        %s1363 = smul.addr %s1362, 64
        %s1364 = scalar_lea.vmem [#allocation27], %s1363
        // Predicated region
        $region213: #{tpu_custom_call.1} parent=147 // pred_check
          %p1365 = pneg %p734
        $region214: #{tpu_custom_call.1} parent=147 // pred_check_branch
          %1367 = sbr.rel (%p1365) target = $region216
        $region215: #{tpu_custom_call.1} parent=147 // pred_region
          %1368 = dma.done %s1361, 1024
        $region216: #{tpu_custom_call.1} parent=147 // pred_fallthru
          _
        %s1369 = sand.u32 %s82, 1
        %s1370 = scalar_lea.sflag [#allocation6], %s1369
        %s1371 = sand.u32 %s747, 1
        %s1372 = scalar_lea.vmem [#allocation28], %s1371
        // Predicated region
        $region217: #{tpu_custom_call.1} parent=147 // pred_check
          %p1373 = pneg %p760
        $region218: #{tpu_custom_call.1} parent=147 // pred_check_branch
          %1375 = sbr.rel (%p1373) target = $region220
        $region219: #{tpu_custom_call.1} parent=147 // pred_region
          %1376 = dma.done %s1370, 16
        $region220: #{tpu_custom_call.1} parent=147 // pred_fallthru
          _
        // Predicated region
        $region221: #{tpu_custom_call.1} parent=147 // pred_check
          %p1377 = pneg %p823
        $region222: #{tpu_custom_call.1} parent=147 // pred_check_branch
          %1379 = sbr.rel (%p1377) target = $region224
        $region223: #{tpu_custom_call.1} parent=147 // pred_region
          %1380 = dma.done [#allocation9], 1024
        $region224: #{tpu_custom_call.1} parent=147 // pred_fallthru
          _
        %p1381 = pneg %p98
        %p1382 = pneg %p95
        %p1383 = pneg %p119
        %p1384 = pneg %p116
        %p1385 = pneg %p140
        %p1386 = pneg %p137
        %p1387 = pneg %p161
        %p1388 = pneg %p158
        %p1389 = pneg %p182
        %p1390 = pneg %p179
        %p1391 = pneg %p203
        %p1392 = pneg %p200
        %p1393 = pneg %p224
        %p1394 = pneg %p221
        %p1395 = pneg %p245
        %p1396 = pneg %p242
        %p1397 = pneg %p266
        %p1398 = pneg %p263
        %s1399 = sand.u32 %s82, 1
        %s1400 = scalar_lea.sflag [#allocation6], %s1399
        %s1401 = sand.u32 %s279, 1
        %s1402 = smul.addr %s1401, 64
        %s1403 = scalar_lea.vmem [#allocation19], %s1402
        %p1404 = pneg %p292
        %p1405 = pneg %p289
        %p1406 = scmp.lt.s32.totalorder %s82, 3
        %s1407 = scalar_select %p1406, %s82, 3
        %s1408 = scalar_lea.vmem %s21, %s1407
        %p1409 = pneg %p318
        %p1410 = pneg %p315
        %s1411 = sand.u32 %s82, 1
        %s1412 = scalar_lea.sflag [#allocation6], %s1411
        %s1413 = sand.u32 %s331, 1
        %s1414 = smul.addr %s1413, 64
        %s1415 = scalar_lea.vmem [#allocation20], %s1414
        %p1416 = pneg %p344
        %p1417 = pneg %p341
        %p1418 = scmp.lt.s32.totalorder %s82, 3
        %s1419 = scalar_select %p1418, %s82, 3
        %s1420 = scalar_lea.vmem %s25, %s1419
        %p1421 = pneg %p370
        %p1422 = pneg %p367
        %p1423 = scmp.lt.s32.totalorder %s82, 3
        %s1424 = scalar_select %p1423, %s82, 3
        %s1425 = scalar_lea.vmem %s27, %s1424
        %p1426 = pneg %p396
        %p1427 = pneg %p393
        %p1428 = scmp.lt.s32.totalorder %s82, 3
        %s1429 = scalar_select %p1428, %s82, 3
        %s1430 = scalar_lea.vmem %s29, %s1429
        %p1431 = pneg %p422
        %p1432 = pneg %p419
        %p1433 = scmp.lt.s32.totalorder %s82, 3
        %s1434 = scalar_select %p1433, %s82, 3
        %s1435 = scalar_lea.vmem %s31, %s1434
        %p1436 = pneg %p448
        %p1437 = pneg %p445
        %p1438 = scmp.lt.s32.totalorder %s82, 3
        %s1439 = scalar_select %p1438, %s82, 3
        %s1440 = scalar_lea.vmem %s33, %s1439
        %p1441 = pneg %p474
        %p1442 = pneg %p471
        %s1443 = sand.u32 %s82, 1
        %s1444 = scalar_lea.sflag [#allocation6], %s1443
        %s1445 = sand.u32 %s487, 1
        %s1446 = smul.addr %s1445, 128
        %s1447 = scalar_lea.vmem [#allocation21], %s1446
        %p1448 = pneg %p500
        %p1449 = pneg %p497
        %p1450 = scmp.lt.s32.totalorder %s82, 3
        %s1451 = scalar_select %p1450, %s82, 3
        %s1452 = smul.addr %s1451, 2
        %s1453 = scalar_lea.vmem %s37, %s1452
        %p1454 = pneg %p526
        %p1455 = pneg %p523
        %s1456 = sand.u32 %s82, 1
        %s1457 = scalar_lea.sflag [#allocation6], %s1456
        %s1458 = sand.u32 %s539, 1
        %s1459 = smul.addr %s1458, 128
        %s1460 = scalar_lea.vmem [#allocation22], %s1459
        %p1461 = pneg %p552
        %p1462 = pneg %p549
        %p1463 = scmp.lt.s32.totalorder %s82, 3
        %s1464 = scalar_select %p1463, %s82, 3
        %s1465 = scalar_lea.vmem %s41, %s1464
        %p1466 = pneg %p578
        %p1467 = pneg %p575
        %p1468 = scmp.lt.s32.totalorder %s82, 3
        %s1469 = scalar_select %p1468, %s82, 3
        %s1470 = scalar_lea.vmem %s43, %s1469
        %p1471 = pneg %p604
        %p1472 = pneg %p601
        %s1473 = sand.u32 %s82, 1
        %s1474 = scalar_lea.sflag [#allocation6], %s1473
        %s1475 = sand.u32 %s617, 1
        %s1476 = scalar_lea.vmem [#allocation23], %s1475
        %p1477 = pneg %p630
        %p1478 = pneg %p627
        %s1479 = sand.u32 %s82, 1
        %s1480 = scalar_lea.sflag [#allocation6], %s1479
        %s1481 = sand.u32 %s643, 1
        %s1482 = scalar_lea.vmem [#allocation24], %s1481
        %p1483 = pneg %p656
        %p1484 = pneg %p653
        %s1485 = sand.u32 %s82, 1
        %s1486 = scalar_lea.sflag [#allocation6], %s1485
        %s1487 = sand.u32 %s669, 1
        %s1488 = scalar_lea.vmem [#allocation25], %s1487
        %p1489 = pneg %p682
        %p1490 = pneg %p679
        %s1491 = sand.u32 %s82, 1
        %s1492 = scalar_lea.sflag [#allocation6], %s1491
        %s1493 = sand.u32 %s695, 1
        %s1494 = smul.addr %s1493, 64
        %s1495 = scalar_lea.vmem [#allocation26], %s1494
        %p1496 = pneg %p708
        %p1497 = pneg %p705
        %s1498 = sand.u32 %s82, 1
        %s1499 = scalar_lea.sflag [#allocation6], %s1498
        %s1500 = sand.u32 %s721, 1
        %s1501 = smul.addr %s1500, 64
        %s1502 = scalar_lea.vmem [#allocation27], %s1501
        %p1503 = pneg %p734
        %p1504 = pneg %p731
        %s1505 = sand.u32 %s82, 1
        %s1506 = scalar_lea.sflag [#allocation6], %s1505
        %s1507 = sand.u32 %s747, 1
        %s1508 = scalar_lea.vmem [#allocation28], %s1507
        %p1509 = pneg %p760
        %p1510 = pneg %p757
        %p1511 = pneg %p781
        %p1512 = pneg %p778
        %p1513 = pneg %p802
        %p1514 = pneg %p799
        %p1515 = pneg %p823
        %p1516 = pneg %p820
        %p1517 = pneg %p844
        %p1518 = pneg %p841
        %p1519 = pneg %p865
        %p1520 = pneg %p862
        %p1521 = scmp.lt.s32.totalorder %s82, 3
        %s1522 = scalar_select %p1521, %s82, 3
        %s1523 = scalar_lea.vmem %s21, %s1522
        %p1524 = scmp.lt.s32.totalorder %s82, 3
        %s1525 = scalar_select %p1524, %s82, 3
        %s1526 = scalar_lea.vmem %s25, %s1525
        %p1527 = scmp.lt.s32.totalorder %s82, 3
        %s1528 = scalar_select %p1527, %s82, 3
        %s1529 = scalar_lea.vmem %s27, %s1528
        %p1530 = scmp.lt.s32.totalorder %s82, 3
        %s1531 = scalar_select %p1530, %s82, 3
        %s1532 = scalar_lea.vmem %s29, %s1531
        %p1533 = scmp.lt.s32.totalorder %s82, 3
        %s1534 = scalar_select %p1533, %s82, 3
        %s1535 = scalar_lea.vmem %s31, %s1534
        %p1536 = scmp.lt.s32.totalorder %s82, 3
        %s1537 = scalar_select %p1536, %s82, 3
        %s1538 = scalar_lea.vmem %s33, %s1537
        %p1539 = scmp.lt.s32.totalorder %s82, 3
        %s1540 = scalar_select %p1539, %s82, 3
        %s1541 = smul.addr %s1540, 2
        %s1542 = scalar_lea.vmem %s37, %s1541
        %p1543 = scmp.lt.s32.totalorder %s82, 3
        %s1544 = scalar_select %p1543, %s82, 3
        %s1545 = scalar_lea.vmem %s41, %s1544
        %p1546 = scmp.lt.s32.totalorder %s82, 3
        %s1547 = scalar_select %p1546, %s82, 3
        %s1548 = scalar_lea.vmem %s43, %s1547
        %p1550 = scmp.eq.s32.totalorder %s82, 0
        // Predicated region
        $region225: #{tpu_custom_call.1} parent=147 // pred_check
          %p1551 = pneg %p1550
        $region226: #{tpu_custom_call.1} parent=147 // pred_check_branch
          %1553 = sbr.rel (%p1551) target = $region228
        $region227: #{tpu_custom_call.1} parent=147 // pred_region
          %v1554 = vld [vmem:[#allocation5] sm:$0xf]
          %v1555 = vld [vmem:[#allocation11] sm:$0xf]
          %v1556 = vld [vmem:[#allocation11 + $0x4] sm:$0xf]
          %v1557 = vld [vmem:[#allocation11 + $0x8] sm:$0xf]
          %v1558 = vld [vmem:[#allocation11 + $0xc] sm:$0xf]
          %v1559 = vld [vmem:[#allocation11 + $0x10] sm:$0xf]
          %v1560 = vld [vmem:[#allocation11 + $0x14] sm:$0xf]
          %v1561 = vld [vmem:[#allocation11 + $0x18] sm:$0xf]
          %v1562 = vld [vmem:[#allocation11 + $0x1c] sm:$0xf]
          %v1563 = vld [vmem:[#allocation11 + $0x20] sm:$0xf]
          %v1564 = vld [vmem:[#allocation11 + $0x24] sm:$0xf]
          %v1565 = vld [vmem:[#allocation11 + $0x28] sm:$0xf]
          %v1566 = vld [vmem:[#allocation11 + $0x2c] sm:$0xf]
          %v1567 = vld [vmem:[#allocation11 + $0x30] sm:$0xf]
          %v1568 = vld [vmem:[#allocation11 + $0x34] sm:$0xf]
          %v1569 = vld [vmem:[#allocation11 + $0x38] sm:$0xf]
          %v1570 = vld [vmem:[#allocation11 + $0x3c] sm:$0xf]
          %v1571 = vld [vmem:[#allocation11 + $0x40] sm:$0xf]
          %v1572 = vld [vmem:[#allocation11 + $0x44] sm:$0xf]
          %v1573 = vld [vmem:[#allocation11 + $0x48] sm:$0xf]
          %v1574 = vld [vmem:[#allocation11 + $0x4c] sm:$0xf]
          %v1575 = vld [vmem:[#allocation11 + $0x50] sm:$0xf]
          %v1576 = vld [vmem:[#allocation11 + $0x54] sm:$0xf]
          %v1577 = vld [vmem:[#allocation11 + $0x58] sm:$0xf]
          %v1578 = vld [vmem:[#allocation11 + $0x5c] sm:$0xf]
          %v1579 = vld [vmem:[#allocation11 + $0x60] sm:$0xf]
          %v1580 = vld [vmem:[#allocation11 + $0x64] sm:$0xf]
          %v1581 = vld [vmem:[#allocation11 + $0x68] sm:$0xf]
          %v1582 = vld [vmem:[#allocation11 + $0x6c] sm:$0xf]
          %v1583 = vld [vmem:[#allocation11 + $0x70] sm:$0xf]
          %v1584 = vld [vmem:[#allocation11 + $0x74] sm:$0xf]
          %v1585 = vld [vmem:[#allocation11 + $0x78] sm:$0xf]
          %v1586 = vld [vmem:[#allocation11 + $0x7c] sm:$0xf]
          %v1589 = vunpack.c.l.s4 1983009808
          %v1590 = vunpack.c.0.s8 %v1589
          %v1591 = vlaneseq
          %v1592 = vshrl.u32 %v1591, 7
          %v1593 = vsub.s32 %v1590, %v1592
          %v1594 = vrot.slane %v1554, %v1593
          %v1595 = vcombine.high %v1594, %v1594
          %v1598 = vpack.c.bf16 %v1594, %v1594
          %v1599 = vpack.c.bf16 %v1595, %v1595
          %v1600 = vld [vmem:[%s9] sm:$0x1]
          %v1602 = vlaneseq
          %v1603 = vshrl.u32 %v1602, 7
          %v1604 = vsub.s32 0, %v1603
          %v1605 = vrot.slane %v1600, %v1604
          %v1639 = vunpack.c.l.b16 %v1555
          %v1640 = vunpack.c.l.b16 %v1556
          %v1641 = vunpack.c.l.b16 %v1557
          %v1642 = vunpack.c.l.b16 %v1558
          %v1643 = vunpack.c.l.b16 %v1559
          %v1644 = vunpack.c.l.b16 %v1560
          %v1645 = vunpack.c.l.b16 %v1561
          %v1646 = vunpack.c.l.b16 %v1562
          %v1647 = vunpack.c.l.b16 %v1563
          %v1648 = vunpack.c.l.b16 %v1564
          %v1649 = vunpack.c.l.b16 %v1565
          %v1650 = vunpack.c.l.b16 %v1566
          %v1651 = vunpack.c.l.b16 %v1567
          %v1652 = vunpack.c.l.b16 %v1568
          %v1653 = vunpack.c.l.b16 %v1569
          %v1654 = vunpack.c.l.b16 %v1570
          %v1655 = vunpack.c.l.b16 %v1571
          %v1656 = vunpack.c.l.b16 %v1572
          %v1657 = vunpack.c.l.b16 %v1573
          %v1658 = vunpack.c.l.b16 %v1574
          %v1659 = vunpack.c.l.b16 %v1575
          %v1660 = vunpack.c.l.b16 %v1576
          %v1661 = vunpack.c.l.b16 %v1577
          %v1662 = vunpack.c.l.b16 %v1578
          %v1663 = vunpack.c.l.b16 %v1579
          %v1664 = vunpack.c.l.b16 %v1580
          %v1665 = vunpack.c.l.b16 %v1581
          %v1666 = vunpack.c.l.b16 %v1582
          %v1667 = vunpack.c.l.b16 %v1583
          %v1668 = vunpack.c.l.b16 %v1584
          %v1669 = vunpack.c.l.b16 %v1585
          %v1670 = vunpack.c.l.b16 %v1586
          %v1671 = vpack.c.b16 %v1640, %v1639
          %v1672 = vpack.c.b16 %v1642, %v1641
          %v1673 = vpack.c.b16 %v1644, %v1643
          %v1674 = vpack.c.b16 %v1646, %v1645
          %v1675 = vpack.c.b16 %v1648, %v1647
          %v1676 = vpack.c.b16 %v1650, %v1649
          %v1677 = vpack.c.b16 %v1652, %v1651
          %v1678 = vpack.c.b16 %v1654, %v1653
          %v1679 = vpack.c.b16 %v1656, %v1655
          %v1680 = vpack.c.b16 %v1658, %v1657
          %v1681 = vpack.c.b16 %v1660, %v1659
          %v1682 = vpack.c.b16 %v1662, %v1661
          %v1683 = vpack.c.b16 %v1664, %v1663
          %v1684 = vpack.c.b16 %v1666, %v1665
          %v1685 = vpack.c.b16 %v1668, %v1667
          %v1686 = vpack.c.b16 %v1670, %v1669
          %1703 = vmatprep.subr.bf16.mxu0 0
          %1704 = vmatpush1.bf16.msra.mxu0 %v1671
          %1705 = vmatprep.subr.bf16.mxu0 0
          %1706 = vmatpush1.bf16.msra.mxu0 %v1672
          %1707 = vmatprep.subr.bf16.mxu0 0
          %1708 = vmatpush1.bf16.msra.mxu0 %v1673
          %1709 = vmatprep.subr.bf16.mxu0 0
          %1710 = vmatpush1.bf16.msra.mxu0 %v1674
          %1711 = vmatprep.subr.bf16.mxu0 0
          %1712 = vmatpush1.bf16.msra.mxu0 %v1675
          %1713 = vmatprep.subr.bf16.mxu0 0
          %1714 = vmatpush1.bf16.msra.mxu0 %v1676
          %1715 = vmatprep.subr.bf16.mxu0 0
          %1716 = vmatpush1.bf16.msra.mxu0 %v1677
          %1717 = vmatprep.subr.bf16.mxu0 0
          %1718 = vmatpush1.bf16.msra.mxu0 %v1678
          %1719 = vmatprep.subr.bf16.mxu0 0
          %1720 = vmatpush1.bf16.msra.mxu0 %v1679
          %1721 = vmatprep.subr.bf16.mxu0 0
          %1722 = vmatpush1.bf16.msra.mxu0 %v1680
          %1723 = vmatprep.subr.bf16.mxu0 0
          %1724 = vmatpush1.bf16.msra.mxu0 %v1681
          %1725 = vmatprep.subr.bf16.mxu0 0
          %1726 = vmatpush1.bf16.msra.mxu0 %v1682
          %1727 = vmatprep.subr.bf16.mxu0 0
          %1728 = vmatpush1.bf16.msra.mxu0 %v1683
          %1729 = vmatprep.subr.bf16.mxu0 0
          %1730 = vmatpush1.bf16.msra.mxu0 %v1684
          %1731 = vmatprep.subr.bf16.mxu0 0
          %1732 = vmatpush1.bf16.msra.mxu0 %v1685
          %1733 = vmatprep.subr.bf16.mxu0 0
          %1734 = vmatpush1.bf16.msra.mxu0 %v1686
          %1735 = vmatprep.mubr.bf16.mxu0 %v1599
          %1736 = vmatmul.mubr.bf16.gmra.mrb[0].mxu0 %v1598
          %v1737 = vpop.f32.mrb[0].mxu0
          %v1738 = vadd.f32 %v1605, %v1737
          %v1739 = vpop.f32.mrb[0].mxu0
          %v1740 = vpop.f32.mrb[0].mxu0
          %v1741 = vpop.f32.mrb[0].mxu0
          %1742 = vdwg.mxu0
          %v1743 = vmax.f32 %v1738, 0.0
          %1744 = vst [vmem:[#allocation2] sm:$0x3] %v1743
          %v1745 = vld [vmem:[#allocation8] sm:$0x3]
          %v1746 = vld [vmem:[#allocation13] sm:$0xf]
          %v1747 = vld [vmem:[#allocation13 + $0x4] sm:$0xf]
          %v1748 = vld [vmem:[#allocation13 + $0x8] sm:$0xf]
          %v1749 = vld [vmem:[#allocation13 + $0xc] sm:$0xf]
          %v1750 = vld [vmem:[#allocation13 + $0x10] sm:$0xf]
          %v1751 = vld [vmem:[#allocation13 + $0x14] sm:$0xf]
          %v1752 = vld [vmem:[#allocation13 + $0x18] sm:$0xf]
          %v1753 = vld [vmem:[#allocation13 + $0x1c] sm:$0xf]
          %v1754 = vpack.c.bf16 %v1745, %v1745
          %v1755 = vld [vmem:[#allocation14] sm:$0x1]
          %v1757 = vlaneseq
          %v1758 = vshrl.u32 %v1757, 7
          %v1759 = vsub.s32 0, %v1758
          %v1760 = vrot.slane %v1755, %v1759
          %v1770 = vunpack.c.l.b16 %v1746
          %v1771 = vunpack.c.l.b16 %v1747
          %v1772 = vunpack.c.l.b16 %v1748
          %v1773 = vunpack.c.l.b16 %v1749
          %v1774 = vunpack.c.l.b16 %v1750
          %v1775 = vunpack.c.l.b16 %v1751
          %v1776 = vunpack.c.l.b16 %v1752
          %v1777 = vunpack.c.l.b16 %v1753
          %v1778 = vpack.c.b16 %v1771, %v1770
          %v1779 = vpack.c.b16 %v1773, %v1772
          %v1780 = vpack.c.b16 %v1775, %v1774
          %v1781 = vpack.c.b16 %v1777, %v1776
          %vm1786 = vcmask 523264
          %v1788 = vsel %vm1786, %v1754, 0
          %1790 = vmatprep.subr.bf16.mxu0 0
          %1791 = vmatpush1.bf16.msra.mxu0 %v1778
          %1792 = vmatprep.subr.bf16.mxu0 0
          %1793 = vmatpush1.bf16.msra.mxu0 %v1779
          %1794 = vmatprep.subr.bf16.mxu0 0
          %1795 = vmatpush1.bf16.msra.mxu0 %v1780
          %1796 = vmatprep.subr.bf16.mxu0 0
          %1797 = vmatpush1.bf16.msra.mxu0 %v1781
          %1798 = vmatprep.subr.bf16.mxu0 0
          %1799 = vmatpush1.bf16.msra.mxu0 0
          %1800 = vmatprep.subr.bf16.mxu0 0
          %1801 = vmatpush1.bf16.msra.mxu0 0
          %1802 = vmatprep.subr.bf16.mxu0 0
          %1803 = vmatpush1.bf16.msra.mxu0 0
          %1804 = vmatprep.subr.bf16.mxu0 0
          %1805 = vmatpush1.bf16.msra.mxu0 0
          %1806 = vmatprep.subr.bf16.mxu0 0
          %1807 = vmatpush1.bf16.msra.mxu0 0
          %1808 = vmatprep.subr.bf16.mxu0 0
          %1809 = vmatpush1.bf16.msra.mxu0 0
          %1810 = vmatprep.subr.bf16.mxu0 0
          %1811 = vmatpush1.bf16.msra.mxu0 0
          %1812 = vmatprep.subr.bf16.mxu0 0
          %1813 = vmatpush1.bf16.msra.mxu0 0
          %1814 = vmatprep.subr.bf16.mxu0 0
          %1815 = vmatpush1.bf16.msra.mxu0 0
          %1816 = vmatprep.subr.bf16.mxu0 0
          %1817 = vmatpush1.bf16.msra.mxu0 0
          %1818 = vmatprep.subr.bf16.mxu0 0
          %1819 = vmatpush1.bf16.msra.mxu0 0
          %1820 = vmatprep.subr.bf16.mxu0 0
          %1821 = vmatpush1.bf16.msra.mxu0 0
          %1822 = vmatprep.mubr.bf16.mxu0 0
          %1823 = vmatmul.mubr.bf16.gmra.mrb[0].mxu0 %v1788
          %v1824 = vpop.f32.mrb[0].mxu0
          %v1825 = vadd.f32 %v1760, %v1824
          %v1826 = vpop.f32.mrb[0].mxu0
          %v1827 = vpop.f32.mrb[0].mxu0
          %v1828 = vpop.f32.mrb[0].mxu0
          %1829 = vdwg.mxu0
          %v1830 = vmax.f32 %v1825, 0.0
          %1831 = vst [vmem:[#allocation3] sm:$0x3] %v1830
          %v1832 = vld [vmem:[#allocation10] sm:$0x3]
          %v1833 = vld [vmem:[#allocation16] sm:$0xf]
          %v1834 = vld [vmem:[#allocation16 + $0x4] sm:$0xf]
          %v1835 = vld [vmem:[#allocation16 + $0x8] sm:$0xf]
          %v1836 = vld [vmem:[#allocation16 + $0xc] sm:$0xf]
          %v1837 = vld [vmem:[#allocation16 + $0x10] sm:$0xf]
          %v1838 = vld [vmem:[#allocation16 + $0x14] sm:$0xf]
          %v1839 = vld [vmem:[#allocation16 + $0x18] sm:$0xf]
          %v1840 = vld [vmem:[#allocation16 + $0x1c] sm:$0xf]
          %v1841 = vld [vmem:[#allocation16 + $0x20] sm:$0xf]
          %v1842 = vld [vmem:[#allocation16 + $0x24] sm:$0xf]
          %v1843 = vld [vmem:[#allocation16 + $0x28] sm:$0xf]
          %v1844 = vld [vmem:[#allocation16 + $0x2c] sm:$0xf]
          %v1845 = vld [vmem:[#allocation16 + $0x30] sm:$0xf]
          %v1846 = vld [vmem:[#allocation16 + $0x34] sm:$0xf]
          %v1847 = vld [vmem:[#allocation16 + $0x38] sm:$0xf]
          %v1848 = vld [vmem:[#allocation16 + $0x3c] sm:$0xf]
          %v1849 = vpack.c.bf16 %v1832, %v1832
          %v1850 = vld [vmem:[#allocation17] sm:$0x1]
          %v1852 = vlaneseq
          %v1853 = vshrl.u32 %v1852, 7
          %v1854 = vsub.s32 0, %v1853
          %v1855 = vrot.slane %v1850, %v1854
          %v1873 = vunpack.c.l.b16 %v1833
          %v1874 = vunpack.c.l.b16 %v1834
          %v1875 = vunpack.c.l.b16 %v1835
          %v1876 = vunpack.c.l.b16 %v1836
          %v1877 = vunpack.c.l.b16 %v1837
          %v1878 = vunpack.c.l.b16 %v1838
          %v1879 = vunpack.c.l.b16 %v1839
          %v1880 = vunpack.c.l.b16 %v1840
          %v1881 = vunpack.c.l.b16 %v1841
          %v1882 = vunpack.c.l.b16 %v1842
          %v1883 = vunpack.c.l.b16 %v1843
          %v1884 = vunpack.c.l.b16 %v1844
          %v1885 = vunpack.c.l.b16 %v1845
          %v1886 = vunpack.c.l.b16 %v1846
          %v1887 = vunpack.c.l.b16 %v1847
          %v1888 = vunpack.c.l.b16 %v1848
          %v1889 = vpack.c.b16 %v1874, %v1873
          %v1890 = vpack.c.b16 %v1876, %v1875
          %v1891 = vpack.c.b16 %v1878, %v1877
          %v1892 = vpack.c.b16 %v1880, %v1879
          %v1893 = vpack.c.b16 %v1882, %v1881
          %v1894 = vpack.c.b16 %v1884, %v1883
          %v1895 = vpack.c.b16 %v1886, %v1885
          %v1896 = vpack.c.b16 %v1888, %v1887
          %1905 = vmatprep.subr.bf16.mxu0 0
          %1906 = vmatpush1.bf16.msra.mxu0 %v1889
          %1907 = vmatprep.subr.bf16.mxu0 0
          %1908 = vmatpush1.bf16.msra.mxu0 %v1890
          %1909 = vmatprep.subr.bf16.mxu0 0
          %1910 = vmatpush1.bf16.msra.mxu0 %v1891
          %1911 = vmatprep.subr.bf16.mxu0 0
          %1912 = vmatpush1.bf16.msra.mxu0 %v1892
          %1913 = vmatprep.subr.bf16.mxu0 0
          %1914 = vmatpush1.bf16.msra.mxu0 %v1893
          %1915 = vmatprep.subr.bf16.mxu0 0
          %1916 = vmatpush1.bf16.msra.mxu0 %v1894
          %1917 = vmatprep.subr.bf16.mxu0 0
          %1918 = vmatpush1.bf16.msra.mxu0 %v1895
          %1919 = vmatprep.subr.bf16.mxu0 0
          %1920 = vmatpush1.bf16.msra.mxu0 %v1896
          %1921 = vmatprep.subr.bf16.mxu0 0
          %1922 = vmatpush1.bf16.msra.mxu0 0
          %1923 = vmatprep.subr.bf16.mxu0 0
          %1924 = vmatpush1.bf16.msra.mxu0 0
          %1925 = vmatprep.subr.bf16.mxu0 0
          %1926 = vmatpush1.bf16.msra.mxu0 0
          %1927 = vmatprep.subr.bf16.mxu0 0
          %1928 = vmatpush1.bf16.msra.mxu0 0
          %1929 = vmatprep.subr.bf16.mxu0 0
          %1930 = vmatpush1.bf16.msra.mxu0 0
          %1931 = vmatprep.subr.bf16.mxu0 0
          %1932 = vmatpush1.bf16.msra.mxu0 0
          %1933 = vmatprep.subr.bf16.mxu0 0
          %1934 = vmatpush1.bf16.msra.mxu0 0
          %1935 = vmatprep.subr.bf16.mxu0 0
          %1936 = vmatpush1.bf16.msra.mxu0 0
          %1937 = vmatprep.mubr.bf16.mxu0 0
          %1938 = vmatmul.mubr.bf16.gmra.mrb[0].mxu0 %v1849
          %v1939 = vpop.f32.mrb[0].mxu0
          %v1940 = vadd.f32 %v1855, %v1939
          %v1941 = vpop.f32.mrb[0].mxu0
          %v1942 = vpop.f32.mrb[0].mxu0
          %v1943 = vpop.f32.mrb[0].mxu0
          %1944 = vdwg.mxu0
          %v1945 = vmax.f32 %v1940, 0.0
          %1946 = vst [vmem:[#allocation4] sm:$0x3] %v1945
        $region228: #{tpu_custom_call.1} parent=147 // pred_fallthru
          _
        %v1947 = vld [vmem:[#allocation2] sm:$0x3]
        %p1948 = scmp.ge.s32.totalorder %s82, 2
        %s1949 = scalar_select %p1948, 1, 0
        %s1950 = scvt.s32.f32 %s1949
        %v1951 = vld [vmem:[#allocation3] sm:$0x3]
        %s1952 = ssub.f32 1.0, %s1950
        %v1953 = vstv %s1952
        %v1954 = vmul.f32 %v1951, %v1953
        %v1955 = vld [vmem:[#allocation4] sm:$0x3]
        %v1956 = vstv %s1950
        %v1957 = vmul.f32 %v1955, %v1956
        %v1958 = vadd.f32 %v1954, %v1957
        %v1959 = vld [vmem:[%s1295] sm:$0xf]
        %v1960 = vld [vmem:[%s1295 + $0x4] sm:$0xf]
        %v1961 = vld [vmem:[%s1295 + $0x8] sm:$0xf]
        %v1962 = vld [vmem:[%s1295 + $0xc] sm:$0xf]
        %v1963 = vld [vmem:[%s1295 + $0x10] sm:$0xf]
        %v1964 = vld [vmem:[%s1295 + $0x14] sm:$0xf]
        %v1965 = vld [vmem:[%s1295 + $0x18] sm:$0xf]
        %v1966 = vld [vmem:[%s1295 + $0x1c] sm:$0xf]
        %v1967 = vld [vmem:[%s1295 + $0x20] sm:$0xf]
        %v1968 = vld [vmem:[%s1295 + $0x24] sm:$0xf]
        %v1969 = vld [vmem:[%s1295 + $0x28] sm:$0xf]
        %v1970 = vld [vmem:[%s1295 + $0x2c] sm:$0xf]
        %v1971 = vld [vmem:[%s1295 + $0x30] sm:$0xf]
        %v1972 = vld [vmem:[%s1295 + $0x34] sm:$0xf]
        %v1973 = vld [vmem:[%s1295 + $0x38] sm:$0xf]
        %v1974 = vld [vmem:[%s1295 + $0x3c] sm:$0xf]
        %v1975 = vpack.c.bf16 %v1947, %v1947
        %v1976 = vld [vmem:[%s1523] sm:$0x1]
        %v1978 = vlaneseq
        %v1979 = vshrl.u32 %v1978, 7
        %v1980 = vsub.s32 0, %v1979
        %v1981 = vrot.slane %v1976, %v1980
        %v1999 = vunpack.c.l.b16 %v1959
        %v2000 = vunpack.c.l.b16 %v1960
        %v2001 = vunpack.c.l.b16 %v1961
        %v2002 = vunpack.c.l.b16 %v1962
        %v2003 = vunpack.c.l.b16 %v1963
        %v2004 = vunpack.c.l.b16 %v1964
        %v2005 = vunpack.c.l.b16 %v1965
        %v2006 = vunpack.c.l.b16 %v1966
        %v2007 = vunpack.c.l.b16 %v1967
        %v2008 = vunpack.c.l.b16 %v1968
        %v2009 = vunpack.c.l.b16 %v1969
        %v2010 = vunpack.c.l.b16 %v1970
        %v2011 = vunpack.c.l.b16 %v1971
        %v2012 = vunpack.c.l.b16 %v1972
        %v2013 = vunpack.c.l.b16 %v1973
        %v2014 = vunpack.c.l.b16 %v1974
        %v2015 = vpack.c.b16 %v2000, %v1999
        %v2016 = vpack.c.b16 %v2002, %v2001
        %v2017 = vpack.c.b16 %v2004, %v2003
        %v2018 = vpack.c.b16 %v2006, %v2005
        %v2019 = vpack.c.b16 %v2008, %v2007
        %v2020 = vpack.c.b16 %v2010, %v2009
        %v2021 = vpack.c.b16 %v2012, %v2011
        %v2022 = vpack.c.b16 %v2014, %v2013
        %2031 = vmatprep.subr.bf16.mxu0 0
        %2032 = vmatpush1.bf16.msra.mxu0 %v2015
        %2033 = vmatprep.subr.bf16.mxu0 0
        %2034 = vmatpush1.bf16.msra.mxu0 %v2016
        %2035 = vmatprep.subr.bf16.mxu0 0
        %2036 = vmatpush1.bf16.msra.mxu0 %v2017
        %2037 = vmatprep.subr.bf16.mxu0 0
        %2038 = vmatpush1.bf16.msra.mxu0 %v2018
        %2039 = vmatprep.subr.bf16.mxu0 0
        %2040 = vmatpush1.bf16.msra.mxu0 %v2019
        %2041 = vmatprep.subr.bf16.mxu0 0
        %2042 = vmatpush1.bf16.msra.mxu0 %v2020
        %2043 = vmatprep.subr.bf16.mxu0 0
        %2044 = vmatpush1.bf16.msra.mxu0 %v2021
        %2045 = vmatprep.subr.bf16.mxu0 0
        %2046 = vmatpush1.bf16.msra.mxu0 %v2022
        %2047 = vmatprep.subr.bf16.mxu0 0
        %2048 = vmatpush1.bf16.msra.mxu0 0
        %2049 = vmatprep.subr.bf16.mxu0 0
        %2050 = vmatpush1.bf16.msra.mxu0 0
        %2051 = vmatprep.subr.bf16.mxu0 0
        %2052 = vmatpush1.bf16.msra.mxu0 0
        %2053 = vmatprep.subr.bf16.mxu0 0
        %2054 = vmatpush1.bf16.msra.mxu0 0
        %2055 = vmatprep.subr.bf16.mxu0 0
        %2056 = vmatpush1.bf16.msra.mxu0 0
        %2057 = vmatprep.subr.bf16.mxu0 0
        %2058 = vmatpush1.bf16.msra.mxu0 0
        %2059 = vmatprep.subr.bf16.mxu0 0
        %2060 = vmatpush1.bf16.msra.mxu0 0
        %2061 = vmatprep.subr.bf16.mxu0 0
        %2062 = vmatpush1.bf16.msra.mxu0 0
        %2063 = vmatprep.mubr.bf16.mxu0 0
        %2064 = vmatmul.mubr.bf16.gmra.mrb[0].mxu0 %v1975
        %v2065 = vpop.f32.mrb[0].mxu0
        %v2066 = vadd.f32 %v1981, %v2065
        %v2067 = vpop.f32.mrb[0].mxu0
        %v2068 = vpop.f32.mrb[0].mxu0
        %v2069 = vpop.f32.mrb[0].mxu0
        %2070 = vdwg.mxu0
        %v2071 = vld [vmem:[%s1304] sm:$0xf]
        %v2072 = vld [vmem:[%s1304 + $0x4] sm:$0xf]
        %v2073 = vld [vmem:[%s1304 + $0x8] sm:$0xf]
        %v2074 = vld [vmem:[%s1304 + $0xc] sm:$0xf]
        %v2075 = vld [vmem:[%s1304 + $0x10] sm:$0xf]
        %v2076 = vld [vmem:[%s1304 + $0x14] sm:$0xf]
        %v2077 = vld [vmem:[%s1304 + $0x18] sm:$0xf]
        %v2078 = vld [vmem:[%s1304 + $0x1c] sm:$0xf]
        %v2079 = vld [vmem:[%s1304 + $0x20] sm:$0xf]
        %v2080 = vld [vmem:[%s1304 + $0x24] sm:$0xf]
        %v2081 = vld [vmem:[%s1304 + $0x28] sm:$0xf]
        %v2082 = vld [vmem:[%s1304 + $0x2c] sm:$0xf]
        %v2083 = vld [vmem:[%s1304 + $0x30] sm:$0xf]
        %v2084 = vld [vmem:[%s1304 + $0x34] sm:$0xf]
        %v2085 = vld [vmem:[%s1304 + $0x38] sm:$0xf]
        %v2086 = vld [vmem:[%s1304 + $0x3c] sm:$0xf]
        %v2087 = vpack.c.bf16 %v1958, %v1958
        %v2088 = vld [vmem:[%s1526] sm:$0x1]
        %v2090 = vlaneseq
        %v2091 = vshrl.u32 %v2090, 7
        %v2092 = vsub.s32 0, %v2091
        %v2093 = vrot.slane %v2088, %v2092
        %v2111 = vunpack.c.l.b16 %v2071
        %v2112 = vunpack.c.l.b16 %v2072
        %v2113 = vunpack.c.l.b16 %v2073
        %v2114 = vunpack.c.l.b16 %v2074
        %v2115 = vunpack.c.l.b16 %v2075
        %v2116 = vunpack.c.l.b16 %v2076
        %v2117 = vunpack.c.l.b16 %v2077
        %v2118 = vunpack.c.l.b16 %v2078
        %v2119 = vunpack.c.l.b16 %v2079
        %v2120 = vunpack.c.l.b16 %v2080
        %v2121 = vunpack.c.l.b16 %v2081
        %v2122 = vunpack.c.l.b16 %v2082
        %v2123 = vunpack.c.l.b16 %v2083
        %v2124 = vunpack.c.l.b16 %v2084
        %v2125 = vunpack.c.l.b16 %v2085
        %v2126 = vunpack.c.l.b16 %v2086
        %v2127 = vpack.c.b16 %v2112, %v2111
        %v2128 = vpack.c.b16 %v2114, %v2113
        %v2129 = vpack.c.b16 %v2116, %v2115
        %v2130 = vpack.c.b16 %v2118, %v2117
        %v2131 = vpack.c.b16 %v2120, %v2119
        %v2132 = vpack.c.b16 %v2122, %v2121
        %v2133 = vpack.c.b16 %v2124, %v2123
        %v2134 = vpack.c.b16 %v2126, %v2125
        %2143 = vmatprep.subr.bf16.mxu0 0
        %2144 = vmatpush1.bf16.msra.mxu0 %v2127
        %2145 = vmatprep.subr.bf16.mxu0 0
        %2146 = vmatpush1.bf16.msra.mxu0 %v2128
        %2147 = vmatprep.subr.bf16.mxu0 0
        %2148 = vmatpush1.bf16.msra.mxu0 %v2129
        %2149 = vmatprep.subr.bf16.mxu0 0
        %2150 = vmatpush1.bf16.msra.mxu0 %v2130
        %2151 = vmatprep.subr.bf16.mxu0 0
        %2152 = vmatpush1.bf16.msra.mxu0 %v2131
        %2153 = vmatprep.subr.bf16.mxu0 0
        %2154 = vmatpush1.bf16.msra.mxu0 %v2132
        %2155 = vmatprep.subr.bf16.mxu0 0
        %2156 = vmatpush1.bf16.msra.mxu0 %v2133
        %2157 = vmatprep.subr.bf16.mxu0 0
        %2158 = vmatpush1.bf16.msra.mxu0 %v2134
        %2159 = vmatprep.subr.bf16.mxu0 0
        %2160 = vmatpush1.bf16.msra.mxu0 0
        %2161 = vmatprep.subr.bf16.mxu0 0
        %2162 = vmatpush1.bf16.msra.mxu0 0
        %2163 = vmatprep.subr.bf16.mxu0 0
        %2164 = vmatpush1.bf16.msra.mxu0 0
        %2165 = vmatprep.subr.bf16.mxu0 0
        %2166 = vmatpush1.bf16.msra.mxu0 0
        %2167 = vmatprep.subr.bf16.mxu0 0
        %2168 = vmatpush1.bf16.msra.mxu0 0
        %2169 = vmatprep.subr.bf16.mxu0 0
        %2170 = vmatpush1.bf16.msra.mxu0 0
        %2171 = vmatprep.subr.bf16.mxu0 0
        %2172 = vmatpush1.bf16.msra.mxu0 0
        %2173 = vmatprep.subr.bf16.mxu0 0
        %2174 = vmatpush1.bf16.msra.mxu0 0
        %2175 = vmatprep.mubr.bf16.mxu0 0
        %2176 = vmatmul.mubr.bf16.gmra.mrb[0].mxu0 %v2087
        %v2177 = vpop.f32.mrb[0].mxu0
        %v2178 = vadd.f32 %v2093, %v2177
        %v2179 = vpop.f32.mrb[0].mxu0
        %v2180 = vpop.f32.mrb[0].mxu0
        %v2181 = vpop.f32.mrb[0].mxu0
        %2182 = vdwg.mxu0
        %v2183 = vadd.f32 %v2178, %v1947
        %v2184 = vld [vmem:[%s1529] sm:$0x1]
        %v2185 = vld [vmem:[%s1532] sm:$0x1]
        %vm2186 = vcmask 1041408
        %v2187 = vsel %vm2186, %v2183, 0.0
        %2188 = vadd.xlane.f32.xlu0 %v2187
        %v2189 = vpop.xlane.xlu0 %2188
        %v2190 = vrcp.pop 128.0
        %v2191 = vmul.f32 %v2189, %v2190
        %v2192 = vsub.f32 %v2183, %v2191
        %v2193 = vmul.f32 %v2192, %v2192
        %v2194 = vsel %vm2186, %v2193, 0.0
        %2195 = vadd.xlane.f32.xlu0 %v2194
        %v2196 = vpop.xlane.xlu0 %2195
        %v2197 = vmul.f32 %v2196, %v2190
        %v2198 = vadd.f32 %v2197, 1e-12
        %v2199 = vrsqrt.pop %v2198
        %v2200 = vmul.f32 %v2198, %v2199
        %vm2201 = vcmp.eq.f32.partialorder %v2198, inf
        %v2202 = vsel %vm2201, %v2198, %v2200
        %vm2203 = vcmp.eq.f32.partialorder %v2198, 0.0
        %v2204 = vand.u32 %v2198, 2147483648
        %v2205 = vsel %vm2203, %v2204, %v2202
        %v2206 = vrcp.pop %v2205
        %v2207 = vmul.f32 %v2192, %v2206
        %v2209 = vlaneseq
        %v2210 = vshrl.u32 %v2209, 7
        %v2211 = vsub.s32 0, %v2210
        %v2212 = vrot.slane %v2184, %v2211
        %v2214 = vmul.f32 %v2212, %v2207
        %v2216 = vlaneseq
        %v2217 = vshrl.u32 %v2216, 7
        %v2218 = vsub.s32 0, %v2217
        %v2219 = vrot.slane %v2185, %v2218
        %v2221 = vadd.f32 %v2214, %v2219
        %v2222 = vadd.f32 %v2066, %v1958
        %v2223 = vld [vmem:[%s1535] sm:$0x1]
        %v2224 = vld [vmem:[%s1538] sm:$0x1]
        %v2225 = vsel %vm2186, %v2222, 0.0
        %2226 = vadd.xlane.f32.xlu0 %v2225
        %v2227 = vpop.xlane.xlu0 %2226
        %v2228 = vmul.f32 %v2227, %v2190
        %v2229 = vsub.f32 %v2222, %v2228
        %v2230 = vmul.f32 %v2229, %v2229
        %v2231 = vsel %vm2186, %v2230, 0.0
        %2232 = vadd.xlane.f32.xlu0 %v2231
        %v2233 = vpop.xlane.xlu0 %2232
        %v2234 = vmul.f32 %v2233, %v2190
        %v2235 = vadd.f32 %v2234, 1e-12
        %v2236 = vrsqrt.pop %v2235
        %v2237 = vmul.f32 %v2235, %v2236
        %vm2238 = vcmp.eq.f32.partialorder %v2235, inf
        %v2239 = vsel %vm2238, %v2235, %v2237
        %vm2240 = vcmp.eq.f32.partialorder %v2235, 0.0
        %v2241 = vand.u32 %v2235, 2147483648
        %v2242 = vsel %vm2240, %v2241, %v2239
        %v2243 = vrcp.pop %v2242
        %v2244 = vmul.f32 %v2229, %v2243
        %v2246 = vlaneseq
        %v2247 = vshrl.u32 %v2246, 7
        %v2248 = vsub.s32 0, %v2247
        %v2249 = vrot.slane %v2223, %v2248
        %v2251 = vmul.f32 %v2249, %v2244
        %v2253 = vlaneseq
        %v2254 = vshrl.u32 %v2253, 7
        %v2255 = vsub.s32 0, %v2254
        %v2256 = vrot.slane %v2224, %v2255
        %v2258 = vadd.f32 %v2251, %v2256
        %v2260 = vrot.slane %v2258, 6
        %v2262 = vsel %vm2186, %v2221, %v2260
        %v2263 = vld [vmem:[%s1313] sm:$0xff]
        %v2264 = vld [vmem:[%s1313 + $0x8] sm:$0xff]
        %v2265 = vld [vmem:[%s1313 + $0x10] sm:$0xff]
        %v2266 = vld [vmem:[%s1313 + $0x18] sm:$0xff]
        %v2267 = vld [vmem:[%s1313 + $0x20] sm:$0xff]
        %v2268 = vld [vmem:[%s1313 + $0x28] sm:$0xff]
        %v2269 = vld [vmem:[%s1313 + $0x30] sm:$0xff]
        %v2270 = vld [vmem:[%s1313 + $0x38] sm:$0xff]
        %v2271 = vld [vmem:[%s1313 + $0x40] sm:$0xff]
        %v2272 = vld [vmem:[%s1313 + $0x48] sm:$0xff]
        %v2273 = vld [vmem:[%s1313 + $0x50] sm:$0xff]
        %v2274 = vld [vmem:[%s1313 + $0x58] sm:$0xff]
        %v2275 = vld [vmem:[%s1313 + $0x60] sm:$0xff]
        %v2276 = vld [vmem:[%s1313 + $0x68] sm:$0xff]
        %v2277 = vld [vmem:[%s1313 + $0x70] sm:$0xff]
        %v2278 = vld [vmem:[%s1313 + $0x78] sm:$0xff]
        %v2279 = vpack.c.bf16 %v2262, %v2262
        %v2280 = vld [vmem:[%s1542] sm:$0x3]
        %v2282 = vlaneseq
        %v2283 = vshrl.u32 %v2282, 7
        %v2284 = vsub.s32 0, %v2283
        %v2285 = vrot.slane %v2280, %v2284
        %v2286 = vlaneseq
        %v2287 = vshrl.u32 %v2286, 7
        %v2288 = vsub.s32 1, %v2287
        %v2289 = vrot.slane %v2280, %v2288
        %v2308 = vunpack.c.l.b16 %v2263
        %v2309 = vunpack.c.h.b16 %v2263
        %v2310 = vunpack.c.l.b16 %v2264
        %v2311 = vunpack.c.h.b16 %v2264
        %v2312 = vunpack.c.l.b16 %v2265
        %v2313 = vunpack.c.h.b16 %v2265
        %v2314 = vunpack.c.l.b16 %v2266
        %v2315 = vunpack.c.h.b16 %v2266
        %v2316 = vunpack.c.l.b16 %v2267
        %v2317 = vunpack.c.h.b16 %v2267
        %v2318 = vunpack.c.l.b16 %v2268
        %v2319 = vunpack.c.h.b16 %v2268
        %v2320 = vunpack.c.l.b16 %v2269
        %v2321 = vunpack.c.h.b16 %v2269
        %v2322 = vunpack.c.l.b16 %v2270
        %v2323 = vunpack.c.h.b16 %v2270
        %v2324 = vunpack.c.l.b16 %v2271
        %v2325 = vunpack.c.h.b16 %v2271
        %v2326 = vunpack.c.l.b16 %v2272
        %v2327 = vunpack.c.h.b16 %v2272
        %v2328 = vunpack.c.l.b16 %v2273
        %v2329 = vunpack.c.h.b16 %v2273
        %v2330 = vunpack.c.l.b16 %v2274
        %v2331 = vunpack.c.h.b16 %v2274
        %v2332 = vunpack.c.l.b16 %v2275
        %v2333 = vunpack.c.h.b16 %v2275
        %v2334 = vunpack.c.l.b16 %v2276
        %v2335 = vunpack.c.h.b16 %v2276
        %v2336 = vunpack.c.l.b16 %v2277
        %v2337 = vunpack.c.h.b16 %v2277
        %v2338 = vunpack.c.l.b16 %v2278
        %v2339 = vunpack.c.h.b16 %v2278
        %v2340 = vpack.c.b16 %v2310, %v2308
        %v2341 = vpack.c.b16 %v2311, %v2309
        %v2342 = vpack.c.b16 %v2314, %v2312
        %v2343 = vpack.c.b16 %v2315, %v2313
        %v2344 = vpack.c.b16 %v2318, %v2316
        %v2345 = vpack.c.b16 %v2319, %v2317
        %v2346 = vpack.c.b16 %v2322, %v2320
        %v2347 = vpack.c.b16 %v2323, %v2321
        %v2348 = vpack.c.b16 %v2326, %v2324
        %v2349 = vpack.c.b16 %v2327, %v2325
        %v2350 = vpack.c.b16 %v2330, %v2328
        %v2351 = vpack.c.b16 %v2331, %v2329
        %v2352 = vpack.c.b16 %v2334, %v2332
        %v2353 = vpack.c.b16 %v2335, %v2333
        %v2354 = vpack.c.b16 %v2338, %v2336
        %v2355 = vpack.c.b16 %v2339, %v2337
        %2372 = vmatprep.subr.bf16.mxu0 %v2341
        %2373 = vmatpush1.bf16.msra.mxu0 %v2340
        %2374 = vmatprep.subr.bf16.mxu0 %v2343
        %2375 = vmatpush1.bf16.msra.mxu0 %v2342
        %2376 = vmatprep.subr.bf16.mxu0 %v2345
        %2377 = vmatpush1.bf16.msra.mxu0 %v2344
        %2378 = vmatprep.subr.bf16.mxu0 %v2347
        %2379 = vmatpush1.bf16.msra.mxu0 %v2346
        %2380 = vmatprep.subr.bf16.mxu0 %v2349
        %2381 = vmatpush1.bf16.msra.mxu0 %v2348
        %2382 = vmatprep.subr.bf16.mxu0 %v2351
        %2383 = vmatpush1.bf16.msra.mxu0 %v2350
        %2384 = vmatprep.subr.bf16.mxu0 %v2353
        %2385 = vmatpush1.bf16.msra.mxu0 %v2352
        %2386 = vmatprep.subr.bf16.mxu0 %v2355
        %2387 = vmatpush1.bf16.msra.mxu0 %v2354
        %2388 = vmatprep.subr.bf16.mxu0 0
        %2389 = vmatpush1.bf16.msra.mxu0 0
        %2390 = vmatprep.subr.bf16.mxu0 0
        %2391 = vmatpush1.bf16.msra.mxu0 0
        %2392 = vmatprep.subr.bf16.mxu0 0
        %2393 = vmatpush1.bf16.msra.mxu0 0
        %2394 = vmatprep.subr.bf16.mxu0 0
        %2395 = vmatpush1.bf16.msra.mxu0 0
        %2396 = vmatprep.subr.bf16.mxu0 0
        %2397 = vmatpush1.bf16.msra.mxu0 0
        %2398 = vmatprep.subr.bf16.mxu0 0
        %2399 = vmatpush1.bf16.msra.mxu0 0
        %2400 = vmatprep.subr.bf16.mxu0 0
        %2401 = vmatpush1.bf16.msra.mxu0 0
        %2402 = vmatprep.subr.bf16.mxu0 0
        %2403 = vmatpush1.bf16.msra.mxu0 0
        %2404 = vmatprep.mubr.bf16.mxu0 0
        %2405 = vmatmul.mubr.bf16.gmra.mrb[0].mxu0 %v2279
        %v2406 = vpop.f32.mrb[0].mxu0
        %v2407 = vadd.f32 %v2285, %v2406
        %v2408 = vpop.f32.mrb[0].mxu0
        %v2409 = vadd.f32 %v2289, %v2408
        %v2410 = vpop.f32.mrb[0].mxu0
        %v2411 = vpop.f32.mrb[0].mxu0
        %2412 = vdwg.mxu0
        %v2413 = vmul.f32 %v2407, 0.5
        %v2414 = vmul.f32 %v2409, 0.5
        %v2415 = vmul.f32 %v2407, 0.044715
        %v2416 = vmul.f32 %v2409, 0.044715
        %v2417 = vmul.f32 %v2415, %v2407
        %v2418 = vmul.f32 %v2416, %v2409
        %v2419 = vmul.f32 %v2417, %v2407
        %v2420 = vmul.f32 %v2418, %v2409
        %v2421 = vadd.f32 %v2407, %v2419
        %v2422 = vadd.f32 %v2409, %v2420
        %v2423 = vmul.f32 %v2421, 0.7978846
        %v2424 = vmul.f32 %v2422, 0.7978846
        %v2425 = vtanh.pop %v2423
        %v2426 = vtanh.pop %v2424
        %v2427 = vadd.f32 %v2425, 1.0
        %v2428 = vadd.f32 %v2426, 1.0
        %v2429 = vmul.f32 %v2413, %v2427
        %v2430 = vmul.f32 %v2414, %v2428
        %v2431 = vld [vmem:[%s1322] sm:$0xf]
        %v2432 = vld [vmem:[%s1322 + $0x4] sm:$0xf]
        %v2433 = vld [vmem:[%s1322 + $0x8] sm:$0xf]
        %v2434 = vld [vmem:[%s1322 + $0xc] sm:$0xf]
        %v2435 = vld [vmem:[%s1322 + $0x10] sm:$0xf]
        %v2436 = vld [vmem:[%s1322 + $0x14] sm:$0xf]
        %v2437 = vld [vmem:[%s1322 + $0x18] sm:$0xf]
        %v2438 = vld [vmem:[%s1322 + $0x1c] sm:$0xf]
        %v2439 = vld [vmem:[%s1322 + $0x20] sm:$0xf]
        %v2440 = vld [vmem:[%s1322 + $0x24] sm:$0xf]
        %v2441 = vld [vmem:[%s1322 + $0x28] sm:$0xf]
        %v2442 = vld [vmem:[%s1322 + $0x2c] sm:$0xf]
        %v2443 = vld [vmem:[%s1322 + $0x30] sm:$0xf]
        %v2444 = vld [vmem:[%s1322 + $0x34] sm:$0xf]
        %v2445 = vld [vmem:[%s1322 + $0x38] sm:$0xf]
        %v2446 = vld [vmem:[%s1322 + $0x3c] sm:$0xf]
        %v2447 = vld [vmem:[%s1322 + $0x40] sm:$0xf]
        %v2448 = vld [vmem:[%s1322 + $0x44] sm:$0xf]
        %v2449 = vld [vmem:[%s1322 + $0x48] sm:$0xf]
        %v2450 = vld [vmem:[%s1322 + $0x4c] sm:$0xf]
        %v2451 = vld [vmem:[%s1322 + $0x50] sm:$0xf]
        %v2452 = vld [vmem:[%s1322 + $0x54] sm:$0xf]
        %v2453 = vld [vmem:[%s1322 + $0x58] sm:$0xf]
        %v2454 = vld [vmem:[%s1322 + $0x5c] sm:$0xf]
        %v2455 = vld [vmem:[%s1322 + $0x60] sm:$0xf]
        %v2456 = vld [vmem:[%s1322 + $0x64] sm:$0xf]
        %v2457 = vld [vmem:[%s1322 + $0x68] sm:$0xf]
        %v2458 = vld [vmem:[%s1322 + $0x6c] sm:$0xf]
        %v2459 = vld [vmem:[%s1322 + $0x70] sm:$0xf]
        %v2460 = vld [vmem:[%s1322 + $0x74] sm:$0xf]
        %v2461 = vld [vmem:[%s1322 + $0x78] sm:$0xf]
        %v2462 = vld [vmem:[%s1322 + $0x7c] sm:$0xf]
        %v2463 = vpack.c.bf16 %v2429, %v2429
        %v2464 = vpack.c.bf16 %v2430, %v2430
        %v2465 = vld [vmem:[%s1545] sm:$0x1]
        %v2467 = vlaneseq
        %v2468 = vshrl.u32 %v2467, 7
        %v2469 = vsub.s32 0, %v2468
        %v2470 = vrot.slane %v2465, %v2469
        %v2504 = vunpack.c.l.b16 %v2431
        %v2505 = vunpack.c.l.b16 %v2432
        %v2506 = vunpack.c.l.b16 %v2433
        %v2507 = vunpack.c.l.b16 %v2434
        %v2508 = vunpack.c.l.b16 %v2435
        %v2509 = vunpack.c.l.b16 %v2436
        %v2510 = vunpack.c.l.b16 %v2437
        %v2511 = vunpack.c.l.b16 %v2438
        %v2512 = vunpack.c.l.b16 %v2439
        %v2513 = vunpack.c.l.b16 %v2440
        %v2514 = vunpack.c.l.b16 %v2441
        %v2515 = vunpack.c.l.b16 %v2442
        %v2516 = vunpack.c.l.b16 %v2443
        %v2517 = vunpack.c.l.b16 %v2444
        %v2518 = vunpack.c.l.b16 %v2445
        %v2519 = vunpack.c.l.b16 %v2446
        %v2520 = vunpack.c.l.b16 %v2447
        %v2521 = vunpack.c.l.b16 %v2448
        %v2522 = vunpack.c.l.b16 %v2449
        %v2523 = vunpack.c.l.b16 %v2450
        %v2524 = vunpack.c.l.b16 %v2451
        %v2525 = vunpack.c.l.b16 %v2452
        %v2526 = vunpack.c.l.b16 %v2453
        %v2527 = vunpack.c.l.b16 %v2454
        %v2528 = vunpack.c.l.b16 %v2455
        %v2529 = vunpack.c.l.b16 %v2456
        %v2530 = vunpack.c.l.b16 %v2457
        %v2531 = vunpack.c.l.b16 %v2458
        %v2532 = vunpack.c.l.b16 %v2459
        %v2533 = vunpack.c.l.b16 %v2460
        %v2534 = vunpack.c.l.b16 %v2461
        %v2535 = vunpack.c.l.b16 %v2462
        %v2536 = vpack.c.b16 %v2505, %v2504
        %v2537 = vpack.c.b16 %v2507, %v2506
        %v2538 = vpack.c.b16 %v2509, %v2508
        %v2539 = vpack.c.b16 %v2511, %v2510
        %v2540 = vpack.c.b16 %v2513, %v2512
        %v2541 = vpack.c.b16 %v2515, %v2514
        %v2542 = vpack.c.b16 %v2517, %v2516
        %v2543 = vpack.c.b16 %v2519, %v2518
        %v2544 = vpack.c.b16 %v2521, %v2520
        %v2545 = vpack.c.b16 %v2523, %v2522
        %v2546 = vpack.c.b16 %v2525, %v2524
        %v2547 = vpack.c.b16 %v2527, %v2526
        %v2548 = vpack.c.b16 %v2529, %v2528
        %v2549 = vpack.c.b16 %v2531, %v2530
        %v2550 = vpack.c.b16 %v2533, %v2532
        %v2551 = vpack.c.b16 %v2535, %v2534
        %2568 = vmatprep.subr.bf16.mxu0 0
        %2569 = vmatpush1.bf16.msra.mxu0 %v2536
        %2570 = vmatprep.subr.bf16.mxu0 0
        %2571 = vmatpush1.bf16.msra.mxu0 %v2537
        %2572 = vmatprep.subr.bf16.mxu0 0
        %2573 = vmatpush1.bf16.msra.mxu0 %v2538
        %2574 = vmatprep.subr.bf16.mxu0 0
        %2575 = vmatpush1.bf16.msra.mxu0 %v2539
        %2576 = vmatprep.subr.bf16.mxu0 0
        %2577 = vmatpush1.bf16.msra.mxu0 %v2540
        %2578 = vmatprep.subr.bf16.mxu0 0
        %2579 = vmatpush1.bf16.msra.mxu0 %v2541
        %2580 = vmatprep.subr.bf16.mxu0 0
        %2581 = vmatpush1.bf16.msra.mxu0 %v2542
        %2582 = vmatprep.subr.bf16.mxu0 0
        %2583 = vmatpush1.bf16.msra.mxu0 %v2543
        %2584 = vmatprep.subr.bf16.mxu0 0
        %2585 = vmatpush1.bf16.msra.mxu0 %v2544
        %2586 = vmatprep.subr.bf16.mxu0 0
        %2587 = vmatpush1.bf16.msra.mxu0 %v2545
        %2588 = vmatprep.subr.bf16.mxu0 0
        %2589 = vmatpush1.bf16.msra.mxu0 %v2546
        %2590 = vmatprep.subr.bf16.mxu0 0
        %2591 = vmatpush1.bf16.msra.mxu0 %v2547
        %2592 = vmatprep.subr.bf16.mxu0 0
        %2593 = vmatpush1.bf16.msra.mxu0 %v2548
        %2594 = vmatprep.subr.bf16.mxu0 0
        %2595 = vmatpush1.bf16.msra.mxu0 %v2549
        %2596 = vmatprep.subr.bf16.mxu0 0
        %2597 = vmatpush1.bf16.msra.mxu0 %v2550
        %2598 = vmatprep.subr.bf16.mxu0 0
        %2599 = vmatpush1.bf16.msra.mxu0 %v2551
        %2600 = vmatprep.mubr.bf16.mxu0 %v2464
        %2601 = vmatmul.mubr.bf16.gmra.mrb[0].mxu0 %v2463
        %v2602 = vpop.f32.mrb[0].mxu0
        %v2603 = vadd.f32 %v2470, %v2602
        %v2604 = vpop.f32.mrb[0].mxu0
        %v2605 = vpop.f32.mrb[0].mxu0
        %v2606 = vpop.f32.mrb[0].mxu0
        %2607 = vdwg.mxu0
        %v2608 = vadd.f32 %v2603, %v2221
        %v2609 = vld [vmem:[%s1548] sm:$0x1]
        %v2610 = vld [vmem:[%s1330] sm:$0x1]
        %v2611 = vsel %vm2186, %v2608, 0.0
        %2612 = vadd.xlane.f32.xlu0 %v2611
        %v2613 = vpop.xlane.xlu0 %2612
        %v2614 = vmul.f32 %v2613, %v2190
        %v2615 = vsub.f32 %v2608, %v2614
        %v2616 = vmul.f32 %v2615, %v2615
        %v2617 = vsel %vm2186, %v2616, 0.0
        %2618 = vadd.xlane.f32.xlu0 %v2617
        %v2619 = vpop.xlane.xlu0 %2618
        %v2620 = vmul.f32 %v2619, %v2190
        %v2621 = vadd.f32 %v2620, 1e-12
        %v2622 = vrsqrt.pop %v2621
        %v2623 = vmul.f32 %v2621, %v2622
        %vm2624 = vcmp.eq.f32.partialorder %v2621, inf
        %v2625 = vsel %vm2624, %v2621, %v2623
        %vm2626 = vcmp.eq.f32.partialorder %v2621, 0.0
        %v2627 = vand.u32 %v2621, 2147483648
        %v2628 = vsel %vm2626, %v2627, %v2625
        %v2629 = vrcp.pop %v2628
        %v2630 = vmul.f32 %v2615, %v2629
        %v2632 = vlaneseq
        %v2633 = vshrl.u32 %v2632, 7
        %v2634 = vsub.s32 0, %v2633
        %v2635 = vrot.slane %v2609, %v2634
        %v2637 = vmul.f32 %v2635, %v2630
        %v2639 = vlaneseq
        %v2640 = vshrl.u32 %v2639, 7
        %v2641 = vsub.s32 0, %v2640
        %v2642 = vrot.slane %v2610, %v2641
        %v2644 = vadd.f32 %v2637, %v2642
        %v2645 = vadd.f32 %v2603, %v2260
        %v2646 = vld [vmem:[%s1338] sm:$0x1]
        %v2647 = vld [vmem:[%s1346] sm:$0x1]
        %vm2648 = vcmask 1043458
        %v2649 = vsel %vm2648, %v2645, 0.0
        %2650 = vadd.xlane.f32.xlu0 %v2649
        %v2651 = vpop.xlane.xlu0 %2650
        %v2652 = vmul.f32 %v2651, %v2190
        %v2653 = vsub.f32 %v2645, %v2652
        %v2654 = vmul.f32 %v2653, %v2653
        %v2655 = vsel %vm2648, %v2654, 0.0
        %2656 = vadd.xlane.f32.xlu0 %v2655
        %v2657 = vpop.xlane.xlu0 %2656
        %v2658 = vmul.f32 %v2657, %v2190
        %v2659 = vadd.f32 %v2658, 1e-12
        %v2660 = vrsqrt.pop %v2659
        %v2661 = vmul.f32 %v2659, %v2660
        %vm2662 = vcmp.eq.f32.partialorder %v2659, inf
        %v2663 = vsel %vm2662, %v2659, %v2661
        %vm2664 = vcmp.eq.f32.partialorder %v2659, 0.0
        %v2665 = vand.u32 %v2659, 2147483648
        %v2666 = vsel %vm2664, %v2665, %v2663
        %v2667 = vrcp.pop %v2666
        %v2668 = vmul.f32 %v2653, %v2667
        %v2670 = vlaneseq
        %v2671 = vshrl.u32 %v2670, 7
        %v2672 = vsub.s32 0, %v2671
        %v2673 = vrot.slane %v2646, %v2672
        %v2675 = vmul.f32 %v2673, %v2668
        %v2677 = vlaneseq
        %v2678 = vshrl.u32 %v2677, 7
        %v2679 = vsub.s32 0, %v2678
        %v2680 = vrot.slane %v2647, %v2679
        %v2682 = vadd.f32 %v2675, %v2680
        %v2683 = vld [vmem:[%s1355] sm:$0xf]
        %v2684 = vld [vmem:[%s1355 + $0x4] sm:$0xf]
        %v2685 = vld [vmem:[%s1355 + $0x8] sm:$0xf]
        %v2686 = vld [vmem:[%s1355 + $0xc] sm:$0xf]
        %v2687 = vld [vmem:[%s1355 + $0x10] sm:$0xf]
        %v2688 = vld [vmem:[%s1355 + $0x14] sm:$0xf]
        %v2689 = vld [vmem:[%s1355 + $0x18] sm:$0xf]
        %v2690 = vld [vmem:[%s1355 + $0x1c] sm:$0xf]
        %v2691 = vld [vmem:[%s1355 + $0x20] sm:$0xf]
        %v2692 = vld [vmem:[%s1355 + $0x24] sm:$0xf]
        %v2693 = vld [vmem:[%s1355 + $0x28] sm:$0xf]
        %v2694 = vld [vmem:[%s1355 + $0x2c] sm:$0xf]
        %v2695 = vld [vmem:[%s1355 + $0x30] sm:$0xf]
        %v2696 = vld [vmem:[%s1355 + $0x34] sm:$0xf]
        %v2697 = vld [vmem:[%s1355 + $0x38] sm:$0xf]
        %v2698 = vld [vmem:[%s1355 + $0x3c] sm:$0xf]
        %v2699 = vpack.c.bf16 %v2644, %v2644
        %v2700 = vld [vmem:[%s1364] sm:$0xf]
        %v2701 = vld [vmem:[%s1364 + $0x4] sm:$0xf]
        %v2702 = vld [vmem:[%s1364 + $0x8] sm:$0xf]
        %v2703 = vld [vmem:[%s1364 + $0xc] sm:$0xf]
        %v2704 = vld [vmem:[%s1364 + $0x10] sm:$0xf]
        %v2705 = vld [vmem:[%s1364 + $0x14] sm:$0xf]
        %v2706 = vld [vmem:[%s1364 + $0x18] sm:$0xf]
        %v2707 = vld [vmem:[%s1364 + $0x1c] sm:$0xf]
        %v2708 = vld [vmem:[%s1364 + $0x20] sm:$0xf]
        %v2709 = vld [vmem:[%s1364 + $0x24] sm:$0xf]
        %v2710 = vld [vmem:[%s1364 + $0x28] sm:$0xf]
        %v2711 = vld [vmem:[%s1364 + $0x2c] sm:$0xf]
        %v2712 = vld [vmem:[%s1364 + $0x30] sm:$0xf]
        %v2713 = vld [vmem:[%s1364 + $0x34] sm:$0xf]
        %v2714 = vld [vmem:[%s1364 + $0x38] sm:$0xf]
        %v2715 = vld [vmem:[%s1364 + $0x3c] sm:$0xf]
        %v2716 = vpack.c.bf16 %v2682, %v2682
        %v2718 = vrot.slane %v2716, 1
        %v2736 = vunpack.c.l.b16 %v2700
        %v2737 = vunpack.c.l.b16 %v2701
        %v2738 = vunpack.c.l.b16 %v2702
        %v2739 = vunpack.c.l.b16 %v2703
        %v2740 = vunpack.c.l.b16 %v2704
        %v2741 = vunpack.c.l.b16 %v2705
        %v2742 = vunpack.c.l.b16 %v2706
        %v2743 = vunpack.c.l.b16 %v2707
        %v2744 = vunpack.c.l.b16 %v2708
        %v2745 = vunpack.c.l.b16 %v2709
        %v2746 = vunpack.c.l.b16 %v2710
        %v2747 = vunpack.c.l.b16 %v2711
        %v2748 = vunpack.c.l.b16 %v2712
        %v2749 = vunpack.c.l.b16 %v2713
        %v2750 = vunpack.c.l.b16 %v2714
        %v2751 = vunpack.c.l.b16 %v2715
        %v2752 = vpack.c.b16 %v2737, %v2736
        %v2753 = vpack.c.b16 %v2739, %v2738
        %v2754 = vpack.c.b16 %v2741, %v2740
        %v2755 = vpack.c.b16 %v2743, %v2742
        %v2756 = vpack.c.b16 %v2745, %v2744
        %v2757 = vpack.c.b16 %v2747, %v2746
        %v2758 = vpack.c.b16 %v2749, %v2748
        %v2759 = vpack.c.b16 %v2751, %v2750
        %2768 = vmatprep.subr.bf16.mxu0 0
        %2769 = vmatpush1.bf16.msra.mxu0 %v2752
        %2770 = vmatprep.subr.bf16.mxu0 0
        %2771 = vmatpush1.bf16.msra.mxu0 %v2753
        %2772 = vmatprep.subr.bf16.mxu0 0
        %2773 = vmatpush1.bf16.msra.mxu0 %v2754
        %2774 = vmatprep.subr.bf16.mxu0 0
        %2775 = vmatpush1.bf16.msra.mxu0 %v2755
        %2776 = vmatprep.subr.bf16.mxu0 0
        %2777 = vmatpush1.bf16.msra.mxu0 %v2756
        %2778 = vmatprep.subr.bf16.mxu0 0
        %2779 = vmatpush1.bf16.msra.mxu0 %v2757
        %2780 = vmatprep.subr.bf16.mxu0 0
        %2781 = vmatpush1.bf16.msra.mxu0 %v2758
        %2782 = vmatprep.subr.bf16.mxu0 0
        %2783 = vmatpush1.bf16.msra.mxu0 %v2759
        %2784 = vmatprep.subr.bf16.mxu0 0
        %2785 = vmatpush1.bf16.msra.mxu0 0
        %2786 = vmatprep.subr.bf16.mxu0 0
        %2787 = vmatpush1.bf16.msra.mxu0 0
        %2788 = vmatprep.subr.bf16.mxu0 0
        %2789 = vmatpush1.bf16.msra.mxu0 0
        %2790 = vmatprep.subr.bf16.mxu0 0
        %2791 = vmatpush1.bf16.msra.mxu0 0
        %2792 = vmatprep.subr.bf16.mxu0 0
        %2793 = vmatpush1.bf16.msra.mxu0 0
        %2794 = vmatprep.subr.bf16.mxu0 0
        %2795 = vmatpush1.bf16.msra.mxu0 0
        %2796 = vmatprep.subr.bf16.mxu0 0
        %2797 = vmatpush1.bf16.msra.mxu0 0
        %2798 = vmatprep.subr.bf16.mxu0 0
        %2799 = vmatpush1.bf16.msra.mxu0 0
        %2800 = vmatprep.mubr.bf16.mxu0 0
        %2801 = vmatmul.mubr.bf16.gmra.mrb[0].mxu0 %v2718
        %v2802 = vpop.f32.mrb[0].mxu0
        %v2803 = vadd.f32 0.0, %v2802
        %v2804 = vpop.f32.mrb[0].mxu0
        %v2805 = vpop.f32.mrb[0].mxu0
        %v2806 = vpop.f32.mrb[0].mxu0
        %2807 = vdwg.mxu0
        %v2824 = vunpack.c.l.b16 %v2683
        %v2825 = vunpack.c.l.b16 %v2684
        %v2826 = vunpack.c.l.b16 %v2685
        %v2827 = vunpack.c.l.b16 %v2686
        %v2828 = vunpack.c.l.b16 %v2687
        %v2829 = vunpack.c.l.b16 %v2688
        %v2830 = vunpack.c.l.b16 %v2689
        %v2831 = vunpack.c.l.b16 %v2690
        %v2832 = vunpack.c.l.b16 %v2691
        %v2833 = vunpack.c.l.b16 %v2692
        %v2834 = vunpack.c.l.b16 %v2693
        %v2835 = vunpack.c.l.b16 %v2694
        %v2836 = vunpack.c.l.b16 %v2695
        %v2837 = vunpack.c.l.b16 %v2696
        %v2838 = vunpack.c.l.b16 %v2697
        %v2839 = vunpack.c.l.b16 %v2698
        %v2840 = vpack.c.b16 %v2825, %v2824
        %v2841 = vpack.c.b16 %v2827, %v2826
        %v2842 = vpack.c.b16 %v2829, %v2828
        %v2843 = vpack.c.b16 %v2831, %v2830
        %v2844 = vpack.c.b16 %v2833, %v2832
        %v2845 = vpack.c.b16 %v2835, %v2834
        %v2846 = vpack.c.b16 %v2837, %v2836
        %v2847 = vpack.c.b16 %v2839, %v2838
        %2856 = vmatprep.subr.bf16.mxu0 0
        %2857 = vmatpush1.bf16.msra.mxu0 %v2840
        %2858 = vmatprep.subr.bf16.mxu0 0
        %2859 = vmatpush1.bf16.msra.mxu0 %v2841
        %2860 = vmatprep.subr.bf16.mxu0 0
        %2861 = vmatpush1.bf16.msra.mxu0 %v2842
        %2862 = vmatprep.subr.bf16.mxu0 0
        %2863 = vmatpush1.bf16.msra.mxu0 %v2843
        %2864 = vmatprep.subr.bf16.mxu0 0
        %2865 = vmatpush1.bf16.msra.mxu0 %v2844
        %2866 = vmatprep.subr.bf16.mxu0 0
        %2867 = vmatpush1.bf16.msra.mxu0 %v2845
        %2868 = vmatprep.subr.bf16.mxu0 0
        %2869 = vmatpush1.bf16.msra.mxu0 %v2846
        %2870 = vmatprep.subr.bf16.mxu0 0
        %2871 = vmatpush1.bf16.msra.mxu0 %v2847
        %2872 = vmatprep.subr.bf16.mxu0 0
        %2873 = vmatpush1.bf16.msra.mxu0 0
        %2874 = vmatprep.subr.bf16.mxu0 0
        %2875 = vmatpush1.bf16.msra.mxu0 0
        %2876 = vmatprep.subr.bf16.mxu0 0
        %2877 = vmatpush1.bf16.msra.mxu0 0
        %2878 = vmatprep.subr.bf16.mxu0 0
        %2879 = vmatpush1.bf16.msra.mxu0 0
        %2880 = vmatprep.subr.bf16.mxu0 0
        %2881 = vmatpush1.bf16.msra.mxu0 0
        %2882 = vmatprep.subr.bf16.mxu0 0
        %2883 = vmatpush1.bf16.msra.mxu0 0
        %2884 = vmatprep.subr.bf16.mxu0 0
        %2885 = vmatpush1.bf16.msra.mxu0 0
        %2886 = vmatprep.subr.bf16.mxu0 0
        %2887 = vmatpush1.bf16.msra.mxu0 0
        %2888 = vmatprep.mubr.bf16.mxu0 0
        %2889 = vmatmul.mubr.bf16.gmra.mrb[0].mxu0 %v2699
        %v2890 = vpop.f32.mrb[0].mxu0
        %v2891 = vadd.f32 %v2803, %v2890
        %v2892 = vpop.f32.mrb[0].mxu0
        %v2893 = vpop.f32.mrb[0].mxu0
        %v2894 = vpop.f32.mrb[0].mxu0
        %2895 = vdwg.mxu0
        %v2896 = vld [vmem:[%s1372] sm:$0x1]
        %v2898 = vlaneseq
        %v2899 = vshrl.u32 %v2898, 7
        %v2900 = vsub.s32 0, %v2899
        %v2901 = vrot.slane %v2896, %v2900
        %v2903 = vadd.f32 %v2891, %v2901
        %2904 = vst [vmem:[#allocation2] sm:$0x3] %v2903
        %p2905 = scmp.eq.s32.totalorder %s82, 3
        // Predicated region
        $region229: #{tpu_custom_call.1} parent=147 // pred_check
          %p2906 = pneg %p2905
        $region230: #{tpu_custom_call.1} parent=147 // pred_check_branch
          %2908 = sbr.rel (%p2906) target = $region232
        $region231: #{tpu_custom_call.1} parent=147 // pred_region
          %v2909 = vld [vmem:[%s57] sm:$0xf]
          %v2910 = vld [vmem:[%s57 + $0x4] sm:$0xf]
          %v2911 = vld [vmem:[%s57 + $0x8] sm:$0xf]
          %v2912 = vld [vmem:[%s57 + $0xc] sm:$0xf]
          %v2913 = vld [vmem:[%s57 + $0x10] sm:$0xf]
          %v2914 = vld [vmem:[%s57 + $0x14] sm:$0xf]
          %v2915 = vld [vmem:[%s57 + $0x18] sm:$0xf]
          %v2916 = vld [vmem:[%s57 + $0x1c] sm:$0xf]
          %v2917 = vld [vmem:[%s57 + $0x20] sm:$0xf]
          %v2918 = vld [vmem:[%s57 + $0x24] sm:$0xf]
          %v2919 = vld [vmem:[%s57 + $0x28] sm:$0xf]
          %v2920 = vld [vmem:[%s57 + $0x2c] sm:$0xf]
          %v2921 = vld [vmem:[%s57 + $0x30] sm:$0xf]
          %v2922 = vld [vmem:[%s57 + $0x34] sm:$0xf]
          %v2923 = vld [vmem:[%s57 + $0x38] sm:$0xf]
          %v2924 = vld [vmem:[%s57 + $0x3c] sm:$0xf]
          %v2925 = vpack.c.bf16 %v2903, %v2903
          %v2926 = vld [vmem:[%s59] sm:$0x1]
          %v2928 = vlaneseq
          %v2929 = vshrl.u32 %v2928, 7
          %v2930 = vsub.s32 0, %v2929
          %v2931 = vrot.slane %v2926, %v2930
          %v2949 = vunpack.c.l.b16 %v2909
          %v2950 = vunpack.c.l.b16 %v2910
          %v2951 = vunpack.c.l.b16 %v2911
          %v2952 = vunpack.c.l.b16 %v2912
          %v2953 = vunpack.c.l.b16 %v2913
          %v2954 = vunpack.c.l.b16 %v2914
          %v2955 = vunpack.c.l.b16 %v2915
          %v2956 = vunpack.c.l.b16 %v2916
          %v2957 = vunpack.c.l.b16 %v2917
          %v2958 = vunpack.c.l.b16 %v2918
          %v2959 = vunpack.c.l.b16 %v2919
          %v2960 = vunpack.c.l.b16 %v2920
          %v2961 = vunpack.c.l.b16 %v2921
          %v2962 = vunpack.c.l.b16 %v2922
          %v2963 = vunpack.c.l.b16 %v2923
          %v2964 = vunpack.c.l.b16 %v2924
          %v2965 = vpack.c.b16 %v2950, %v2949
          %v2966 = vpack.c.b16 %v2952, %v2951
          %v2967 = vpack.c.b16 %v2954, %v2953
          %v2968 = vpack.c.b16 %v2956, %v2955
          %v2969 = vpack.c.b16 %v2958, %v2957
          %v2970 = vpack.c.b16 %v2960, %v2959
          %v2971 = vpack.c.b16 %v2962, %v2961
          %v2972 = vpack.c.b16 %v2964, %v2963
          %2981 = vmatprep.subr.bf16.mxu0 0
          %2982 = vmatpush1.bf16.msra.mxu0 %v2965
          %2983 = vmatprep.subr.bf16.mxu0 0
          %2984 = vmatpush1.bf16.msra.mxu0 %v2966
          %2985 = vmatprep.subr.bf16.mxu0 0
          %2986 = vmatpush1.bf16.msra.mxu0 %v2967
          %2987 = vmatprep.subr.bf16.mxu0 0
          %2988 = vmatpush1.bf16.msra.mxu0 %v2968
          %2989 = vmatprep.subr.bf16.mxu0 0
          %2990 = vmatpush1.bf16.msra.mxu0 %v2969
          %2991 = vmatprep.subr.bf16.mxu0 0
          %2992 = vmatpush1.bf16.msra.mxu0 %v2970
          %2993 = vmatprep.subr.bf16.mxu0 0
          %2994 = vmatpush1.bf16.msra.mxu0 %v2971
          %2995 = vmatprep.subr.bf16.mxu0 0
          %2996 = vmatpush1.bf16.msra.mxu0 %v2972
          %2997 = vmatprep.subr.bf16.mxu0 0
          %2998 = vmatpush1.bf16.msra.mxu0 0
          %2999 = vmatprep.subr.bf16.mxu0 0
          %3000 = vmatpush1.bf16.msra.mxu0 0
          %3001 = vmatprep.subr.bf16.mxu0 0
          %3002 = vmatpush1.bf16.msra.mxu0 0
          %3003 = vmatprep.subr.bf16.mxu0 0
          %3004 = vmatpush1.bf16.msra.mxu0 0
          %3005 = vmatprep.subr.bf16.mxu0 0
          %3006 = vmatpush1.bf16.msra.mxu0 0
          %3007 = vmatprep.subr.bf16.mxu0 0
          %3008 = vmatpush1.bf16.msra.mxu0 0
          %3009 = vmatprep.subr.bf16.mxu0 0
          %3010 = vmatpush1.bf16.msra.mxu0 0
          %3011 = vmatprep.subr.bf16.mxu0 0
          %3012 = vmatpush1.bf16.msra.mxu0 0
          %3013 = vmatprep.mubr.bf16.mxu0 0
          %3014 = vmatmul.mubr.bf16.gmra.mrb[0].mxu0 %v2925
          %v3015 = vpop.f32.mrb[0].mxu0
          %v3016 = vadd.f32 %v2931, %v3015
          %v3017 = vpop.f32.mrb[0].mxu0
          %v3018 = vpop.f32.mrb[0].mxu0
          %v3019 = vpop.f32.mrb[0].mxu0
          %3020 = vdwg.mxu0
          %v3021 = vmax.f32 %v3016, 0.0
          %v3022 = vld [vmem:[#allocation29] sm:$0xf]
          %v3023 = vld [vmem:[#allocation29 + $0x4] sm:$0xf]
          %v3024 = vld [vmem:[#allocation29 + $0x8] sm:$0xf]
          %v3025 = vld [vmem:[#allocation29 + $0xc] sm:$0xf]
          %v3026 = vld [vmem:[#allocation29 + $0x10] sm:$0xf]
          %v3027 = vld [vmem:[#allocation29 + $0x14] sm:$0xf]
          %v3028 = vld [vmem:[#allocation29 + $0x18] sm:$0xf]
          %v3029 = vld [vmem:[#allocation29 + $0x1c] sm:$0xf]
          %v3030 = vld [vmem:[#allocation29 + $0x20] sm:$0xf]
          %v3031 = vld [vmem:[#allocation29 + $0x24] sm:$0xf]
          %v3032 = vld [vmem:[#allocation29 + $0x28] sm:$0xf]
          %v3033 = vld [vmem:[#allocation29 + $0x2c] sm:$0xf]
          %v3034 = vld [vmem:[#allocation29 + $0x30] sm:$0xf]
          %v3035 = vld [vmem:[#allocation29 + $0x34] sm:$0xf]
          %v3036 = vld [vmem:[#allocation29 + $0x38] sm:$0xf]
          %v3037 = vld [vmem:[#allocation29 + $0x3c] sm:$0xf]
          %v3038 = vpack.c.bf16 %v3021, %v3021
          %v3039 = vld [vmem:[%s63] sm:$0x1]
          %v3041 = vlaneseq
          %v3042 = vshrl.u32 %v3041, 7
          %v3043 = vsub.s32 0, %v3042
          %v3044 = vrot.slane %v3039, %v3043
          %v3062 = vunpack.c.l.b16 %v3022
          %v3063 = vunpack.c.l.b16 %v3023
          %v3064 = vunpack.c.l.b16 %v3024
          %v3065 = vunpack.c.l.b16 %v3025
          %v3066 = vunpack.c.l.b16 %v3026
          %v3067 = vunpack.c.l.b16 %v3027
          %v3068 = vunpack.c.l.b16 %v3028
          %v3069 = vunpack.c.l.b16 %v3029
          %v3070 = vunpack.c.l.b16 %v3030
          %v3071 = vunpack.c.l.b16 %v3031
          %v3072 = vunpack.c.l.b16 %v3032
          %v3073 = vunpack.c.l.b16 %v3033
          %v3074 = vunpack.c.l.b16 %v3034
          %v3075 = vunpack.c.l.b16 %v3035
          %v3076 = vunpack.c.l.b16 %v3036
          %v3077 = vunpack.c.l.b16 %v3037
          %v3078 = vpack.c.b16 %v3063, %v3062
          %v3079 = vpack.c.b16 %v3065, %v3064
          %v3080 = vpack.c.b16 %v3067, %v3066
          %v3081 = vpack.c.b16 %v3069, %v3068
          %v3082 = vpack.c.b16 %v3071, %v3070
          %v3083 = vpack.c.b16 %v3073, %v3072
          %v3084 = vpack.c.b16 %v3075, %v3074
          %v3085 = vpack.c.b16 %v3077, %v3076
          %3094 = vmatprep.subr.bf16.mxu0 0
          %3095 = vmatpush1.bf16.msra.mxu0 %v3078
          %3096 = vmatprep.subr.bf16.mxu0 0
          %3097 = vmatpush1.bf16.msra.mxu0 %v3079
          %3098 = vmatprep.subr.bf16.mxu0 0
          %3099 = vmatpush1.bf16.msra.mxu0 %v3080
          %3100 = vmatprep.subr.bf16.mxu0 0
          %3101 = vmatpush1.bf16.msra.mxu0 %v3081
          %3102 = vmatprep.subr.bf16.mxu0 0
          %3103 = vmatpush1.bf16.msra.mxu0 %v3082
          %3104 = vmatprep.subr.bf16.mxu0 0
          %3105 = vmatpush1.bf16.msra.mxu0 %v3083
          %3106 = vmatprep.subr.bf16.mxu0 0
          %3107 = vmatpush1.bf16.msra.mxu0 %v3084
          %3108 = vmatprep.subr.bf16.mxu0 0
          %3109 = vmatpush1.bf16.msra.mxu0 %v3085
          %3110 = vmatprep.subr.bf16.mxu0 0
          %3111 = vmatpush1.bf16.msra.mxu0 0
          %3112 = vmatprep.subr.bf16.mxu0 0
          %3113 = vmatpush1.bf16.msra.mxu0 0
          %3114 = vmatprep.subr.bf16.mxu0 0
          %3115 = vmatpush1.bf16.msra.mxu0 0
          %3116 = vmatprep.subr.bf16.mxu0 0
          %3117 = vmatpush1.bf16.msra.mxu0 0
          %3118 = vmatprep.subr.bf16.mxu0 0
          %3119 = vmatpush1.bf16.msra.mxu0 0
          %3120 = vmatprep.subr.bf16.mxu0 0
          %3121 = vmatpush1.bf16.msra.mxu0 0
          %3122 = vmatprep.subr.bf16.mxu0 0
          %3123 = vmatpush1.bf16.msra.mxu0 0
          %3124 = vmatprep.subr.bf16.mxu0 0
          %3125 = vmatpush1.bf16.msra.mxu0 0
          %3126 = vmatprep.mubr.bf16.mxu0 0
          %3127 = vmatmul.mubr.bf16.gmra.mrb[0].mxu0 %v3038
          %v3128 = vpop.f32.mrb[0].mxu0
          %v3129 = vadd.f32 %v3044, %v3128
          %v3130 = vpop.f32.mrb[0].mxu0
          %v3131 = vpop.f32.mrb[0].mxu0
          %v3132 = vpop.f32.mrb[0].mxu0
          %3133 = vdwg.mxu0
          %3134 = vst [vmem:[#allocation30] sm:$0x3] %v3129
        $region232: #{tpu_custom_call.1} parent=147 // pred_fallthru
          _
        // Predicated region
        $region233: #{tpu_custom_call.1} parent=147 // pred_check
          %p3135 = pneg %p862
        $region234: #{tpu_custom_call.1} parent=147 // pred_check_branch
          %3137 = sbr.rel (%p3135) target = $region236
        $region235: #{tpu_custom_call.1} parent=147 // pred_region
          %s3139 = ssub.s32 32, 32
          %3140 = vsyncadd [#allocation7], %s3139
          %s3142 = sshll.u32 [#allocation30], 4
          %s3143 = int_to_ptr.vmem [resolvable:$true] %s3142
          %3145 = dma.vmem_to_hbm [thread:$0]  %s3143, 32, %s65, [#allocation7]
        $region236: #{tpu_custom_call.1} parent=147 // pred_fallthru
          _
        // Predicated region
        $region237: #{tpu_custom_call.1} parent=147 // pred_check
          %p3146 = pneg %p862
        $region238: #{tpu_custom_call.1} parent=147 // pred_check_branch
          %3148 = sbr.rel (%p3146) target = $region240
        $region239: #{tpu_custom_call.1} parent=147 // pred_region
          %3149 = dma.done [#allocation7], 32
        $region240: #{tpu_custom_call.1} parent=147 // pred_fallthru
          _
      $region148: #{tpu_custom_call.1} parent=5 // pred_fallthru
        _
      %p3150 = scmp.le.s32.totalorder 2, %s77
      // Predicated region
      $region241: #{tpu_custom_call.1} parent=5 // pred_check
        %p3151 = pneg %p3150
      $region242: #{tpu_custom_call.1} parent=5 // pred_check_branch
        %3153 = sbr.rel (%p3151) target = $region244
      $region243: #{tpu_custom_call.1} parent=5 // pred_region
        %s3154 = ssub.s32 %s77, 2
      $region244: #{tpu_custom_call.1} parent=5 // pred_fallthru
        _
    $region6: #{tpu_custom_call.1} parent=1 // loop_footer
      %s81 = sadd.s32 1, %s77
    $region7: #{tpu_custom_call.1} parent=1 // loop_footer_branch
      %76 = sbr.rel target = $region3
    $region8: #{tpu_custom_call.1} parent=1 // loop_exit
      _
    %3155 = vsyncpa [#allocation6], 1
    %s3156 = scalar_lea.sflag [#allocation6], 1
    %3157 = vsyncpa %s3156, 1
    %3158 = vsyncpa [#allocation9], 1
    %3159 = vsyncpa [#allocation12], 1
    %3160 = vsyncpa [#allocation15], 1
    %3161 = vsyncpa [#allocation18], 1
    %3162 = vsyncpa [#allocation7], 1
    %s3163 = scalar_lea.sflag [#allocation7], 1
    %3164 = vsyncpa %s3163, 1

</llo_original>
